<compile_context>
chip_gen: v7x
topology: tpu7x:2x2x1
jax: 0.10.0
libtpu: 0.0.40
codegen_flags: <defaults>
</compile_context>

<pallas_src>
import math

import jax
import jax.numpy as jnp
import numpy as np
from jax.experimental import pallas as pl
from jax.experimental.pallas import tpu as pltpu


# ----------------------------------------------------------------------------
# Pallas kernel: full LSTM encode + autoregressive rollout in one kernel.
# All matmuls and gate nonlinearities run on-chip; h/c state lives in vregs.
# ----------------------------------------------------------------------------
def lstm_rollout_kernel(x_ref,       # (T, B, H)   input seq, features zero-padded to H
                        w_ref,       # (L, 2H, 4H) fused [W_ih^T ; W_hh^T] per layer
                        b_ref,       # (L, 1, 4H)  combined bias (b_ih + b_hh)
                        w_fc_ref,    # (H, Fp)     fc weight^T, output zero-padded to Fp
                        b_fc_ref,    # (1, Fp)     fc bias, zero-padded to Fp
                        out_ref):    # (R, B, Fp)  predictions (time-major, lane-dense)
    T, B, H = x_ref.shape
    L = w_ref.shape[0]
    R = out_ref.shape[0]
    Fp = w_fc_ref.shape[1]

    # ---- hoist weights / biases out of the time loops (read VMEM once) ------
    w = [w_ref[l] for l in range(L)]                                   # (2H, 4H) each
    b = [jnp.broadcast_to(b_ref[l], (B, 4 * H)) for l in range(L)]     # (B, 4H) each
    w_fc = w_fc_ref[...]                                               # (H, Fp)
    b_fc = jnp.broadcast_to(b_fc_ref[...], (B, Fp))                    # (B, Fp)

    # ---- register-resident LSTM state ---------------------------------------
    h = [jnp.zeros((B, H), jnp.float32) for _ in range(L)]
    c = [jnp.zeros((B, H), jnp.float32) for _ in range(L)]

    def lstm_cell(inp, h, c):
        """One timestep through all layers; returns (top hidden, h, c)."""
        for l in range(L):
            xh = jnp.concatenate([inp, h[l]], axis=-1)                 # (B, 2H)
            gates = jnp.dot(xh, w[l], preferred_element_type=jnp.float32) + b[l]  # (B, 4H)
            # full-vreg activations (4H == 128 lanes), slice gate pieces after
            sig = jax.nn.sigmoid(gates)
            th = jnp.tanh(gates)
            i_g = sig[:, 0 * H:1 * H]
            f_g = sig[:, 1 * H:2 * H]
            g_g = th[:, 2 * H:3 * H]
            o_g = sig[:, 3 * H:4 * H]
            c_new = f_g * c[l] + i_g * g_g
            h_new = o_g * jnp.tanh(c_new)
            c[l] = c_new
            h[l] = h_new
            inp = h_new
        return inp, h, c

    # ---- encode the input sequence (small T -> unrolled) ---------------------
    top = None
    for t in range(T):
        top, h, c = lstm_cell(x_ref[t], h, c)

    # ---- first prediction from last encoder hidden ---------------------------
    pred = jnp.dot(top, w_fc, preferred_element_type=jnp.float32) + b_fc   # (B, Fp)
    out_ref[0] = pred

    # ---- autoregressive rollout ----------------------------------------------
    for step in range(1, R):
        # fc columns F..Fp are zero-padded, so pred[:, :H] is exactly the
        # zero-padded layer-0 input (no VMEM round trip needed).
        top, h, c = lstm_cell(pred[:, :H], h, c)
        pred = jnp.dot(top, w_fc, preferred_element_type=jnp.float32) + b_fc
        out_ref[step] = pred


# ----------------------------------------------------------------------------
# Wrapper: parameter packing (glue) + pallas_call
# ----------------------------------------------------------------------------
def lstm_forward_pallas(x, params, *, hidden_size, num_layers, time_range_out):
    B, T, F = x.shape
    H = hidden_size
    L = num_layers
    R = time_range_out
    assert F <= H, "kernel assumes features <= hidden_size (pads features to H)"
    Fp = max(128, pl.cdiv(F, 128) * 128)      # lane-dense fc / output width
    assert H <= Fp, "kernel feedback path assumes hidden_size <= padded output width"

    # pad features -> H and go time-major: (T, B, H)
    x_pad = jnp.pad(x.astype(jnp.float32), ((0, 0), (0, 0), (0, H - F)))
    x_tbh = jnp.transpose(x_pad, (1, 0, 2))

    # fused per-layer weights: [W_ih^T (padded to H rows for layer 0) ; W_hh^T] -> (2H, 4H)
    w_layers = []
    for l in range(L):
        wiT = params[f"weight_ih_l{l}"].T.astype(jnp.float32)          # (in, 4H)
        if wiT.shape[0] < H:
            wiT = jnp.pad(wiT, ((0, H - wiT.shape[0]), (0, 0)))
        whT = params[f"weight_hh_l{l}"].T.astype(jnp.float32)          # (H, 4H)
        w_layers.append(jnp.concatenate([wiT, whT], axis=0))           # (2H, 4H)
    w = jnp.stack(w_layers)                                            # (L, 2H, 4H)
    b = jnp.stack([(params[f"bias_ih_l{l}"] + params[f"bias_hh_l{l}"])[None, :]
                   for l in range(L)]).astype(jnp.float32)             # (L, 1, 4H)

    # fc weight/bias, output zero-padded to Fp lanes (lane-dense stores)
    w_fc = jnp.pad(params["fc_weight"].T.astype(jnp.float32), ((0, 0), (0, Fp - F)))  # (H, Fp)
    b_fc = jnp.pad(params["fc_bias"].astype(jnp.float32), (0, Fp - F))[None, :]       # (1, Fp)

    # TODO(synk): with batch >= 8 on v7x, add a batch grid axis with
    # dimension_semantics=("parallel", ...) to use both TensorCores; at B=2 it is not worth it.
    out_tbf = pl.pallas_call(
        lstm_rollout_kernel,
        out_shape=jax.ShapeDtypeStruct((R, B, Fp), jnp.float32),
        grid=(1,),
        in_specs=[
            pl.BlockSpec((T, B, H), lambda i: (0, 0, 0)),
            pl.BlockSpec((L, 2 * H, 4 * H), lambda i: (0, 0, 0)),
            pl.BlockSpec((L, 1, 4 * H), lambda i: (0, 0, 0)),
            pl.BlockSpec((H, Fp), lambda i: (0, 0)),
            pl.BlockSpec((1, Fp), lambda i: (0, 0)),
        ],
        out_specs=pl.BlockSpec((R, B, Fp), lambda i: (0, 0, 0)),
        compiler_params=pltpu.CompilerParams(dimension_semantics=("arbitrary",)),
    )(x_tbh, w, b, w_fc, b_fc)

    # slice off the lane padding and return batch-first like PyTorch
    return jnp.transpose(out_tbf[:, :, :F], (1, 0, 2))                 # (B, R, F)


# ----------------------------------------------------------------------------
# Pure-JAX reference (mirrors torch.nn.LSTM math) for correctness check
# ----------------------------------------------------------------------------
def lstm_forward_ref(x, params, *, hidden_size, num_layers, time_range_out):
    B, T, F = x.shape
    H, L, R = hidden_size, num_layers, time_range_out
    h = [jnp.zeros((B, H), jnp.float32) for _ in range(L)]
    c = [jnp.zeros((B, H), jnp.float32) for _ in range(L)]

    def cell(inp, h, c):
        for l in range(L):
            gates = (inp @ params[f"weight_ih_l{l}"].T + params[f"bias_ih_l{l}"]
                     + h[l] @ params[f"weight_hh_l{l}"].T + params[f"bias_hh_l{l}"])
            i_g = jax.nn.sigmoid(gates[:, :H])
            f_g = jax.nn.sigmoid(gates[:, H:2 * H])
            g_g = jnp.tanh(gates[:, 2 * H:3 * H])
            o_g = jax.nn.sigmoid(gates[:, 3 * H:])
            c[l] = f_g * c[l] + i_g * g_g
            h[l] = o_g * jnp.tanh(c[l])
            inp = h[l]
        return inp, h, c

    top = None
    for t in range(T):
        top, h, c = cell(x[:, t, :], h, c)
    preds = []
    pred = top @ params["fc_weight"].T + params["fc_bias"]
    preds.append(pred)
    for _ in range(1, R):
        top, h, c = cell(pred, h, c)
        pred = top @ params["fc_weight"].T + params["fc_bias"]
        preds.append(pred)
    return jnp.stack(preds, axis=1)


# ----------------------------------------------------------------------------
# main
# ----------------------------------------------------------------------------
if __name__ == "__main__":
    FEATURES = 4
    HIDDEN = 32
    NUM_LAYERS = 2
    TIME_RANGE_OUT = 10
    BATCH = 2
    SEQ = 8

    key = jax.random.PRNGKey(0)
    std = 1.0 / math.sqrt(HIDDEN)

    params = {}
    k = key
    for l in range(NUM_LAYERS):
        in_sz = FEATURES if l == 0 else HIDDEN
        k, k1, k2, k3, k4 = jax.random.split(k, 5)
        params[f"weight_ih_l{l}"] = jax.random.uniform(k1, (4 * HIDDEN, in_sz), jnp.float32, -std, std)
        params[f"weight_hh_l{l}"] = jax.random.uniform(k2, (4 * HIDDEN, HIDDEN), jnp.float32, -std, std)
        params[f"bias_ih_l{l}"] = jax.random.uniform(k3, (4 * HIDDEN,), jnp.float32, -std, std)
        params[f"bias_hh_l{l}"] = jax.random.uniform(k4, (4 * HIDDEN,), jnp.float32, -std, std)
    k, k5, k6, kx = jax.random.split(k, 4)
    params["fc_weight"] = jax.random.uniform(k5, (FEATURES, HIDDEN), jnp.float32, -std, std)
    params["fc_bias"] = jax.random.uniform(k6, (FEATURES,), jnp.float32, -std, std)

    x = jax.random.normal(kx, (BATCH, SEQ, FEATURES), jnp.float32)

    out = lstm_forward_pallas(x, params, hidden_size=HIDDEN, num_layers=NUM_LAYERS,
                              time_range_out=TIME_RANGE_OUT)
    out = jax.block_until_ready(out)

    ref = lstm_forward_ref(x, params, hidden_size=HIDDEN, num_layers=NUM_LAYERS,
                           time_range_out=TIME_RANGE_OUT)
    ref = jax.block_until_ready(ref)

    assert out.shape == (BATCH, TIME_RANGE_OUT, FEATURES)
    np.testing.assert_allclose(np.asarray(out), np.asarray(ref), rtol=2e-3, atol=2e-3)

    print("KERNEL_OK")
</pallas_src>

<mosaic_0001>
module attributes {stable_mosaic.version = 11 : i64} {
  func.func @lstm_rollout_kernel(%arg0: i32, %arg1: memref<8x2x32xf32, #tpu.memory_space<vmem>>, %arg2: memref<2x64x128xf32, #tpu.memory_space<vmem>>, %arg3: memref<2x1x128xf32, #tpu.memory_space<vmem>>, %arg4: memref<32x128xf32, #tpu.memory_space<vmem>>, %arg5: memref<1x128xf32, #tpu.memory_space<vmem>>, %arg6: memref<10x2x128xf32, #tpu.memory_space<vmem>>) attributes {dimension_semantics = [#tpu.dimension_semantics<arbitrary>], iteration_bounds = array<i64: 1>, scalar_prefetch = 0 : i64, scratch_operands = 0 : i64, tpu.core_type = #tpu.core_type<tc>, window_params = [{pipeline_mode = #tpu.pipeline_mode<synchronous>, transform_indices = @transform_0, window_bounds = array<i64: 8, 2, 32>}, {pipeline_mode = #tpu.pipeline_mode<synchronous>, transform_indices = @transform_1, window_bounds = array<i64: 2, 64, 128>}, {pipeline_mode = #tpu.pipeline_mode<synchronous>, transform_indices = @transform_2, window_bounds = array<i64: 2, 1, 128>}, {pipeline_mode = #tpu.pipeline_mode<synchronous>, transform_indices = @transform_3, window_bounds = array<i64: 32, 128>}, {pipeline_mode = #tpu.pipeline_mode<synchronous>, transform_indices = @transform_4, window_bounds = array<i64: 1, 128>}, {pipeline_mode = #tpu.pipeline_mode<synchronous>, transform_indices = @transform_5, window_bounds = array<i64: 10, 2, 128>}]} {
    %c0 = arith.constant 0 : index
    %c0_0 = arith.constant 0 : index
    %c0_1 = arith.constant 0 : index
    %0 = vector.load %arg2[%c0, %c0_0, %c0_1] : memref<2x64x128xf32, #tpu.memory_space<vmem>>, vector<1x64x128xf32>
    %1 = vector.shape_cast %0 : vector<1x64x128xf32> to vector<64x128xf32>
    %c1 = arith.constant 1 : index
    %c0_2 = arith.constant 0 : index
    %c0_3 = arith.constant 0 : index
    %2 = vector.load %arg2[%c1, %c0_2, %c0_3] : memref<2x64x128xf32, #tpu.memory_space<vmem>>, vector<1x64x128xf32>
    %3 = vector.shape_cast %2 : vector<1x64x128xf32> to vector<64x128xf32>
    %c0_4 = arith.constant 0 : index
    %c0_5 = arith.constant 0 : index
    %c0_6 = arith.constant 0 : index
    %4 = vector.load %arg3[%c0_4, %c0_5, %c0_6] : memref<2x1x128xf32, #tpu.memory_space<vmem>>, vector<1x1x128xf32>
    %5 = vector.shape_cast %4 : vector<1x1x128xf32> to vector<1x128xf32>
    %6 = vector.shape_cast %5 : vector<1x128xf32> to vector<1x128xf32>
    %7 = vector.broadcast %6 : vector<1x128xf32> to vector<2x128xf32>
    %c1_7 = arith.constant 1 : index
    %c0_8 = arith.constant 0 : index
    %c0_9 = arith.constant 0 : index
    %8 = vector.load %arg3[%c1_7, %c0_8, %c0_9] : memref<2x1x128xf32, #tpu.memory_space<vmem>>, vector<1x1x128xf32>
    %9 = vector.shape_cast %8 : vector<1x1x128xf32> to vector<1x128xf32>
    %10 = vector.shape_cast %9 : vector<1x128xf32> to vector<1x128xf32>
    %11 = vector.broadcast %10 : vector<1x128xf32> to vector<2x128xf32>
    %c0_10 = arith.constant 0 : index
    %c0_11 = arith.constant 0 : index
    %12 = vector.load %arg4[%c0_10, %c0_11] : memref<32x128xf32, #tpu.memory_space<vmem>>, vector<32x128xf32>
    %c0_12 = arith.constant 0 : index
    %c0_13 = arith.constant 0 : index
    %13 = vector.load %arg5[%c0_12, %c0_13] : memref<1x128xf32, #tpu.memory_space<vmem>>, vector<1x128xf32>
    %14 = vector.shape_cast %13 : vector<1x128xf32> to vector<1x128xf32>
    %15 = vector.broadcast %14 : vector<1x128xf32> to vector<2x128xf32>
    %cst = arith.constant 0.000000e+00 : f32
    %16 = vector.broadcast %cst : f32 to vector<2x32xf32>
    %cst_14 = arith.constant 0.000000e+00 : f32
    %17 = vector.broadcast %cst_14 : f32 to vector<2x32xf32>
    %cst_15 = arith.constant 0.000000e+00 : f32
    %18 = vector.broadcast %cst_15 : f32 to vector<2x32xf32>
    %cst_16 = arith.constant 0.000000e+00 : f32
    %19 = vector.broadcast %cst_16 : f32 to vector<2x32xf32>
    %c0_17 = arith.constant 0 : index
    %c0_18 = arith.constant 0 : index
    %c0_19 = arith.constant 0 : index
    %20 = vector.load %arg1[%c0_17, %c0_18, %c0_19] : memref<8x2x32xf32, #tpu.memory_space<vmem>>, vector<1x2x32xf32>
    %21 = vector.shape_cast %20 : vector<1x2x32xf32> to vector<2x32xf32>
    %22 = tpu.concatenate %21, %16 in 1 : vector<2x32xf32>, vector<2x32xf32> -> vector<2x64xf32>
    %cst_20 = arith.constant dense<0.000000e+00> : vector<2x128xf32>
    %23 = tpu.matmul %22, %1, %cst_20 {dimension_numbers = #tpu.dot_dimension_numbers<[1], [0], [0], [1], [0, 0, 1, 1], [], []>} : vector<2x64xf32>, vector<64x128xf32>, vector<2x128xf32> -> vector<2x128xf32>
    %24 = arith.addf %23, %7 : vector<2x128xf32>
    %25 = arith.negf %24 : vector<2x128xf32>
    %26 = math.exp %25 : vector<2x128xf32>
    %cst_21 = arith.constant 1.000000e+00 : f32
    %27 = vector.broadcast %cst_21 : f32 to vector<2x128xf32>
    %28 = arith.addf %27, %26 : vector<2x128xf32>
    %29 = arith.divf %27, %28 : vector<2x128xf32>
    %30 = math.tanh %24 : vector<2x128xf32>
    %31 = vector.extract_strided_slice %29 {offsets = [0, 0], sizes = [2, 32], strides = [1, 1]} : vector<2x128xf32> to vector<2x32xf32>
    %32 = vector.extract_strided_slice %29 {offsets = [0, 32], sizes = [2, 32], strides = [1, 1]} : vector<2x128xf32> to vector<2x32xf32>
    %33 = vector.extract_strided_slice %30 {offsets = [0, 64], sizes = [2, 32], strides = [1, 1]} : vector<2x128xf32> to vector<2x32xf32>
    %34 = vector.extract_strided_slice %29 {offsets = [0, 96], sizes = [2, 32], strides = [1, 1]} : vector<2x128xf32> to vector<2x32xf32>
    %35 = arith.mulf %32, %18 : vector<2x32xf32>
    %36 = arith.mulf %31, %33 : vector<2x32xf32>
    %37 = arith.addf %35, %36 : vector<2x32xf32>
    %38 = math.tanh %37 : vector<2x32xf32>
    %39 = arith.mulf %34, %38 : vector<2x32xf32>
    %40 = tpu.concatenate %39, %17 in 1 : vector<2x32xf32>, vector<2x32xf32> -> vector<2x64xf32>
    %cst_22 = arith.constant dense<0.000000e+00> : vector<2x128xf32>
    %41 = tpu.matmul %40, %3, %cst_22 {dimension_numbers = #tpu.dot_dimension_numbers<[1], [0], [0], [1], [0, 0, 1, 1], [], []>} : vector<2x64xf32>, vector<64x128xf32>, vector<2x128xf32> -> vector<2x128xf32>
    %42 = arith.addf %41, %11 : vector<2x128xf32>
    %43 = arith.negf %42 : vector<2x128xf32>
    %44 = math.exp %43 : vector<2x128xf32>
    %cst_23 = arith.constant 1.000000e+00 : f32
    %45 = vector.broadcast %cst_23 : f32 to vector<2x128xf32>
    %46 = arith.addf %45, %44 : vector<2x128xf32>
    %47 = arith.divf %45, %46 : vector<2x128xf32>
    %48 = math.tanh %42 : vector<2x128xf32>
    %49 = vector.extract_strided_slice %47 {offsets = [0, 0], sizes = [2, 32], strides = [1, 1]} : vector<2x128xf32> to vector<2x32xf32>
    %50 = vector.extract_strided_slice %47 {offsets = [0, 32], sizes = [2, 32], strides = [1, 1]} : vector<2x128xf32> to vector<2x32xf32>
    %51 = vector.extract_strided_slice %48 {offsets = [0, 64], sizes = [2, 32], strides = [1, 1]} : vector<2x128xf32> to vector<2x32xf32>
    %52 = vector.extract_strided_slice %47 {offsets = [0, 96], sizes = [2, 32], strides = [1, 1]} : vector<2x128xf32> to vector<2x32xf32>
    %53 = arith.mulf %50, %19 : vector<2x32xf32>
    %54 = arith.mulf %49, %51 : vector<2x32xf32>
    %55 = arith.addf %53, %54 : vector<2x32xf32>
    %56 = math.tanh %55 : vector<2x32xf32>
    %57 = arith.mulf %52, %56 : vector<2x32xf32>
    %c1_24 = arith.constant 1 : index
    %c0_25 = arith.constant 0 : index
    %c0_26 = arith.constant 0 : index
    %58 = vector.load %arg1[%c1_24, %c0_25, %c0_26] : memref<8x2x32xf32, #tpu.memory_space<vmem>>, vector<1x2x32xf32>
    %59 = vector.shape_cast %58 : vector<1x2x32xf32> to vector<2x32xf32>
    %60 = tpu.concatenate %59, %39 in 1 : vector<2x32xf32>, vector<2x32xf32> -> vector<2x64xf32>
    %cst_27 = arith.constant dense<0.000000e+00> : vector<2x128xf32>
    %61 = tpu.matmul %60, %1, %cst_27 {dimension_numbers = #tpu.dot_dimension_numbers<[1], [0], [0], [1], [0, 0, 1, 1], [], []>} : vector<2x64xf32>, vector<64x128xf32>, vector<2x128xf32> -> vector<2x128xf32>
    %62 = arith.addf %61, %7 : vector<2x128xf32>
    %63 = arith.negf %62 : vector<2x128xf32>
    %64 = math.exp %63 : vector<2x128xf32>
    %cst_28 = arith.constant 1.000000e+00 : f32
    %65 = vector.broadcast %cst_28 : f32 to vector<2x128xf32>
    %66 = arith.addf %65, %64 : vector<2x128xf32>
    %67 = arith.divf %65, %66 : vector<2x128xf32>
    %68 = math.tanh %62 : vector<2x128xf32>
    %69 = vector.extract_strided_slice %67 {offsets = [0, 0], sizes = [2, 32], strides = [1, 1]} : vector<2x128xf32> to vector<2x32xf32>
    %70 = vector.extract_strided_slice %67 {offsets = [0, 32], sizes = [2, 32], strides = [1, 1]} : vector<2x128xf32> to vector<2x32xf32>
    %71 = vector.extract_strided_slice %68 {offsets = [0, 64], sizes = [2, 32], strides = [1, 1]} : vector<2x128xf32> to vector<2x32xf32>
    %72 = vector.extract_strided_slice %67 {offsets = [0, 96], sizes = [2, 32], strides = [1, 1]} : vector<2x128xf32> to vector<2x32xf32>
    %73 = arith.mulf %70, %37 : vector<2x32xf32>
    %74 = arith.mulf %69, %71 : vector<2x32xf32>
    %75 = arith.addf %73, %74 : vector<2x32xf32>
    %76 = math.tanh %75 : vector<2x32xf32>
    %77 = arith.mulf %72, %76 : vector<2x32xf32>
    %78 = tpu.concatenate %77, %57 in 1 : vector<2x32xf32>, vector<2x32xf32> -> vector<2x64xf32>
    %cst_29 = arith.constant dense<0.000000e+00> : vector<2x128xf32>
    %79 = tpu.matmul %78, %3, %cst_29 {dimension_numbers = #tpu.dot_dimension_numbers<[1], [0], [0], [1], [0, 0, 1, 1], [], []>} : vector<2x64xf32>, vector<64x128xf32>, vector<2x128xf32> -> vector<2x128xf32>
    %80 = arith.addf %79, %11 : vector<2x128xf32>
    %81 = arith.negf %80 : vector<2x128xf32>
    %82 = math.exp %81 : vector<2x128xf32>
    %cst_30 = arith.constant 1.000000e+00 : f32
    %83 = vector.broadcast %cst_30 : f32 to vector<2x128xf32>
    %84 = arith.addf %83, %82 : vector<2x128xf32>
    %85 = arith.divf %83, %84 : vector<2x128xf32>
    %86 = math.tanh %80 : vector<2x128xf32>
    %87 = vector.extract_strided_slice %85 {offsets = [0, 0], sizes = [2, 32], strides = [1, 1]} : vector<2x128xf32> to vector<2x32xf32>
    %88 = vector.extract_strided_slice %85 {offsets = [0, 32], sizes = [2, 32], strides = [1, 1]} : vector<2x128xf32> to vector<2x32xf32>
    %89 = vector.extract_strided_slice %86 {offsets = [0, 64], sizes = [2, 32], strides = [1, 1]} : vector<2x128xf32> to vector<2x32xf32>
    %90 = vector.extract_strided_slice %85 {offsets = [0, 96], sizes = [2, 32], strides = [1, 1]} : vector<2x128xf32> to vector<2x32xf32>
    %91 = arith.mulf %88, %55 : vector<2x32xf32>
    %92 = arith.mulf %87, %89 : vector<2x32xf32>
    %93 = arith.addf %91, %92 : vector<2x32xf32>
    %94 = math.tanh %93 : vector<2x32xf32>
    %95 = arith.mulf %90, %94 : vector<2x32xf32>
    %c2 = arith.constant 2 : index
    %c0_31 = arith.constant 0 : index
    %c0_32 = arith.constant 0 : index
    %96 = vector.load %arg1[%c2, %c0_31, %c0_32] : memref<8x2x32xf32, #tpu.memory_space<vmem>>, vector<1x2x32xf32>
    %97 = vector.shape_cast %96 : vector<1x2x32xf32> to vector<2x32xf32>
    %98 = tpu.concatenate %97, %77 in 1 : vector<2x32xf32>, vector<2x32xf32> -> vector<2x64xf32>
    %cst_33 = arith.constant dense<0.000000e+00> : vector<2x128xf32>
    %99 = tpu.matmul %98, %1, %cst_33 {dimension_numbers = #tpu.dot_dimension_numbers<[1], [0], [0], [1], [0, 0, 1, 1], [], []>} : vector<2x64xf32>, vector<64x128xf32>, vector<2x128xf32> -> vector<2x128xf32>
    %100 = arith.addf %99, %7 : vector<2x128xf32>
    %101 = arith.negf %100 : vector<2x128xf32>
    %102 = math.exp %101 : vector<2x128xf32>
    %cst_34 = arith.constant 1.000000e+00 : f32
    %103 = vector.broadcast %cst_34 : f32 to vector<2x128xf32>
    %104 = arith.addf %103, %102 : vector<2x128xf32>
    %105 = arith.divf %103, %104 : vector<2x128xf32>
    %106 = math.tanh %100 : vector<2x128xf32>
    %107 = vector.extract_strided_slice %105 {offsets = [0, 0], sizes = [2, 32], strides = [1, 1]} : vector<2x128xf32> to vector<2x32xf32>
    %108 = vector.extract_strided_slice %105 {offsets = [0, 32], sizes = [2, 32], strides = [1, 1]} : vector<2x128xf32> to vector<2x32xf32>
    %109 = vector.extract_strided_slice %106 {offsets = [0, 64], sizes = [2, 32], strides = [1, 1]} : vector<2x128xf32> to vector<2x32xf32>
    %110 = vector.extract_strided_slice %105 {offsets = [0, 96], sizes = [2, 32], strides = [1, 1]} : vector<2x128xf32> to vector<2x32xf32>
    %111 = arith.mulf %108, %75 : vector<2x32xf32>
    %112 = arith.mulf %107, %109 : vector<2x32xf32>
    %113 = arith.addf %111, %112 : vector<2x32xf32>
    %114 = math.tanh %113 : vector<2x32xf32>
    %115 = arith.mulf %110, %114 : vector<2x32xf32>
    %116 = tpu.concatenate %115, %95 in 1 : vector<2x32xf32>, vector<2x32xf32> -> vector<2x64xf32>
    %cst_35 = arith.constant dense<0.000000e+00> : vector<2x128xf32>
    %117 = tpu.matmul %116, %3, %cst_35 {dimension_numbers = #tpu.dot_dimension_numbers<[1], [0], [0], [1], [0, 0, 1, 1], [], []>} : vector<2x64xf32>, vector<64x128xf32>, vector<2x128xf32> -> vector<2x128xf32>
    %118 = arith.addf %117, %11 : vector<2x128xf32>
    %119 = arith.negf %118 : vector<2x128xf32>
    %120 = math.exp %119 : vector<2x128xf32>
    %cst_36 = arith.constant 1.000000e+00 : f32
    %121 = vector.broadcast %cst_36 : f32 to vector<2x128xf32>
    %122 = arith.addf %121, %120 : vector<2x128xf32>
    %123 = arith.divf %121, %122 : vector<2x128xf32>
    %124 = math.tanh %118 : vector<2x128xf32>
    %125 = vector.extract_strided_slice %123 {offsets = [0, 0], sizes = [2, 32], strides = [1, 1]} : vector<2x128xf32> to vector<2x32xf32>
    %126 = vector.extract_strided_slice %123 {offsets = [0, 32], sizes = [2, 32], strides = [1, 1]} : vector<2x128xf32> to vector<2x32xf32>
    %127 = vector.extract_strided_slice %124 {offsets = [0, 64], sizes = [2, 32], strides = [1, 1]} : vector<2x128xf32> to vector<2x32xf32>
    %128 = vector.extract_strided_slice %123 {offsets = [0, 96], sizes = [2, 32], strides = [1, 1]} : vector<2x128xf32> to vector<2x32xf32>
    %129 = arith.mulf %126, %93 : vector<2x32xf32>
    %130 = arith.mulf %125, %127 : vector<2x32xf32>
    %131 = arith.addf %129, %130 : vector<2x32xf32>
    %132 = math.tanh %131 : vector<2x32xf32>
    %133 = arith.mulf %128, %132 : vector<2x32xf32>
    %c3 = arith.constant 3 : index
    %c0_37 = arith.constant 0 : index
    %c0_38 = arith.constant 0 : index
    %134 = vector.load %arg1[%c3, %c0_37, %c0_38] : memref<8x2x32xf32, #tpu.memory_space<vmem>>, vector<1x2x32xf32>
    %135 = vector.shape_cast %134 : vector<1x2x32xf32> to vector<2x32xf32>
    %136 = tpu.concatenate %135, %115 in 1 : vector<2x32xf32>, vector<2x32xf32> -> vector<2x64xf32>
    %cst_39 = arith.constant dense<0.000000e+00> : vector<2x128xf32>
    %137 = tpu.matmul %136, %1, %cst_39 {dimension_numbers = #tpu.dot_dimension_numbers<[1], [0], [0], [1], [0, 0, 1, 1], [], []>} : vector<2x64xf32>, vector<64x128xf32>, vector<2x128xf32> -> vector<2x128xf32>
    %138 = arith.addf %137, %7 : vector<2x128xf32>
    %139 = arith.negf %138 : vector<2x128xf32>
    %140 = math.exp %139 : vector<2x128xf32>
    %cst_40 = arith.constant 1.000000e+00 : f32
    %141 = vector.broadcast %cst_40 : f32 to vector<2x128xf32>
    %142 = arith.addf %141, %140 : vector<2x128xf32>
    %143 = arith.divf %141, %142 : vector<2x128xf32>
    %144 = math.tanh %138 : vector<2x128xf32>
    %145 = vector.extract_strided_slice %143 {offsets = [0, 0], sizes = [2, 32], strides = [1, 1]} : vector<2x128xf32> to vector<2x32xf32>
    %146 = vector.extract_strided_slice %143 {offsets = [0, 32], sizes = [2, 32], strides = [1, 1]} : vector<2x128xf32> to vector<2x32xf32>
    %147 = vector.extract_strided_slice %144 {offsets = [0, 64], sizes = [2, 32], strides = [1, 1]} : vector<2x128xf32> to vector<2x32xf32>
    %148 = vector.extract_strided_slice %143 {offsets = [0, 96], sizes = [2, 32], strides = [1, 1]} : vector<2x128xf32> to vector<2x32xf32>
    %149 = arith.mulf %146, %113 : vector<2x32xf32>
    %150 = arith.mulf %145, %147 : vector<2x32xf32>
    %151 = arith.addf %149, %150 : vector<2x32xf32>
    %152 = math.tanh %151 : vector<2x32xf32>
    %153 = arith.mulf %148, %152 : vector<2x32xf32>
    %154 = tpu.concatenate %153, %133 in 1 : vector<2x32xf32>, vector<2x32xf32> -> vector<2x64xf32>
    %cst_41 = arith.constant dense<0.000000e+00> : vector<2x128xf32>
    %155 = tpu.matmul %154, %3, %cst_41 {dimension_numbers = #tpu.dot_dimension_numbers<[1], [0], [0], [1], [0, 0, 1, 1], [], []>} : vector<2x64xf32>, vector<64x128xf32>, vector<2x128xf32> -> vector<2x128xf32>
    %156 = arith.addf %155, %11 : vector<2x128xf32>
    %157 = arith.negf %156 : vector<2x128xf32>
    %158 = math.exp %157 : vector<2x128xf32>
    %cst_42 = arith.constant 1.000000e+00 : f32
    %159 = vector.broadcast %cst_42 : f32 to vector<2x128xf32>
    %160 = arith.addf %159, %158 : vector<2x128xf32>
    %161 = arith.divf %159, %160 : vector<2x128xf32>
    %162 = math.tanh %156 : vector<2x128xf32>
    %163 = vector.extract_strided_slice %161 {offsets = [0, 0], sizes = [2, 32], strides = [1, 1]} : vector<2x128xf32> to vector<2x32xf32>
    %164 = vector.extract_strided_slice %161 {offsets = [0, 32], sizes = [2, 32], strides = [1, 1]} : vector<2x128xf32> to vector<2x32xf32>
    %165 = vector.extract_strided_slice %162 {offsets = [0, 64], sizes = [2, 32], strides = [1, 1]} : vector<2x128xf32> to vector<2x32xf32>
    %166 = vector.extract_strided_slice %161 {offsets = [0, 96], sizes = [2, 32], strides = [1, 1]} : vector<2x128xf32> to vector<2x32xf32>
    %167 = arith.mulf %164, %131 : vector<2x32xf32>
    %168 = arith.mulf %163, %165 : vector<2x32xf32>
    %169 = arith.addf %167, %168 : vector<2x32xf32>
    %170 = math.tanh %169 : vector<2x32xf32>
    %171 = arith.mulf %166, %170 : vector<2x32xf32>
    %c4 = arith.constant 4 : index
    %c0_43 = arith.constant 0 : index
    %c0_44 = arith.constant 0 : index
    %172 = vector.load %arg1[%c4, %c0_43, %c0_44] : memref<8x2x32xf32, #tpu.memory_space<vmem>>, vector<1x2x32xf32>
    %173 = vector.shape_cast %172 : vector<1x2x32xf32> to vector<2x32xf32>
    %174 = tpu.concatenate %173, %153 in 1 : vector<2x32xf32>, vector<2x32xf32> -> vector<2x64xf32>
    %cst_45 = arith.constant dense<0.000000e+00> : vector<2x128xf32>
    %175 = tpu.matmul %174, %1, %cst_45 {dimension_numbers = #tpu.dot_dimension_numbers<[1], [0], [0], [1], [0, 0, 1, 1], [], []>} : vector<2x64xf32>, vector<64x128xf32>, vector<2x128xf32> -> vector<2x128xf32>
    %176 = arith.addf %175, %7 : vector<2x128xf32>
    %177 = arith.negf %176 : vector<2x128xf32>
    %178 = math.exp %177 : vector<2x128xf32>
    %cst_46 = arith.constant 1.000000e+00 : f32
    %179 = vector.broadcast %cst_46 : f32 to vector<2x128xf32>
    %180 = arith.addf %179, %178 : vector<2x128xf32>
    %181 = arith.divf %179, %180 : vector<2x128xf32>
    %182 = math.tanh %176 : vector<2x128xf32>
    %183 = vector.extract_strided_slice %181 {offsets = [0, 0], sizes = [2, 32], strides = [1, 1]} : vector<2x128xf32> to vector<2x32xf32>
    %184 = vector.extract_strided_slice %181 {offsets = [0, 32], sizes = [2, 32], strides = [1, 1]} : vector<2x128xf32> to vector<2x32xf32>
    %185 = vector.extract_strided_slice %182 {offsets = [0, 64], sizes = [2, 32], strides = [1, 1]} : vector<2x128xf32> to vector<2x32xf32>
    %186 = vector.extract_strided_slice %181 {offsets = [0, 96], sizes = [2, 32], strides = [1, 1]} : vector<2x128xf32> to vector<2x32xf32>
    %187 = arith.mulf %184, %151 : vector<2x32xf32>
    %188 = arith.mulf %183, %185 : vector<2x32xf32>
    %189 = arith.addf %187, %188 : vector<2x32xf32>
    %190 = math.tanh %189 : vector<2x32xf32>
    %191 = arith.mulf %186, %190 : vector<2x32xf32>
    %192 = tpu.concatenate %191, %171 in 1 : vector<2x32xf32>, vector<2x32xf32> -> vector<2x64xf32>
    %cst_47 = arith.constant dense<0.000000e+00> : vector<2x128xf32>
    %193 = tpu.matmul %192, %3, %cst_47 {dimension_numbers = #tpu.dot_dimension_numbers<[1], [0], [0], [1], [0, 0, 1, 1], [], []>} : vector<2x64xf32>, vector<64x128xf32>, vector<2x128xf32> -> vector<2x128xf32>
    %194 = arith.addf %193, %11 : vector<2x128xf32>
    %195 = arith.negf %194 : vector<2x128xf32>
    %196 = math.exp %195 : vector<2x128xf32>
    %cst_48 = arith.constant 1.000000e+00 : f32
    %197 = vector.broadcast %cst_48 : f32 to vector<2x128xf32>
    %198 = arith.addf %197, %196 : vector<2x128xf32>
    %199 = arith.divf %197, %198 : vector<2x128xf32>
    %200 = math.tanh %194 : vector<2x128xf32>
    %201 = vector.extract_strided_slice %199 {offsets = [0, 0], sizes = [2, 32], strides = [1, 1]} : vector<2x128xf32> to vector<2x32xf32>
    %202 = vector.extract_strided_slice %199 {offsets = [0, 32], sizes = [2, 32], strides = [1, 1]} : vector<2x128xf32> to vector<2x32xf32>
    %203 = vector.extract_strided_slice %200 {offsets = [0, 64], sizes = [2, 32], strides = [1, 1]} : vector<2x128xf32> to vector<2x32xf32>
    %204 = vector.extract_strided_slice %199 {offsets = [0, 96], sizes = [2, 32], strides = [1, 1]} : vector<2x128xf32> to vector<2x32xf32>
    %205 = arith.mulf %202, %169 : vector<2x32xf32>
    %206 = arith.mulf %201, %203 : vector<2x32xf32>
    %207 = arith.addf %205, %206 : vector<2x32xf32>
    %208 = math.tanh %207 : vector<2x32xf32>
    %209 = arith.mulf %204, %208 : vector<2x32xf32>
    %c5 = arith.constant 5 : index
    %c0_49 = arith.constant 0 : index
    %c0_50 = arith.constant 0 : index
    %210 = vector.load %arg1[%c5, %c0_49, %c0_50] : memref<8x2x32xf32, #tpu.memory_space<vmem>>, vector<1x2x32xf32>
    %211 = vector.shape_cast %210 : vector<1x2x32xf32> to vector<2x32xf32>
    %212 = tpu.concatenate %211, %191 in 1 : vector<2x32xf32>, vector<2x32xf32> -> vector<2x64xf32>
    %cst_51 = arith.constant dense<0.000000e+00> : vector<2x128xf32>
    %213 = tpu.matmul %212, %1, %cst_51 {dimension_numbers = #tpu.dot_dimension_numbers<[1], [0], [0], [1], [0, 0, 1, 1], [], []>} : vector<2x64xf32>, vector<64x128xf32>, vector<2x128xf32> -> vector<2x128xf32>
    %214 = arith.addf %213, %7 : vector<2x128xf32>
    %215 = arith.negf %214 : vector<2x128xf32>
    %216 = math.exp %215 : vector<2x128xf32>
    %cst_52 = arith.constant 1.000000e+00 : f32
    %217 = vector.broadcast %cst_52 : f32 to vector<2x128xf32>
    %218 = arith.addf %217, %216 : vector<2x128xf32>
    %219 = arith.divf %217, %218 : vector<2x128xf32>
    %220 = math.tanh %214 : vector<2x128xf32>
    %221 = vector.extract_strided_slice %219 {offsets = [0, 0], sizes = [2, 32], strides = [1, 1]} : vector<2x128xf32> to vector<2x32xf32>
    %222 = vector.extract_strided_slice %219 {offsets = [0, 32], sizes = [2, 32], strides = [1, 1]} : vector<2x128xf32> to vector<2x32xf32>
    %223 = vector.extract_strided_slice %220 {offsets = [0, 64], sizes = [2, 32], strides = [1, 1]} : vector<2x128xf32> to vector<2x32xf32>
    %224 = vector.extract_strided_slice %219 {offsets = [0, 96], sizes = [2, 32], strides = [1, 1]} : vector<2x128xf32> to vector<2x32xf32>
    %225 = arith.mulf %222, %189 : vector<2x32xf32>
    %226 = arith.mulf %221, %223 : vector<2x32xf32>
    %227 = arith.addf %225, %226 : vector<2x32xf32>
    %228 = math.tanh %227 : vector<2x32xf32>
    %229 = arith.mulf %224, %228 : vector<2x32xf32>
    %230 = tpu.concatenate %229, %209 in 1 : vector<2x32xf32>, vector<2x32xf32> -> vector<2x64xf32>
    %cst_53 = arith.constant dense<0.000000e+00> : vector<2x128xf32>
    %231 = tpu.matmul %230, %3, %cst_53 {dimension_numbers = #tpu.dot_dimension_numbers<[1], [0], [0], [1], [0, 0, 1, 1], [], []>} : vector<2x64xf32>, vector<64x128xf32>, vector<2x128xf32> -> vector<2x128xf32>
    %232 = arith.addf %231, %11 : vector<2x128xf32>
    %233 = arith.negf %232 : vector<2x128xf32>
    %234 = math.exp %233 : vector<2x128xf32>
    %cst_54 = arith.constant 1.000000e+00 : f32
    %235 = vector.broadcast %cst_54 : f32 to vector<2x128xf32>
    %236 = arith.addf %235, %234 : vector<2x128xf32>
    %237 = arith.divf %235, %236 : vector<2x128xf32>
    %238 = math.tanh %232 : vector<2x128xf32>
    %239 = vector.extract_strided_slice %237 {offsets = [0, 0], sizes = [2, 32], strides = [1, 1]} : vector<2x128xf32> to vector<2x32xf32>
    %240 = vector.extract_strided_slice %237 {offsets = [0, 32], sizes = [2, 32], strides = [1, 1]} : vector<2x128xf32> to vector<2x32xf32>
    %241 = vector.extract_strided_slice %238 {offsets = [0, 64], sizes = [2, 32], strides = [1, 1]} : vector<2x128xf32> to vector<2x32xf32>
    %242 = vector.extract_strided_slice %237 {offsets = [0, 96], sizes = [2, 32], strides = [1, 1]} : vector<2x128xf32> to vector<2x32xf32>
    %243 = arith.mulf %240, %207 : vector<2x32xf32>
    %244 = arith.mulf %239, %241 : vector<2x32xf32>
    %245 = arith.addf %243, %244 : vector<2x32xf32>
    %246 = math.tanh %245 : vector<2x32xf32>
    %247 = arith.mulf %242, %246 : vector<2x32xf32>
    %c6 = arith.constant 6 : index
    %c0_55 = arith.constant 0 : index
    %c0_56 = arith.constant 0 : index
    %248 = vector.load %arg1[%c6, %c0_55, %c0_56] : memref<8x2x32xf32, #tpu.memory_space<vmem>>, vector<1x2x32xf32>
    %249 = vector.shape_cast %248 : vector<1x2x32xf32> to vector<2x32xf32>
    %250 = tpu.concatenate %249, %229 in 1 : vector<2x32xf32>, vector<2x32xf32> -> vector<2x64xf32>
    %cst_57 = arith.constant dense<0.000000e+00> : vector<2x128xf32>
    %251 = tpu.matmul %250, %1, %cst_57 {dimension_numbers = #tpu.dot_dimension_numbers<[1], [0], [0], [1], [0, 0, 1, 1], [], []>} : vector<2x64xf32>, vector<64x128xf32>, vector<2x128xf32> -> vector<2x128xf32>
    %252 = arith.addf %251, %7 : vector<2x128xf32>
    %253 = arith.negf %252 : vector<2x128xf32>
    %254 = math.exp %253 : vector<2x128xf32>
    %cst_58 = arith.constant 1.000000e+00 : f32
    %255 = vector.broadcast %cst_58 : f32 to vector<2x128xf32>
    %256 = arith.addf %255, %254 : vector<2x128xf32>
    %257 = arith.divf %255, %256 : vector<2x128xf32>
    %258 = math.tanh %252 : vector<2x128xf32>
    %259 = vector.extract_strided_slice %257 {offsets = [0, 0], sizes = [2, 32], strides = [1, 1]} : vector<2x128xf32> to vector<2x32xf32>
    %260 = vector.extract_strided_slice %257 {offsets = [0, 32], sizes = [2, 32], strides = [1, 1]} : vector<2x128xf32> to vector<2x32xf32>
    %261 = vector.extract_strided_slice %258 {offsets = [0, 64], sizes = [2, 32], strides = [1, 1]} : vector<2x128xf32> to vector<2x32xf32>
    %262 = vector.extract_strided_slice %257 {offsets = [0, 96], sizes = [2, 32], strides = [1, 1]} : vector<2x128xf32> to vector<2x32xf32>
    %263 = arith.mulf %260, %227 : vector<2x32xf32>
    %264 = arith.mulf %259, %261 : vector<2x32xf32>
    %265 = arith.addf %263, %264 : vector<2x32xf32>
    %266 = math.tanh %265 : vector<2x32xf32>
    %267 = arith.mulf %262, %266 : vector<2x32xf32>
    %268 = tpu.concatenate %267, %247 in 1 : vector<2x32xf32>, vector<2x32xf32> -> vector<2x64xf32>
    %cst_59 = arith.constant dense<0.000000e+00> : vector<2x128xf32>
    %269 = tpu.matmul %268, %3, %cst_59 {dimension_numbers = #tpu.dot_dimension_numbers<[1], [0], [0], [1], [0, 0, 1, 1], [], []>} : vector<2x64xf32>, vector<64x128xf32>, vector<2x128xf32> -> vector<2x128xf32>
    %270 = arith.addf %269, %11 : vector<2x128xf32>
    %271 = arith.negf %270 : vector<2x128xf32>
    %272 = math.exp %271 : vector<2x128xf32>
    %cst_60 = arith.constant 1.000000e+00 : f32
    %273 = vector.broadcast %cst_60 : f32 to vector<2x128xf32>
    %274 = arith.addf %273, %272 : vector<2x128xf32>
    %275 = arith.divf %273, %274 : vector<2x128xf32>
    %276 = math.tanh %270 : vector<2x128xf32>
    %277 = vector.extract_strided_slice %275 {offsets = [0, 0], sizes = [2, 32], strides = [1, 1]} : vector<2x128xf32> to vector<2x32xf32>
    %278 = vector.extract_strided_slice %275 {offsets = [0, 32], sizes = [2, 32], strides = [1, 1]} : vector<2x128xf32> to vector<2x32xf32>
    %279 = vector.extract_strided_slice %276 {offsets = [0, 64], sizes = [2, 32], strides = [1, 1]} : vector<2x128xf32> to vector<2x32xf32>
    %280 = vector.extract_strided_slice %275 {offsets = [0, 96], sizes = [2, 32], strides = [1, 1]} : vector<2x128xf32> to vector<2x32xf32>
    %281 = arith.mulf %278, %245 : vector<2x32xf32>
    %282 = arith.mulf %277, %279 : vector<2x32xf32>
    %283 = arith.addf %281, %282 : vector<2x32xf32>
    %284 = math.tanh %283 : vector<2x32xf32>
    %285 = arith.mulf %280, %284 : vector<2x32xf32>
    %c7 = arith.constant 7 : index
    %c0_61 = arith.constant 0 : index
    %c0_62 = arith.constant 0 : index
    %286 = vector.load %arg1[%c7, %c0_61, %c0_62] : memref<8x2x32xf32, #tpu.memory_space<vmem>>, vector<1x2x32xf32>
    %287 = vector.shape_cast %286 : vector<1x2x32xf32> to vector<2x32xf32>
    %288 = tpu.concatenate %287, %267 in 1 : vector<2x32xf32>, vector<2x32xf32> -> vector<2x64xf32>
    %cst_63 = arith.constant dense<0.000000e+00> : vector<2x128xf32>
    %289 = tpu.matmul %288, %1, %cst_63 {dimension_numbers = #tpu.dot_dimension_numbers<[1], [0], [0], [1], [0, 0, 1, 1], [], []>} : vector<2x64xf32>, vector<64x128xf32>, vector<2x128xf32> -> vector<2x128xf32>
    %290 = arith.addf %289, %7 : vector<2x128xf32>
    %291 = arith.negf %290 : vector<2x128xf32>
    %292 = math.exp %291 : vector<2x128xf32>
    %cst_64 = arith.constant 1.000000e+00 : f32
    %293 = vector.broadcast %cst_64 : f32 to vector<2x128xf32>
    %294 = arith.addf %293, %292 : vector<2x128xf32>
    %295 = arith.divf %293, %294 : vector<2x128xf32>
    %296 = math.tanh %290 : vector<2x128xf32>
    %297 = vector.extract_strided_slice %295 {offsets = [0, 0], sizes = [2, 32], strides = [1, 1]} : vector<2x128xf32> to vector<2x32xf32>
    %298 = vector.extract_strided_slice %295 {offsets = [0, 32], sizes = [2, 32], strides = [1, 1]} : vector<2x128xf32> to vector<2x32xf32>
    %299 = vector.extract_strided_slice %296 {offsets = [0, 64], sizes = [2, 32], strides = [1, 1]} : vector<2x128xf32> to vector<2x32xf32>
    %300 = vector.extract_strided_slice %295 {offsets = [0, 96], sizes = [2, 32], strides = [1, 1]} : vector<2x128xf32> to vector<2x32xf32>
    %301 = arith.mulf %298, %265 : vector<2x32xf32>
    %302 = arith.mulf %297, %299 : vector<2x32xf32>
    %303 = arith.addf %301, %302 : vector<2x32xf32>
    %304 = math.tanh %303 : vector<2x32xf32>
    %305 = arith.mulf %300, %304 : vector<2x32xf32>
    %306 = tpu.concatenate %305, %285 in 1 : vector<2x32xf32>, vector<2x32xf32> -> vector<2x64xf32>
    %cst_65 = arith.constant dense<0.000000e+00> : vector<2x128xf32>
    %307 = tpu.matmul %306, %3, %cst_65 {dimension_numbers = #tpu.dot_dimension_numbers<[1], [0], [0], [1], [0, 0, 1, 1], [], []>} : vector<2x64xf32>, vector<64x128xf32>, vector<2x128xf32> -> vector<2x128xf32>
    %308 = arith.addf %307, %11 : vector<2x128xf32>
    %309 = arith.negf %308 : vector<2x128xf32>
    %310 = math.exp %309 : vector<2x128xf32>
    %cst_66 = arith.constant 1.000000e+00 : f32
    %311 = vector.broadcast %cst_66 : f32 to vector<2x128xf32>
    %312 = arith.addf %311, %310 : vector<2x128xf32>
    %313 = arith.divf %311, %312 : vector<2x128xf32>
    %314 = math.tanh %308 : vector<2x128xf32>
    %315 = vector.extract_strided_slice %313 {offsets = [0, 0], sizes = [2, 32], strides = [1, 1]} : vector<2x128xf32> to vector<2x32xf32>
    %316 = vector.extract_strided_slice %313 {offsets = [0, 32], sizes = [2, 32], strides = [1, 1]} : vector<2x128xf32> to vector<2x32xf32>
    %317 = vector.extract_strided_slice %314 {offsets = [0, 64], sizes = [2, 32], strides = [1, 1]} : vector<2x128xf32> to vector<2x32xf32>
    %318 = vector.extract_strided_slice %313 {offsets = [0, 96], sizes = [2, 32], strides = [1, 1]} : vector<2x128xf32> to vector<2x32xf32>
    %319 = arith.mulf %316, %283 : vector<2x32xf32>
    %320 = arith.mulf %315, %317 : vector<2x32xf32>
    %321 = arith.addf %319, %320 : vector<2x32xf32>
    %322 = math.tanh %321 : vector<2x32xf32>
    %323 = arith.mulf %318, %322 : vector<2x32xf32>
    %cst_67 = arith.constant dense<0.000000e+00> : vector<2x128xf32>
    %324 = tpu.matmul %323, %12, %cst_67 {dimension_numbers = #tpu.dot_dimension_numbers<[1], [0], [0], [1], [0, 0, 1, 1], [], []>} : vector<2x32xf32>, vector<32x128xf32>, vector<2x128xf32> -> vector<2x128xf32>
    %325 = arith.addf %324, %15 : vector<2x128xf32>
    %c0_68 = arith.constant 0 : index
    %c0_69 = arith.constant 0 : index
    %c0_70 = arith.constant 0 : index
    %326 = vector.load %arg6[%c0_68, %c0_69, %c0_70] : memref<10x2x128xf32, #tpu.memory_space<vmem>>, vector<1x2x128xf32>
    %327 = vector.shape_cast %326 : vector<1x2x128xf32> to vector<2x128xf32>
    %328 = vector.shape_cast %325 : vector<2x128xf32> to vector<1x2x128xf32>
    tpu.vector_store %arg6[%c0_68, %c0_69, %c0_70], %328 {strides = array<i32>} : memref<10x2x128xf32, #tpu.memory_space<vmem>>, vector<1x2x128xf32>,
    %329 = vector.extract_strided_slice %325 {offsets = [0, 0], sizes = [2, 32], strides = [1, 1]} : vector<2x128xf32> to vector<2x32xf32>
    %330 = tpu.concatenate %329, %305 in 1 : vector<2x32xf32>, vector<2x32xf32> -> vector<2x64xf32>
    %cst_71 = arith.constant dense<0.000000e+00> : vector<2x128xf32>
    %331 = tpu.matmul %330, %1, %cst_71 {dimension_numbers = #tpu.dot_dimension_numbers<[1], [0], [0], [1], [0, 0, 1, 1], [], []>} : vector<2x64xf32>, vector<64x128xf32>, vector<2x128xf32> -> vector<2x128xf32>
    %332 = arith.addf %331, %7 : vector<2x128xf32>
    %333 = arith.negf %332 : vector<2x128xf32>
    %334 = math.exp %333 : vector<2x128xf32>
    %cst_72 = arith.constant 1.000000e+00 : f32
    %335 = vector.broadcast %cst_72 : f32 to vector<2x128xf32>
    %336 = arith.addf %335, %334 : vector<2x128xf32>
    %337 = arith.divf %335, %336 : vector<2x128xf32>
    %338 = math.tanh %332 : vector<2x128xf32>
    %339 = vector.extract_strided_slice %337 {offsets = [0, 0], sizes = [2, 32], strides = [1, 1]} : vector<2x128xf32> to vector<2x32xf32>
    %340 = vector.extract_strided_slice %337 {offsets = [0, 32], sizes = [2, 32], strides = [1, 1]} : vector<2x128xf32> to vector<2x32xf32>
    %341 = vector.extract_strided_slice %338 {offsets = [0, 64], sizes = [2, 32], strides = [1, 1]} : vector<2x128xf32> to vector<2x32xf32>
    %342 = vector.extract_strided_slice %337 {offsets = [0, 96], sizes = [2, 32], strides = [1, 1]} : vector<2x128xf32> to vector<2x32xf32>
    %343 = arith.mulf %340, %303 : vector<2x32xf32>
    %344 = arith.mulf %339, %341 : vector<2x32xf32>
    %345 = arith.addf %343, %344 : vector<2x32xf32>
    %346 = math.tanh %345 : vector<2x32xf32>
    %347 = arith.mulf %342, %346 : vector<2x32xf32>
    %348 = tpu.concatenate %347, %323 in 1 : vector<2x32xf32>, vector<2x32xf32> -> vector<2x64xf32>
    %cst_73 = arith.constant dense<0.000000e+00> : vector<2x128xf32>
    %349 = tpu.matmul %348, %3, %cst_73 {dimension_numbers = #tpu.dot_dimension_numbers<[1], [0], [0], [1], [0, 0, 1, 1], [], []>} : vector<2x64xf32>, vector<64x128xf32>, vector<2x128xf32> -> vector<2x128xf32>
    %350 = arith.addf %349, %11 : vector<2x128xf32>
    %351 = arith.negf %350 : vector<2x128xf32>
    %352 = math.exp %351 : vector<2x128xf32>
    %cst_74 = arith.constant 1.000000e+00 : f32
    %353 = vector.broadcast %cst_74 : f32 to vector<2x128xf32>
    %354 = arith.addf %353, %352 : vector<2x128xf32>
    %355 = arith.divf %353, %354 : vector<2x128xf32>
    %356 = math.tanh %350 : vector<2x128xf32>
    %357 = vector.extract_strided_slice %355 {offsets = [0, 0], sizes = [2, 32], strides = [1, 1]} : vector<2x128xf32> to vector<2x32xf32>
    %358 = vector.extract_strided_slice %355 {offsets = [0, 32], sizes = [2, 32], strides = [1, 1]} : vector<2x128xf32> to vector<2x32xf32>
    %359 = vector.extract_strided_slice %356 {offsets = [0, 64], sizes = [2, 32], strides = [1, 1]} : vector<2x128xf32> to vector<2x32xf32>
    %360 = vector.extract_strided_slice %355 {offsets = [0, 96], sizes = [2, 32], strides = [1, 1]} : vector<2x128xf32> to vector<2x32xf32>
    %361 = arith.mulf %358, %321 : vector<2x32xf32>
    %362 = arith.mulf %357, %359 : vector<2x32xf32>
    %363 = arith.addf %361, %362 : vector<2x32xf32>
    %364 = math.tanh %363 : vector<2x32xf32>
    %365 = arith.mulf %360, %364 : vector<2x32xf32>
    %cst_75 = arith.constant dense<0.000000e+00> : vector<2x128xf32>
    %366 = tpu.matmul %365, %12, %cst_75 {dimension_numbers = #tpu.dot_dimension_numbers<[1], [0], [0], [1], [0, 0, 1, 1], [], []>} : vector<2x32xf32>, vector<32x128xf32>, vector<2x128xf32> -> vector<2x128xf32>
    %367 = arith.addf %366, %15 : vector<2x128xf32>
    %c1_76 = arith.constant 1 : index
    %c0_77 = arith.constant 0 : index
    %c0_78 = arith.constant 0 : index
    %368 = vector.load %arg6[%c1_76, %c0_77, %c0_78] : memref<10x2x128xf32, #tpu.memory_space<vmem>>, vector<1x2x128xf32>
    %369 = vector.shape_cast %368 : vector<1x2x128xf32> to vector<2x128xf32>
    %370 = vector.shape_cast %367 : vector<2x128xf32> to vector<1x2x128xf32>
    tpu.vector_store %arg6[%c1_76, %c0_77, %c0_78], %370 {strides = array<i32>} : memref<10x2x128xf32, #tpu.memory_space<vmem>>, vector<1x2x128xf32>,
    %371 = vector.extract_strided_slice %367 {offsets = [0, 0], sizes = [2, 32], strides = [1, 1]} : vector<2x128xf32> to vector<2x32xf32>
    %372 = tpu.concatenate %371, %347 in 1 : vector<2x32xf32>, vector<2x32xf32> -> vector<2x64xf32>
    %cst_79 = arith.constant dense<0.000000e+00> : vector<2x128xf32>
    %373 = tpu.matmul %372, %1, %cst_79 {dimension_numbers = #tpu.dot_dimension_numbers<[1], [0], [0], [1], [0, 0, 1, 1], [], []>} : vector<2x64xf32>, vector<64x128xf32>, vector<2x128xf32> -> vector<2x128xf32>
    %374 = arith.addf %373, %7 : vector<2x128xf32>
    %375 = arith.negf %374 : vector<2x128xf32>
    %376 = math.exp %375 : vector<2x128xf32>
    %cst_80 = arith.constant 1.000000e+00 : f32
    %377 = vector.broadcast %cst_80 : f32 to vector<2x128xf32>
    %378 = arith.addf %377, %376 : vector<2x128xf32>
    %379 = arith.divf %377, %378 : vector<2x128xf32>
    %380 = math.tanh %374 : vector<2x128xf32>
    %381 = vector.extract_strided_slice %379 {offsets = [0, 0], sizes = [2, 32], strides = [1, 1]} : vector<2x128xf32> to vector<2x32xf32>
    %382 = vector.extract_strided_slice %379 {offsets = [0, 32], sizes = [2, 32], strides = [1, 1]} : vector<2x128xf32> to vector<2x32xf32>
    %383 = vector.extract_strided_slice %380 {offsets = [0, 64], sizes = [2, 32], strides = [1, 1]} : vector<2x128xf32> to vector<2x32xf32>
    %384 = vector.extract_strided_slice %379 {offsets = [0, 96], sizes = [2, 32], strides = [1, 1]} : vector<2x128xf32> to vector<2x32xf32>
    %385 = arith.mulf %382, %345 : vector<2x32xf32>
    %386 = arith.mulf %381, %383 : vector<2x32xf32>
    %387 = arith.addf %385, %386 : vector<2x32xf32>
    %388 = math.tanh %387 : vector<2x32xf32>
    %389 = arith.mulf %384, %388 : vector<2x32xf32>
    %390 = tpu.concatenate %389, %365 in 1 : vector<2x32xf32>, vector<2x32xf32> -> vector<2x64xf32>
    %cst_81 = arith.constant dense<0.000000e+00> : vector<2x128xf32>
    %391 = tpu.matmul %390, %3, %cst_81 {dimension_numbers = #tpu.dot_dimension_numbers<[1], [0], [0], [1], [0, 0, 1, 1], [], []>} : vector<2x64xf32>, vector<64x128xf32>, vector<2x128xf32> -> vector<2x128xf32>
    %392 = arith.addf %391, %11 : vector<2x128xf32>
    %393 = arith.negf %392 : vector<2x128xf32>
    %394 = math.exp %393 : vector<2x128xf32>
    %cst_82 = arith.constant 1.000000e+00 : f32
    %395 = vector.broadcast %cst_82 : f32 to vector<2x128xf32>
    %396 = arith.addf %395, %394 : vector<2x128xf32>
    %397 = arith.divf %395, %396 : vector<2x128xf32>
    %398 = math.tanh %392 : vector<2x128xf32>
    %399 = vector.extract_strided_slice %397 {offsets = [0, 0], sizes = [2, 32], strides = [1, 1]} : vector<2x128xf32> to vector<2x32xf32>
    %400 = vector.extract_strided_slice %397 {offsets = [0, 32], sizes = [2, 32], strides = [1, 1]} : vector<2x128xf32> to vector<2x32xf32>
    %401 = vector.extract_strided_slice %398 {offsets = [0, 64], sizes = [2, 32], strides = [1, 1]} : vector<2x128xf32> to vector<2x32xf32>
    %402 = vector.extract_strided_slice %397 {offsets = [0, 96], sizes = [2, 32], strides = [1, 1]} : vector<2x128xf32> to vector<2x32xf32>
    %403 = arith.mulf %400, %363 : vector<2x32xf32>
    %404 = arith.mulf %399, %401 : vector<2x32xf32>
    %405 = arith.addf %403, %404 : vector<2x32xf32>
    %406 = math.tanh %405 : vector<2x32xf32>
    %407 = arith.mulf %402, %406 : vector<2x32xf32>
    %cst_83 = arith.constant dense<0.000000e+00> : vector<2x128xf32>
    %408 = tpu.matmul %407, %12, %cst_83 {dimension_numbers = #tpu.dot_dimension_numbers<[1], [0], [0], [1], [0, 0, 1, 1], [], []>} : vector<2x32xf32>, vector<32x128xf32>, vector<2x128xf32> -> vector<2x128xf32>
    %409 = arith.addf %408, %15 : vector<2x128xf32>
    %c2_84 = arith.constant 2 : index
    %c0_85 = arith.constant 0 : index
    %c0_86 = arith.constant 0 : index
    %410 = vector.load %arg6[%c2_84, %c0_85, %c0_86] : memref<10x2x128xf32, #tpu.memory_space<vmem>>, vector<1x2x128xf32>
    %411 = vector.shape_cast %410 : vector<1x2x128xf32> to vector<2x128xf32>
    %412 = vector.shape_cast %409 : vector<2x128xf32> to vector<1x2x128xf32>
    tpu.vector_store %arg6[%c2_84, %c0_85, %c0_86], %412 {strides = array<i32>} : memref<10x2x128xf32, #tpu.memory_space<vmem>>, vector<1x2x128xf32>,
    %413 = vector.extract_strided_slice %409 {offsets = [0, 0], sizes = [2, 32], strides = [1, 1]} : vector<2x128xf32> to vector<2x32xf32>
    %414 = tpu.concatenate %413, %389 in 1 : vector<2x32xf32>, vector<2x32xf32> -> vector<2x64xf32>
    %cst_87 = arith.constant dense<0.000000e+00> : vector<2x128xf32>
    %415 = tpu.matmul %414, %1, %cst_87 {dimension_numbers = #tpu.dot_dimension_numbers<[1], [0], [0], [1], [0, 0, 1, 1], [], []>} : vector<2x64xf32>, vector<64x128xf32>, vector<2x128xf32> -> vector<2x128xf32>
    %416 = arith.addf %415, %7 : vector<2x128xf32>
    %417 = arith.negf %416 : vector<2x128xf32>
    %418 = math.exp %417 : vector<2x128xf32>
    %cst_88 = arith.constant 1.000000e+00 : f32
    %419 = vector.broadcast %cst_88 : f32 to vector<2x128xf32>
    %420 = arith.addf %419, %418 : vector<2x128xf32>
    %421 = arith.divf %419, %420 : vector<2x128xf32>
    %422 = math.tanh %416 : vector<2x128xf32>
    %423 = vector.extract_strided_slice %421 {offsets = [0, 0], sizes = [2, 32], strides = [1, 1]} : vector<2x128xf32> to vector<2x32xf32>
    %424 = vector.extract_strided_slice %421 {offsets = [0, 32], sizes = [2, 32], strides = [1, 1]} : vector<2x128xf32> to vector<2x32xf32>
    %425 = vector.extract_strided_slice %422 {offsets = [0, 64], sizes = [2, 32], strides = [1, 1]} : vector<2x128xf32> to vector<2x32xf32>
    %426 = vector.extract_strided_slice %421 {offsets = [0, 96], sizes = [2, 32], strides = [1, 1]} : vector<2x128xf32> to vector<2x32xf32>
    %427 = arith.mulf %424, %387 : vector<2x32xf32>
    %428 = arith.mulf %423, %425 : vector<2x32xf32>
    %429 = arith.addf %427, %428 : vector<2x32xf32>
    %430 = math.tanh %429 : vector<2x32xf32>
    %431 = arith.mulf %426, %430 : vector<2x32xf32>
    %432 = tpu.concatenate %431, %407 in 1 : vector<2x32xf32>, vector<2x32xf32> -> vector<2x64xf32>
    %cst_89 = arith.constant dense<0.000000e+00> : vector<2x128xf32>
    %433 = tpu.matmul %432, %3, %cst_89 {dimension_numbers = #tpu.dot_dimension_numbers<[1], [0], [0], [1], [0, 0, 1, 1], [], []>} : vector<2x64xf32>, vector<64x128xf32>, vector<2x128xf32> -> vector<2x128xf32>
    %434 = arith.addf %433, %11 : vector<2x128xf32>
    %435 = arith.negf %434 : vector<2x128xf32>
    %436 = math.exp %435 : vector<2x128xf32>
    %cst_90 = arith.constant 1.000000e+00 : f32
    %437 = vector.broadcast %cst_90 : f32 to vector<2x128xf32>
    %438 = arith.addf %437, %436 : vector<2x128xf32>
    %439 = arith.divf %437, %438 : vector<2x128xf32>
    %440 = math.tanh %434 : vector<2x128xf32>
    %441 = vector.extract_strided_slice %439 {offsets = [0, 0], sizes = [2, 32], strides = [1, 1]} : vector<2x128xf32> to vector<2x32xf32>
    %442 = vector.extract_strided_slice %439 {offsets = [0, 32], sizes = [2, 32], strides = [1, 1]} : vector<2x128xf32> to vector<2x32xf32>
    %443 = vector.extract_strided_slice %440 {offsets = [0, 64], sizes = [2, 32], strides = [1, 1]} : vector<2x128xf32> to vector<2x32xf32>
    %444 = vector.extract_strided_slice %439 {offsets = [0, 96], sizes = [2, 32], strides = [1, 1]} : vector<2x128xf32> to vector<2x32xf32>
    %445 = arith.mulf %442, %405 : vector<2x32xf32>
    %446 = arith.mulf %441, %443 : vector<2x32xf32>
    %447 = arith.addf %445, %446 : vector<2x32xf32>
    %448 = math.tanh %447 : vector<2x32xf32>
    %449 = arith.mulf %444, %448 : vector<2x32xf32>
    %cst_91 = arith.constant dense<0.000000e+00> : vector<2x128xf32>
    %450 = tpu.matmul %449, %12, %cst_91 {dimension_numbers = #tpu.dot_dimension_numbers<[1], [0], [0], [1], [0, 0, 1, 1], [], []>} : vector<2x32xf32>, vector<32x128xf32>, vector<2x128xf32> -> vector<2x128xf32>
    %451 = arith.addf %450, %15 : vector<2x128xf32>
    %c3_92 = arith.constant 3 : index
    %c0_93 = arith.constant 0 : index
    %c0_94 = arith.constant 0 : index
    %452 = vector.load %arg6[%c3_92, %c0_93, %c0_94] : memref<10x2x128xf32, #tpu.memory_space<vmem>>, vector<1x2x128xf32>
    %453 = vector.shape_cast %452 : vector<1x2x128xf32> to vector<2x128xf32>
    %454 = vector.shape_cast %451 : vector<2x128xf32> to vector<1x2x128xf32>
    tpu.vector_store %arg6[%c3_92, %c0_93, %c0_94], %454 {strides = array<i32>} : memref<10x2x128xf32, #tpu.memory_space<vmem>>, vector<1x2x128xf32>,
    %455 = vector.extract_strided_slice %451 {offsets = [0, 0], sizes = [2, 32], strides = [1, 1]} : vector<2x128xf32> to vector<2x32xf32>
    %456 = tpu.concatenate %455, %431 in 1 : vector<2x32xf32>, vector<2x32xf32> -> vector<2x64xf32>
    %cst_95 = arith.constant dense<0.000000e+00> : vector<2x128xf32>
    %457 = tpu.matmul %456, %1, %cst_95 {dimension_numbers = #tpu.dot_dimension_numbers<[1], [0], [0], [1], [0, 0, 1, 1], [], []>} : vector<2x64xf32>, vector<64x128xf32>, vector<2x128xf32> -> vector<2x128xf32>
    %458 = arith.addf %457, %7 : vector<2x128xf32>
    %459 = arith.negf %458 : vector<2x128xf32>
    %460 = math.exp %459 : vector<2x128xf32>
    %cst_96 = arith.constant 1.000000e+00 : f32
    %461 = vector.broadcast %cst_96 : f32 to vector<2x128xf32>
    %462 = arith.addf %461, %460 : vector<2x128xf32>
    %463 = arith.divf %461, %462 : vector<2x128xf32>
    %464 = math.tanh %458 : vector<2x128xf32>
    %465 = vector.extract_strided_slice %463 {offsets = [0, 0], sizes = [2, 32], strides = [1, 1]} : vector<2x128xf32> to vector<2x32xf32>
    %466 = vector.extract_strided_slice %463 {offsets = [0, 32], sizes = [2, 32], strides = [1, 1]} : vector<2x128xf32> to vector<2x32xf32>
    %467 = vector.extract_strided_slice %464 {offsets = [0, 64], sizes = [2, 32], strides = [1, 1]} : vector<2x128xf32> to vector<2x32xf32>
    %468 = vector.extract_strided_slice %463 {offsets = [0, 96], sizes = [2, 32], strides = [1, 1]} : vector<2x128xf32> to vector<2x32xf32>
    %469 = arith.mulf %466, %429 : vector<2x32xf32>
    %470 = arith.mulf %465, %467 : vector<2x32xf32>
    %471 = arith.addf %469, %470 : vector<2x32xf32>
    %472 = math.tanh %471 : vector<2x32xf32>
    %473 = arith.mulf %468, %472 : vector<2x32xf32>
    %474 = tpu.concatenate %473, %449 in 1 : vector<2x32xf32>, vector<2x32xf32> -> vector<2x64xf32>
    %cst_97 = arith.constant dense<0.000000e+00> : vector<2x128xf32>
    %475 = tpu.matmul %474, %3, %cst_97 {dimension_numbers = #tpu.dot_dimension_numbers<[1], [0], [0], [1], [0, 0, 1, 1], [], []>} : vector<2x64xf32>, vector<64x128xf32>, vector<2x128xf32> -> vector<2x128xf32>
    %476 = arith.addf %475, %11 : vector<2x128xf32>
    %477 = arith.negf %476 : vector<2x128xf32>
    %478 = math.exp %477 : vector<2x128xf32>
    %cst_98 = arith.constant 1.000000e+00 : f32
    %479 = vector.broadcast %cst_98 : f32 to vector<2x128xf32>
    %480 = arith.addf %479, %478 : vector<2x128xf32>
    %481 = arith.divf %479, %480 : vector<2x128xf32>
    %482 = math.tanh %476 : vector<2x128xf32>
    %483 = vector.extract_strided_slice %481 {offsets = [0, 0], sizes = [2, 32], strides = [1, 1]} : vector<2x128xf32> to vector<2x32xf32>
    %484 = vector.extract_strided_slice %481 {offsets = [0, 32], sizes = [2, 32], strides = [1, 1]} : vector<2x128xf32> to vector<2x32xf32>
    %485 = vector.extract_strided_slice %482 {offsets = [0, 64], sizes = [2, 32], strides = [1, 1]} : vector<2x128xf32> to vector<2x32xf32>
    %486 = vector.extract_strided_slice %481 {offsets = [0, 96], sizes = [2, 32], strides = [1, 1]} : vector<2x128xf32> to vector<2x32xf32>
    %487 = arith.mulf %484, %447 : vector<2x32xf32>
    %488 = arith.mulf %483, %485 : vector<2x32xf32>
    %489 = arith.addf %487, %488 : vector<2x32xf32>
    %490 = math.tanh %489 : vector<2x32xf32>
    %491 = arith.mulf %486, %490 : vector<2x32xf32>
    %cst_99 = arith.constant dense<0.000000e+00> : vector<2x128xf32>
    %492 = tpu.matmul %491, %12, %cst_99 {dimension_numbers = #tpu.dot_dimension_numbers<[1], [0], [0], [1], [0, 0, 1, 1], [], []>} : vector<2x32xf32>, vector<32x128xf32>, vector<2x128xf32> -> vector<2x128xf32>
    %493 = arith.addf %492, %15 : vector<2x128xf32>
    %c4_100 = arith.constant 4 : index
    %c0_101 = arith.constant 0 : index
    %c0_102 = arith.constant 0 : index
    %494 = vector.load %arg6[%c4_100, %c0_101, %c0_102] : memref<10x2x128xf32, #tpu.memory_space<vmem>>, vector<1x2x128xf32>
    %495 = vector.shape_cast %494 : vector<1x2x128xf32> to vector<2x128xf32>
    %496 = vector.shape_cast %493 : vector<2x128xf32> to vector<1x2x128xf32>
    tpu.vector_store %arg6[%c4_100, %c0_101, %c0_102], %496 {strides = array<i32>} : memref<10x2x128xf32, #tpu.memory_space<vmem>>, vector<1x2x128xf32>,
    %497 = vector.extract_strided_slice %493 {offsets = [0, 0], sizes = [2, 32], strides = [1, 1]} : vector<2x128xf32> to vector<2x32xf32>
    %498 = tpu.concatenate %497, %473 in 1 : vector<2x32xf32>, vector<2x32xf32> -> vector<2x64xf32>
    %cst_103 = arith.constant dense<0.000000e+00> : vector<2x128xf32>
    %499 = tpu.matmul %498, %1, %cst_103 {dimension_numbers = #tpu.dot_dimension_numbers<[1], [0], [0], [1], [0, 0, 1, 1], [], []>} : vector<2x64xf32>, vector<64x128xf32>, vector<2x128xf32> -> vector<2x128xf32>
    %500 = arith.addf %499, %7 : vector<2x128xf32>
    %501 = arith.negf %500 : vector<2x128xf32>
    %502 = math.exp %501 : vector<2x128xf32>
    %cst_104 = arith.constant 1.000000e+00 : f32
    %503 = vector.broadcast %cst_104 : f32 to vector<2x128xf32>
    %504 = arith.addf %503, %502 : vector<2x128xf32>
    %505 = arith.divf %503, %504 : vector<2x128xf32>
    %506 = math.tanh %500 : vector<2x128xf32>
    %507 = vector.extract_strided_slice %505 {offsets = [0, 0], sizes = [2, 32], strides = [1, 1]} : vector<2x128xf32> to vector<2x32xf32>
    %508 = vector.extract_strided_slice %505 {offsets = [0, 32], sizes = [2, 32], strides = [1, 1]} : vector<2x128xf32> to vector<2x32xf32>
    %509 = vector.extract_strided_slice %506 {offsets = [0, 64], sizes = [2, 32], strides = [1, 1]} : vector<2x128xf32> to vector<2x32xf32>
    %510 = vector.extract_strided_slice %505 {offsets = [0, 96], sizes = [2, 32], strides = [1, 1]} : vector<2x128xf32> to vector<2x32xf32>
    %511 = arith.mulf %508, %471 : vector<2x32xf32>
    %512 = arith.mulf %507, %509 : vector<2x32xf32>
    %513 = arith.addf %511, %512 : vector<2x32xf32>
    %514 = math.tanh %513 : vector<2x32xf32>
    %515 = arith.mulf %510, %514 : vector<2x32xf32>
    %516 = tpu.concatenate %515, %491 in 1 : vector<2x32xf32>, vector<2x32xf32> -> vector<2x64xf32>
    %cst_105 = arith.constant dense<0.000000e+00> : vector<2x128xf32>
    %517 = tpu.matmul %516, %3, %cst_105 {dimension_numbers = #tpu.dot_dimension_numbers<[1], [0], [0], [1], [0, 0, 1, 1], [], []>} : vector<2x64xf32>, vector<64x128xf32>, vector<2x128xf32> -> vector<2x128xf32>
    %518 = arith.addf %517, %11 : vector<2x128xf32>
    %519 = arith.negf %518 : vector<2x128xf32>
    %520 = math.exp %519 : vector<2x128xf32>
    %cst_106 = arith.constant 1.000000e+00 : f32
    %521 = vector.broadcast %cst_106 : f32 to vector<2x128xf32>
    %522 = arith.addf %521, %520 : vector<2x128xf32>
    %523 = arith.divf %521, %522 : vector<2x128xf32>
    %524 = math.tanh %518 : vector<2x128xf32>
    %525 = vector.extract_strided_slice %523 {offsets = [0, 0], sizes = [2, 32], strides = [1, 1]} : vector<2x128xf32> to vector<2x32xf32>
    %526 = vector.extract_strided_slice %523 {offsets = [0, 32], sizes = [2, 32], strides = [1, 1]} : vector<2x128xf32> to vector<2x32xf32>
    %527 = vector.extract_strided_slice %524 {offsets = [0, 64], sizes = [2, 32], strides = [1, 1]} : vector<2x128xf32> to vector<2x32xf32>
    %528 = vector.extract_strided_slice %523 {offsets = [0, 96], sizes = [2, 32], strides = [1, 1]} : vector<2x128xf32> to vector<2x32xf32>
    %529 = arith.mulf %526, %489 : vector<2x32xf32>
    %530 = arith.mulf %525, %527 : vector<2x32xf32>
    %531 = arith.addf %529, %530 : vector<2x32xf32>
    %532 = math.tanh %531 : vector<2x32xf32>
    %533 = arith.mulf %528, %532 : vector<2x32xf32>
    %cst_107 = arith.constant dense<0.000000e+00> : vector<2x128xf32>
    %534 = tpu.matmul %533, %12, %cst_107 {dimension_numbers = #tpu.dot_dimension_numbers<[1], [0], [0], [1], [0, 0, 1, 1], [], []>} : vector<2x32xf32>, vector<32x128xf32>, vector<2x128xf32> -> vector<2x128xf32>
    %535 = arith.addf %534, %15 : vector<2x128xf32>
    %c5_108 = arith.constant 5 : index
    %c0_109 = arith.constant 0 : index
    %c0_110 = arith.constant 0 : index
    %536 = vector.load %arg6[%c5_108, %c0_109, %c0_110] : memref<10x2x128xf32, #tpu.memory_space<vmem>>, vector<1x2x128xf32>
    %537 = vector.shape_cast %536 : vector<1x2x128xf32> to vector<2x128xf32>
    %538 = vector.shape_cast %535 : vector<2x128xf32> to vector<1x2x128xf32>
    tpu.vector_store %arg6[%c5_108, %c0_109, %c0_110], %538 {strides = array<i32>} : memref<10x2x128xf32, #tpu.memory_space<vmem>>, vector<1x2x128xf32>,
    %539 = vector.extract_strided_slice %535 {offsets = [0, 0], sizes = [2, 32], strides = [1, 1]} : vector<2x128xf32> to vector<2x32xf32>
    %540 = tpu.concatenate %539, %515 in 1 : vector<2x32xf32>, vector<2x32xf32> -> vector<2x64xf32>
    %cst_111 = arith.constant dense<0.000000e+00> : vector<2x128xf32>
    %541 = tpu.matmul %540, %1, %cst_111 {dimension_numbers = #tpu.dot_dimension_numbers<[1], [0], [0], [1], [0, 0, 1, 1], [], []>} : vector<2x64xf32>, vector<64x128xf32>, vector<2x128xf32> -> vector<2x128xf32>
    %542 = arith.addf %541, %7 : vector<2x128xf32>
    %543 = arith.negf %542 : vector<2x128xf32>
    %544 = math.exp %543 : vector<2x128xf32>
    %cst_112 = arith.constant 1.000000e+00 : f32
    %545 = vector.broadcast %cst_112 : f32 to vector<2x128xf32>
    %546 = arith.addf %545, %544 : vector<2x128xf32>
    %547 = arith.divf %545, %546 : vector<2x128xf32>
    %548 = math.tanh %542 : vector<2x128xf32>
    %549 = vector.extract_strided_slice %547 {offsets = [0, 0], sizes = [2, 32], strides = [1, 1]} : vector<2x128xf32> to vector<2x32xf32>
    %550 = vector.extract_strided_slice %547 {offsets = [0, 32], sizes = [2, 32], strides = [1, 1]} : vector<2x128xf32> to vector<2x32xf32>
    %551 = vector.extract_strided_slice %548 {offsets = [0, 64], sizes = [2, 32], strides = [1, 1]} : vector<2x128xf32> to vector<2x32xf32>
    %552 = vector.extract_strided_slice %547 {offsets = [0, 96], sizes = [2, 32], strides = [1, 1]} : vector<2x128xf32> to vector<2x32xf32>
    %553 = arith.mulf %550, %513 : vector<2x32xf32>
    %554 = arith.mulf %549, %551 : vector<2x32xf32>
    %555 = arith.addf %553, %554 : vector<2x32xf32>
    %556 = math.tanh %555 : vector<2x32xf32>
    %557 = arith.mulf %552, %556 : vector<2x32xf32>
    %558 = tpu.concatenate %557, %533 in 1 : vector<2x32xf32>, vector<2x32xf32> -> vector<2x64xf32>
    %cst_113 = arith.constant dense<0.000000e+00> : vector<2x128xf32>
    %559 = tpu.matmul %558, %3, %cst_113 {dimension_numbers = #tpu.dot_dimension_numbers<[1], [0], [0], [1], [0, 0, 1, 1], [], []>} : vector<2x64xf32>, vector<64x128xf32>, vector<2x128xf32> -> vector<2x128xf32>
    %560 = arith.addf %559, %11 : vector<2x128xf32>
    %561 = arith.negf %560 : vector<2x128xf32>
    %562 = math.exp %561 : vector<2x128xf32>
    %cst_114 = arith.constant 1.000000e+00 : f32
    %563 = vector.broadcast %cst_114 : f32 to vector<2x128xf32>
    %564 = arith.addf %563, %562 : vector<2x128xf32>
    %565 = arith.divf %563, %564 : vector<2x128xf32>
    %566 = math.tanh %560 : vector<2x128xf32>
    %567 = vector.extract_strided_slice %565 {offsets = [0, 0], sizes = [2, 32], strides = [1, 1]} : vector<2x128xf32> to vector<2x32xf32>
    %568 = vector.extract_strided_slice %565 {offsets = [0, 32], sizes = [2, 32], strides = [1, 1]} : vector<2x128xf32> to vector<2x32xf32>
    %569 = vector.extract_strided_slice %566 {offsets = [0, 64], sizes = [2, 32], strides = [1, 1]} : vector<2x128xf32> to vector<2x32xf32>
    %570 = vector.extract_strided_slice %565 {offsets = [0, 96], sizes = [2, 32], strides = [1, 1]} : vector<2x128xf32> to vector<2x32xf32>
    %571 = arith.mulf %568, %531 : vector<2x32xf32>
    %572 = arith.mulf %567, %569 : vector<2x32xf32>
    %573 = arith.addf %571, %572 : vector<2x32xf32>
    %574 = math.tanh %573 : vector<2x32xf32>
    %575 = arith.mulf %570, %574 : vector<2x32xf32>
    %cst_115 = arith.constant dense<0.000000e+00> : vector<2x128xf32>
    %576 = tpu.matmul %575, %12, %cst_115 {dimension_numbers = #tpu.dot_dimension_numbers<[1], [0], [0], [1], [0, 0, 1, 1], [], []>} : vector<2x32xf32>, vector<32x128xf32>, vector<2x128xf32> -> vector<2x128xf32>
    %577 = arith.addf %576, %15 : vector<2x128xf32>
    %c6_116 = arith.constant 6 : index
    %c0_117 = arith.constant 0 : index
    %c0_118 = arith.constant 0 : index
    %578 = vector.load %arg6[%c6_116, %c0_117, %c0_118] : memref<10x2x128xf32, #tpu.memory_space<vmem>>, vector<1x2x128xf32>
    %579 = vector.shape_cast %578 : vector<1x2x128xf32> to vector<2x128xf32>
    %580 = vector.shape_cast %577 : vector<2x128xf32> to vector<1x2x128xf32>
    tpu.vector_store %arg6[%c6_116, %c0_117, %c0_118], %580 {strides = array<i32>} : memref<10x2x128xf32, #tpu.memory_space<vmem>>, vector<1x2x128xf32>,
    %581 = vector.extract_strided_slice %577 {offsets = [0, 0], sizes = [2, 32], strides = [1, 1]} : vector<2x128xf32> to vector<2x32xf32>
    %582 = tpu.concatenate %581, %557 in 1 : vector<2x32xf32>, vector<2x32xf32> -> vector<2x64xf32>
    %cst_119 = arith.constant dense<0.000000e+00> : vector<2x128xf32>
    %583 = tpu.matmul %582, %1, %cst_119 {dimension_numbers = #tpu.dot_dimension_numbers<[1], [0], [0], [1], [0, 0, 1, 1], [], []>} : vector<2x64xf32>, vector<64x128xf32>, vector<2x128xf32> -> vector<2x128xf32>
    %584 = arith.addf %583, %7 : vector<2x128xf32>
    %585 = arith.negf %584 : vector<2x128xf32>
    %586 = math.exp %585 : vector<2x128xf32>
    %cst_120 = arith.constant 1.000000e+00 : f32
    %587 = vector.broadcast %cst_120 : f32 to vector<2x128xf32>
    %588 = arith.addf %587, %586 : vector<2x128xf32>
    %589 = arith.divf %587, %588 : vector<2x128xf32>
    %590 = math.tanh %584 : vector<2x128xf32>
    %591 = vector.extract_strided_slice %589 {offsets = [0, 0], sizes = [2, 32], strides = [1, 1]} : vector<2x128xf32> to vector<2x32xf32>
    %592 = vector.extract_strided_slice %589 {offsets = [0, 32], sizes = [2, 32], strides = [1, 1]} : vector<2x128xf32> to vector<2x32xf32>
    %593 = vector.extract_strided_slice %590 {offsets = [0, 64], sizes = [2, 32], strides = [1, 1]} : vector<2x128xf32> to vector<2x32xf32>
    %594 = vector.extract_strided_slice %589 {offsets = [0, 96], sizes = [2, 32], strides = [1, 1]} : vector<2x128xf32> to vector<2x32xf32>
    %595 = arith.mulf %592, %555 : vector<2x32xf32>
    %596 = arith.mulf %591, %593 : vector<2x32xf32>
    %597 = arith.addf %595, %596 : vector<2x32xf32>
    %598 = math.tanh %597 : vector<2x32xf32>
    %599 = arith.mulf %594, %598 : vector<2x32xf32>
    %600 = tpu.concatenate %599, %575 in 1 : vector<2x32xf32>, vector<2x32xf32> -> vector<2x64xf32>
    %cst_121 = arith.constant dense<0.000000e+00> : vector<2x128xf32>
    %601 = tpu.matmul %600, %3, %cst_121 {dimension_numbers = #tpu.dot_dimension_numbers<[1], [0], [0], [1], [0, 0, 1, 1], [], []>} : vector<2x64xf32>, vector<64x128xf32>, vector<2x128xf32> -> vector<2x128xf32>
    %602 = arith.addf %601, %11 : vector<2x128xf32>
    %603 = arith.negf %602 : vector<2x128xf32>
    %604 = math.exp %603 : vector<2x128xf32>
    %cst_122 = arith.constant 1.000000e+00 : f32
    %605 = vector.broadcast %cst_122 : f32 to vector<2x128xf32>
    %606 = arith.addf %605, %604 : vector<2x128xf32>
    %607 = arith.divf %605, %606 : vector<2x128xf32>
    %608 = math.tanh %602 : vector<2x128xf32>
    %609 = vector.extract_strided_slice %607 {offsets = [0, 0], sizes = [2, 32], strides = [1, 1]} : vector<2x128xf32> to vector<2x32xf32>
    %610 = vector.extract_strided_slice %607 {offsets = [0, 32], sizes = [2, 32], strides = [1, 1]} : vector<2x128xf32> to vector<2x32xf32>
    %611 = vector.extract_strided_slice %608 {offsets = [0, 64], sizes = [2, 32], strides = [1, 1]} : vector<2x128xf32> to vector<2x32xf32>
    %612 = vector.extract_strided_slice %607 {offsets = [0, 96], sizes = [2, 32], strides = [1, 1]} : vector<2x128xf32> to vector<2x32xf32>
    %613 = arith.mulf %610, %573 : vector<2x32xf32>
    %614 = arith.mulf %609, %611 : vector<2x32xf32>
    %615 = arith.addf %613, %614 : vector<2x32xf32>
    %616 = math.tanh %615 : vector<2x32xf32>
    %617 = arith.mulf %612, %616 : vector<2x32xf32>
    %cst_123 = arith.constant dense<0.000000e+00> : vector<2x128xf32>
    %618 = tpu.matmul %617, %12, %cst_123 {dimension_numbers = #tpu.dot_dimension_numbers<[1], [0], [0], [1], [0, 0, 1, 1], [], []>} : vector<2x32xf32>, vector<32x128xf32>, vector<2x128xf32> -> vector<2x128xf32>
    %619 = arith.addf %618, %15 : vector<2x128xf32>
    %c7_124 = arith.constant 7 : index
    %c0_125 = arith.constant 0 : index
    %c0_126 = arith.constant 0 : index
    %620 = vector.load %arg6[%c7_124, %c0_125, %c0_126] : memref<10x2x128xf32, #tpu.memory_space<vmem>>, vector<1x2x128xf32>
    %621 = vector.shape_cast %620 : vector<1x2x128xf32> to vector<2x128xf32>
    %622 = vector.shape_cast %619 : vector<2x128xf32> to vector<1x2x128xf32>
    tpu.vector_store %arg6[%c7_124, %c0_125, %c0_126], %622 {strides = array<i32>} : memref<10x2x128xf32, #tpu.memory_space<vmem>>, vector<1x2x128xf32>,
    %623 = vector.extract_strided_slice %619 {offsets = [0, 0], sizes = [2, 32], strides = [1, 1]} : vector<2x128xf32> to vector<2x32xf32>
    %624 = tpu.concatenate %623, %599 in 1 : vector<2x32xf32>, vector<2x32xf32> -> vector<2x64xf32>
    %cst_127 = arith.constant dense<0.000000e+00> : vector<2x128xf32>
    %625 = tpu.matmul %624, %1, %cst_127 {dimension_numbers = #tpu.dot_dimension_numbers<[1], [0], [0], [1], [0, 0, 1, 1], [], []>} : vector<2x64xf32>, vector<64x128xf32>, vector<2x128xf32> -> vector<2x128xf32>
    %626 = arith.addf %625, %7 : vector<2x128xf32>
    %627 = arith.negf %626 : vector<2x128xf32>
    %628 = math.exp %627 : vector<2x128xf32>
    %cst_128 = arith.constant 1.000000e+00 : f32
    %629 = vector.broadcast %cst_128 : f32 to vector<2x128xf32>
    %630 = arith.addf %629, %628 : vector<2x128xf32>
    %631 = arith.divf %629, %630 : vector<2x128xf32>
    %632 = math.tanh %626 : vector<2x128xf32>
    %633 = vector.extract_strided_slice %631 {offsets = [0, 0], sizes = [2, 32], strides = [1, 1]} : vector<2x128xf32> to vector<2x32xf32>
    %634 = vector.extract_strided_slice %631 {offsets = [0, 32], sizes = [2, 32], strides = [1, 1]} : vector<2x128xf32> to vector<2x32xf32>
    %635 = vector.extract_strided_slice %632 {offsets = [0, 64], sizes = [2, 32], strides = [1, 1]} : vector<2x128xf32> to vector<2x32xf32>
    %636 = vector.extract_strided_slice %631 {offsets = [0, 96], sizes = [2, 32], strides = [1, 1]} : vector<2x128xf32> to vector<2x32xf32>
    %637 = arith.mulf %634, %597 : vector<2x32xf32>
    %638 = arith.mulf %633, %635 : vector<2x32xf32>
    %639 = arith.addf %637, %638 : vector<2x32xf32>
    %640 = math.tanh %639 : vector<2x32xf32>
    %641 = arith.mulf %636, %640 : vector<2x32xf32>
    %642 = tpu.concatenate %641, %617 in 1 : vector<2x32xf32>, vector<2x32xf32> -> vector<2x64xf32>
    %cst_129 = arith.constant dense<0.000000e+00> : vector<2x128xf32>
    %643 = tpu.matmul %642, %3, %cst_129 {dimension_numbers = #tpu.dot_dimension_numbers<[1], [0], [0], [1], [0, 0, 1, 1], [], []>} : vector<2x64xf32>, vector<64x128xf32>, vector<2x128xf32> -> vector<2x128xf32>
    %644 = arith.addf %643, %11 : vector<2x128xf32>
    %645 = arith.negf %644 : vector<2x128xf32>
    %646 = math.exp %645 : vector<2x128xf32>
    %cst_130 = arith.constant 1.000000e+00 : f32
    %647 = vector.broadcast %cst_130 : f32 to vector<2x128xf32>
    %648 = arith.addf %647, %646 : vector<2x128xf32>
    %649 = arith.divf %647, %648 : vector<2x128xf32>
    %650 = math.tanh %644 : vector<2x128xf32>
    %651 = vector.extract_strided_slice %649 {offsets = [0, 0], sizes = [2, 32], strides = [1, 1]} : vector<2x128xf32> to vector<2x32xf32>
    %652 = vector.extract_strided_slice %649 {offsets = [0, 32], sizes = [2, 32], strides = [1, 1]} : vector<2x128xf32> to vector<2x32xf32>
    %653 = vector.extract_strided_slice %650 {offsets = [0, 64], sizes = [2, 32], strides = [1, 1]} : vector<2x128xf32> to vector<2x32xf32>
    %654 = vector.extract_strided_slice %649 {offsets = [0, 96], sizes = [2, 32], strides = [1, 1]} : vector<2x128xf32> to vector<2x32xf32>
    %655 = arith.mulf %652, %615 : vector<2x32xf32>
    %656 = arith.mulf %651, %653 : vector<2x32xf32>
    %657 = arith.addf %655, %656 : vector<2x32xf32>
    %658 = math.tanh %657 : vector<2x32xf32>
    %659 = arith.mulf %654, %658 : vector<2x32xf32>
    %cst_131 = arith.constant dense<0.000000e+00> : vector<2x128xf32>
    %660 = tpu.matmul %659, %12, %cst_131 {dimension_numbers = #tpu.dot_dimension_numbers<[1], [0], [0], [1], [0, 0, 1, 1], [], []>} : vector<2x32xf32>, vector<32x128xf32>, vector<2x128xf32> -> vector<2x128xf32>
    %661 = arith.addf %660, %15 : vector<2x128xf32>
    %c8 = arith.constant 8 : index
    %c0_132 = arith.constant 0 : index
    %c0_133 = arith.constant 0 : index
    %662 = vector.load %arg6[%c8, %c0_132, %c0_133] : memref<10x2x128xf32, #tpu.memory_space<vmem>>, vector<1x2x128xf32>
    %663 = vector.shape_cast %662 : vector<1x2x128xf32> to vector<2x128xf32>
    %664 = vector.shape_cast %661 : vector<2x128xf32> to vector<1x2x128xf32>
    tpu.vector_store %arg6[%c8, %c0_132, %c0_133], %664 {strides = array<i32>} : memref<10x2x128xf32, #tpu.memory_space<vmem>>, vector<1x2x128xf32>,
    %665 = vector.extract_strided_slice %661 {offsets = [0, 0], sizes = [2, 32], strides = [1, 1]} : vector<2x128xf32> to vector<2x32xf32>
    %666 = tpu.concatenate %665, %641 in 1 : vector<2x32xf32>, vector<2x32xf32> -> vector<2x64xf32>
    %cst_134 = arith.constant dense<0.000000e+00> : vector<2x128xf32>
    %667 = tpu.matmul %666, %1, %cst_134 {dimension_numbers = #tpu.dot_dimension_numbers<[1], [0], [0], [1], [0, 0, 1, 1], [], []>} : vector<2x64xf32>, vector<64x128xf32>, vector<2x128xf32> -> vector<2x128xf32>
    %668 = arith.addf %667, %7 : vector<2x128xf32>
    %669 = arith.negf %668 : vector<2x128xf32>
    %670 = math.exp %669 : vector<2x128xf32>
    %cst_135 = arith.constant 1.000000e+00 : f32
    %671 = vector.broadcast %cst_135 : f32 to vector<2x128xf32>
    %672 = arith.addf %671, %670 : vector<2x128xf32>
    %673 = arith.divf %671, %672 : vector<2x128xf32>
    %674 = math.tanh %668 : vector<2x128xf32>
    %675 = vector.extract_strided_slice %673 {offsets = [0, 0], sizes = [2, 32], strides = [1, 1]} : vector<2x128xf32> to vector<2x32xf32>
    %676 = vector.extract_strided_slice %673 {offsets = [0, 32], sizes = [2, 32], strides = [1, 1]} : vector<2x128xf32> to vector<2x32xf32>
    %677 = vector.extract_strided_slice %674 {offsets = [0, 64], sizes = [2, 32], strides = [1, 1]} : vector<2x128xf32> to vector<2x32xf32>
    %678 = vector.extract_strided_slice %673 {offsets = [0, 96], sizes = [2, 32], strides = [1, 1]} : vector<2x128xf32> to vector<2x32xf32>
    %679 = arith.mulf %676, %639 : vector<2x32xf32>
    %680 = arith.mulf %675, %677 : vector<2x32xf32>
    %681 = arith.addf %679, %680 : vector<2x32xf32>
    %682 = math.tanh %681 : vector<2x32xf32>
    %683 = arith.mulf %678, %682 : vector<2x32xf32>
    %684 = tpu.concatenate %683, %659 in 1 : vector<2x32xf32>, vector<2x32xf32> -> vector<2x64xf32>
    %cst_136 = arith.constant dense<0.000000e+00> : vector<2x128xf32>
    %685 = tpu.matmul %684, %3, %cst_136 {dimension_numbers = #tpu.dot_dimension_numbers<[1], [0], [0], [1], [0, 0, 1, 1], [], []>} : vector<2x64xf32>, vector<64x128xf32>, vector<2x128xf32> -> vector<2x128xf32>
    %686 = arith.addf %685, %11 : vector<2x128xf32>
    %687 = arith.negf %686 : vector<2x128xf32>
    %688 = math.exp %687 : vector<2x128xf32>
    %cst_137 = arith.constant 1.000000e+00 : f32
    %689 = vector.broadcast %cst_137 : f32 to vector<2x128xf32>
    %690 = arith.addf %689, %688 : vector<2x128xf32>
    %691 = arith.divf %689, %690 : vector<2x128xf32>
    %692 = math.tanh %686 : vector<2x128xf32>
    %693 = vector.extract_strided_slice %691 {offsets = [0, 0], sizes = [2, 32], strides = [1, 1]} : vector<2x128xf32> to vector<2x32xf32>
    %694 = vector.extract_strided_slice %691 {offsets = [0, 32], sizes = [2, 32], strides = [1, 1]} : vector<2x128xf32> to vector<2x32xf32>
    %695 = vector.extract_strided_slice %692 {offsets = [0, 64], sizes = [2, 32], strides = [1, 1]} : vector<2x128xf32> to vector<2x32xf32>
    %696 = vector.extract_strided_slice %691 {offsets = [0, 96], sizes = [2, 32], strides = [1, 1]} : vector<2x128xf32> to vector<2x32xf32>
    %697 = arith.mulf %694, %657 : vector<2x32xf32>
    %698 = arith.mulf %693, %695 : vector<2x32xf32>
    %699 = arith.addf %697, %698 : vector<2x32xf32>
    %700 = math.tanh %699 : vector<2x32xf32>
    %701 = arith.mulf %696, %700 : vector<2x32xf32>
    %cst_138 = arith.constant dense<0.000000e+00> : vector<2x128xf32>
    %702 = tpu.matmul %701, %12, %cst_138 {dimension_numbers = #tpu.dot_dimension_numbers<[1], [0], [0], [1], [0, 0, 1, 1], [], []>} : vector<2x32xf32>, vector<32x128xf32>, vector<2x128xf32> -> vector<2x128xf32>
    %703 = arith.addf %702, %15 : vector<2x128xf32>
    %c9 = arith.constant 9 : index
    %c0_139 = arith.constant 0 : index
    %c0_140 = arith.constant 0 : index
    %704 = vector.load %arg6[%c9, %c0_139, %c0_140] : memref<10x2x128xf32, #tpu.memory_space<vmem>>, vector<1x2x128xf32>
    %705 = vector.shape_cast %704 : vector<1x2x128xf32> to vector<2x128xf32>
    %706 = vector.shape_cast %703 : vector<2x128xf32> to vector<1x2x128xf32>
    tpu.vector_store %arg6[%c9, %c0_139, %c0_140], %706 {strides = array<i32>} : memref<10x2x128xf32, #tpu.memory_space<vmem>>, vector<1x2x128xf32>,
    return
  }
  func.func @transform_0(%arg0: i32) -> (i32, i32, i32) {
    %c0_i32 = arith.constant 0 : i32
    %c0_i32_0 = arith.constant 0 : i32
    %c0_i32_1 = arith.constant 0 : i32
    %c0_i32_2 = arith.constant 0 : i32
    return %c0_i32, %c0_i32_0, %c0_i32_1 : i32, i32, i32
  }
  func.func @transform_1(%arg0: i32) -> (i32, i32, i32) {
    %c0_i32 = arith.constant 0 : i32
    %c0_i32_0 = arith.constant 0 : i32
    %c0_i32_1 = arith.constant 0 : i32
    %c0_i32_2 = arith.constant 0 : i32
    return %c0_i32, %c0_i32_0, %c0_i32_1 : i32, i32, i32
  }
  func.func @transform_2(%arg0: i32) -> (i32, i32, i32) {
    %c0_i32 = arith.constant 0 : i32
    %c0_i32_0 = arith.constant 0 : i32
    %c0_i32_1 = arith.constant 0 : i32
    %c0_i32_2 = arith.constant 0 : i32
    return %c0_i32, %c0_i32_0, %c0_i32_1 : i32, i32, i32
  }
  func.func @transform_3(%arg0: i32) -> (i32, i32) {
    %c0_i32 = arith.constant 0 : i32
    %c0_i32_0 = arith.constant 0 : i32
    %c0_i32_1 = arith.constant 0 : i32
    return %c0_i32, %c0_i32_0 : i32, i32
  }
  func.func @transform_4(%arg0: i32) -> (i32, i32) {
    %c0_i32 = arith.constant 0 : i32
    %c0_i32_0 = arith.constant 0 : i32
    %c0_i32_1 = arith.constant 0 : i32
    return %c0_i32, %c0_i32_0 : i32, i32
  }
  func.func @transform_5(%arg0: i32) -> (i32, i32, i32) {
    %c0_i32 = arith.constant 0 : i32
    %c0_i32_0 = arith.constant 0 : i32
    %c0_i32_1 = arith.constant 0 : i32
    %c0_i32_2 = arith.constant 0 : i32
    return %c0_i32, %c0_i32_0, %c0_i32_1 : i32, i32, i32
  }
}

</mosaic_0001>

<llo_original>
// kernel: tpu_custom_call.1
$region0: #{tpu_custom_call.1}
  #allocation0 [shape = 'u32[]', space=smem, size = 0x4, offset = 0x4, fixed_abs, tag = 'smem constant byte address 0x4 - core index']
  #allocation1 [shape = 'u32[144,128]{1,0:T(1,128)}', space=vmem, size = 0x12000, scoped, tag = 'internal scratch']
  %s0 = inlined_call_operand.hbm [shape: f32[8,2,32], index: 0, kind: input, shape index: {}]
  %s1 = inlined_call_operand.hbm [shape: f32[2,64,128], index: 1, kind: input, shape index: {}]
  %s2 = inlined_call_operand.vmem [shape: f32[2,1,128], index: 2, kind: input, shape index: {}]
  %s3 = inlined_call_operand.hbm [shape: f32[32,128], index: 3, kind: input, shape index: {}]
  %s4 = inlined_call_operand.vmem [shape: f32[1,128], index: 4, kind: input, shape index: {}]
  %s5 = inlined_call_operand.hbm [shape: f32[10,2,128], index: 5, kind: output, shape index: {}]
  %s6 = sld [smem:[#allocation0]]
  $region42: #{tpu_custom_call.1} parent=0
    _
  %s8 = ssub.s32 1, %s6
  %s9 = scalar_select 0, %s8, %s6
  $region1: #{tpu_custom_call.1} parent=0
    #allocation2 [shape = 'u8[8192]{0}', space=vmem, size = 0x2000, scoped, tag = 'input window, operand 0, single buffered']
    #allocation3 [shape = 's32[1]{0}', space=sflag, size = 0x4, scoped, tag = 'scoped memory for tpu_custom_call.1']
    #allocation4 [shape = 's32[1]{0}', space=sflag, size = 0x4, scoped, tag = 'scoped memory for tpu_custom_call.1']
    #allocation5 [shape = 'u8[65536]{0}', space=vmem, size = 0x10000, scoped, tag = 'input window, operand 1, single buffered']
    #allocation6 [shape = 's32[1]{0}', space=sflag, size = 0x4, scoped, tag = 'scoped memory for tpu_custom_call.1']
    #allocation7 [shape = 'u8[16384]{0}', space=vmem, size = 0x4000, scoped, tag = 'input window, operand 3, single buffered']
    #allocation8 [shape = 'u8[10240]{0}', space=vmem, size = 0x2800, scoped, tag = 'output window, operand 0, single buffered']
    %10 = vsyncpa [#allocation3], 0
    %11 = vsyncpa [#allocation6], 0
    %12 = vsyncpa [#allocation4], 0
    // Predicated region
    $region2: #{tpu_custom_call.1} parent=1 // pred_check
      _
    $region3: #{tpu_custom_call.1} parent=1 // pred_check_branch
      %14 = sbr.rel (0) target = $region5
    $region4: #{tpu_custom_call.1} parent=1 // pred_region
      %s16 = ssub.s32 256, 256
      %17 = vsyncadd [#allocation3], %s16
      %s18 = sshll.u32 [#allocation2], 4
      %s19 = int_to_ptr.vmem [resolvable:$true] %s18
      %24 = dma.hbm_to_vmem [thread:$0]  %s0, 256, %s19, [#allocation3], 32, 32, 2
    $region5: #{tpu_custom_call.1} parent=1 // pred_fallthru
      _
    // Predicated region
    $region6: #{tpu_custom_call.1} parent=1 // pred_check
      _
    $region7: #{tpu_custom_call.1} parent=1 // pred_check_branch
      %26 = sbr.rel (0) target = $region9
    $region8: #{tpu_custom_call.1} parent=1 // pred_region
      %s28 = ssub.s32 2048, 2048
      %29 = vsyncadd [#allocation6], %s28
      %s30 = sshll.u32 [#allocation5], 4
      %s31 = int_to_ptr.vmem [resolvable:$true] %s30
      %36 = dma.hbm_to_vmem [thread:$0]  %s1, 2048, %s31, [#allocation6], 128, 128, 8
    $region9: #{tpu_custom_call.1} parent=1 // pred_fallthru
      _
    // Predicated region
    $region10: #{tpu_custom_call.1} parent=1 // pred_check
      _
    $region11: #{tpu_custom_call.1} parent=1 // pred_check_branch
      %38 = sbr.rel (0) target = $region13
    $region12: #{tpu_custom_call.1} parent=1 // pred_region
      _
    $region13: #{tpu_custom_call.1} parent=1 // pred_fallthru
      _
    // Predicated region
    $region14: #{tpu_custom_call.1} parent=1 // pred_check
      _
    $region15: #{tpu_custom_call.1} parent=1 // pred_check_branch
      %40 = sbr.rel (0) target = $region17
    $region16: #{tpu_custom_call.1} parent=1 // pred_region
      %s42 = ssub.s32 512, 512
      %43 = vsyncadd [#allocation6], %s42
      %s44 = sshll.u32 [#allocation7], 4
      %s45 = int_to_ptr.vmem [resolvable:$true] %s44
      %50 = dma.hbm_to_vmem [thread:$0]  %s3, 512, %s45, [#allocation6], 128, 128, 8
    $region17: #{tpu_custom_call.1} parent=1 // pred_fallthru
      _
    // Predicated region
    $region18: #{tpu_custom_call.1} parent=1 // pred_check
      _
    $region19: #{tpu_custom_call.1} parent=1 // pred_check_branch
      %52 = sbr.rel (0) target = $region21
    $region20: #{tpu_custom_call.1} parent=1 // pred_region
      _
    $region21: #{tpu_custom_call.1} parent=1 // pred_fallthru
      _
    // Predicated region
    $region22: #{tpu_custom_call.1} parent=1 // pred_check
      _
    $region23: #{tpu_custom_call.1} parent=1 // pred_check_branch
      %54 = sbr.rel (0) target = $region25
    $region24: #{tpu_custom_call.1} parent=1 // pred_region
      %55 = dma.done [#allocation3], 256
    $region25: #{tpu_custom_call.1} parent=1 // pred_fallthru
      _
    // Predicated region
    $region26: #{tpu_custom_call.1} parent=1 // pred_check
      _
    $region27: #{tpu_custom_call.1} parent=1 // pred_check_branch
      %57 = sbr.rel (0) target = $region29
    $region28: #{tpu_custom_call.1} parent=1 // pred_region
      %58 = dma.done [#allocation6], 2048
    $region29: #{tpu_custom_call.1} parent=1 // pred_fallthru
      _
    // Predicated region
    $region30: #{tpu_custom_call.1} parent=1 // pred_check
      _
    $region31: #{tpu_custom_call.1} parent=1 // pred_check_branch
      %60 = sbr.rel (0) target = $region33
    $region32: #{tpu_custom_call.1} parent=1 // pred_region
      %61 = dma.done [#allocation6], 512
    $region33: #{tpu_custom_call.1} parent=1 // pred_fallthru
      _
    %v62 = vld [vmem:[#allocation5] sm:$0xff]
    %v63 = vld [vmem:[#allocation5 + $0x8] sm:$0xff]
    %v64 = vld [vmem:[#allocation5 + $0x10] sm:$0xff]
    %v65 = vld [vmem:[#allocation5 + $0x18] sm:$0xff]
    %v66 = vld [vmem:[#allocation5 + $0x20] sm:$0xff]
    %v67 = vld [vmem:[#allocation5 + $0x28] sm:$0xff]
    %v68 = vld [vmem:[#allocation5 + $0x30] sm:$0xff]
    %v69 = vld [vmem:[#allocation5 + $0x38] sm:$0xff]
    %s70 = scalar_lea.vmem [#allocation5], 64
    %v71 = vld [vmem:[%s70] sm:$0xff]
    %v72 = vld [vmem:[%s70 + $0x8] sm:$0xff]
    %v73 = vld [vmem:[%s70 + $0x10] sm:$0xff]
    %v74 = vld [vmem:[%s70 + $0x18] sm:$0xff]
    %v75 = vld [vmem:[%s70 + $0x20] sm:$0xff]
    %v76 = vld [vmem:[%s70 + $0x28] sm:$0xff]
    %v77 = vld [vmem:[%s70 + $0x30] sm:$0xff]
    %v78 = vld [vmem:[%s70 + $0x38] sm:$0xff]
    %v79 = vld [vmem:[%s2] sm:$0x1]
    %v81 = vlaneseq
    %v82 = vshrl.u32 %v81, 7
    %v83 = vsub.s32 0, %v82
    %v84 = vrot.slane %v79, %v83
    %s86 = scalar_lea.vmem %s2, 1
    %v87 = vld [vmem:[%s86] sm:$0x1]
    %v89 = vlaneseq
    %v90 = vshrl.u32 %v89, 7
    %v91 = vsub.s32 0, %v90
    %v92 = vrot.slane %v87, %v91
    %v94 = vld [vmem:[#allocation7] sm:$0xff]
    %v95 = vld [vmem:[#allocation7 + $0x8] sm:$0xff]
    %v96 = vld [vmem:[#allocation7 + $0x10] sm:$0xff]
    %v97 = vld [vmem:[#allocation7 + $0x18] sm:$0xff]
    %v98 = vld [vmem:[%s4] sm:$0x1]
    %v100 = vlaneseq
    %v101 = vshrl.u32 %v100, 7
    %v102 = vsub.s32 0, %v101
    %v103 = vrot.slane %v98, %v102
    %v105 = vld [vmem:[#allocation2] sm:$0x3]
    %vm106 = vcmask 261120
    %v107 = vsel %vm106, %v105, 0.0
    %vm108 = vcmask 523264
    %v110 = vsel %vm108, %v107, 0
    %112 = vmatprep.subr.mxu0 0.0
    %113 = vmatpush1.msra.mxu0 %v62
    %114 = vmatprep.subr.mxu0 0.0
    %115 = vmatpush1.msra.mxu0 %v63
    %116 = vmatprep.subr.mxu0 0.0
    %117 = vmatpush1.msra.mxu0 %v64
    %118 = vmatprep.subr.mxu0 0.0
    %119 = vmatpush1.msra.mxu0 %v65
    %120 = vmatprep.subr.mxu0 0.0
    %121 = vmatpush1.msra.mxu0 %v66
    %122 = vmatprep.subr.mxu0 0.0
    %123 = vmatpush1.msra.mxu0 %v67
    %124 = vmatprep.subr.mxu0 0.0
    %125 = vmatpush1.msra.mxu0 %v68
    %126 = vmatprep.subr.mxu0 0.0
    %127 = vmatpush1.msra.mxu0 %v69
    %128 = vmatprep.subr.mxu0 0.0
    %129 = vmatpush1.msra.mxu0 0.0
    %130 = vmatprep.subr.mxu0 0.0
    %131 = vmatpush1.msra.mxu0 0.0
    %132 = vmatprep.subr.mxu0 0.0
    %133 = vmatpush1.msra.mxu0 0.0
    %134 = vmatprep.subr.mxu0 0.0
    %135 = vmatpush1.msra.mxu0 0.0
    %136 = vmatprep.subr.mxu0 0.0
    %137 = vmatpush1.msra.mxu0 0.0
    %138 = vmatprep.subr.mxu0 0.0
    %139 = vmatpush1.msra.mxu0 0.0
    %140 = vmatprep.subr.mxu0 0.0
    %141 = vmatpush1.msra.mxu0 0.0
    %142 = vmatprep.subr.mxu0 0.0
    %143 = vmatpush1.msra.mxu0 0.0
    %144 = vmatprep.subr.mxu0 0.0
    %145 = vmatpush1.msra.mxu0 0.0
    %146 = vmatprep.subr.mxu0 0.0
    %147 = vmatpush1.msra.mxu0 0.0
    %148 = vmatprep.subr.mxu0 0.0
    %149 = vmatpush1.msra.mxu0 0.0
    %150 = vmatprep.subr.mxu0 0.0
    %151 = vmatpush1.msra.mxu0 0.0
    %152 = vmatprep.subr.mxu0 0.0
    %153 = vmatpush1.msra.mxu0 0.0
    %154 = vmatprep.subr.mxu0 0.0
    %155 = vmatpush1.msra.mxu0 0.0
    %156 = vmatprep.subr.mxu0 0.0
    %157 = vmatpush1.msra.mxu0 0.0
    %158 = vmatprep.subr.mxu0 0.0
    %159 = vmatpush1.msra.mxu0 0.0
    %160 = vmatprep.subr.mxu0 0.0
    %161 = vmatpush1.msra.mxu0 0.0
    %162 = vmatprep.subr.mxu0 0.0
    %163 = vmatpush1.msra.mxu0 0.0
    %164 = vmatprep.subr.mxu0 0.0
    %165 = vmatpush1.msra.mxu0 0.0
    %166 = vmatprep.subr.mxu0 0.0
    %167 = vmatpush1.msra.mxu0 0.0
    %168 = vmatprep.subr.mxu0 0.0
    %169 = vmatpush1.msra.mxu0 0.0
    %170 = vmatprep.subr.mxu0 0.0
    %171 = vmatpush1.msra.mxu0 0.0
    %172 = vmatprep.subr.mxu0 0.0
    %173 = vmatpush1.msra.mxu0 0.0
    %174 = vmatprep.subr.mxu0 0.0
    %175 = vmatpush1.msra.mxu0 0.0
    %176 = vmatprep.mubr.f32.mxu0 0.0
    %177 = vmatmul.mubr.f32.gmra.mrb[0].mxu0 %v110
    %v178 = vpop.f32.mrb[0].mxu0
    %v179 = vadd.f32 %v84, %v178
    %v180 = vpop.f32.mrb[0].mxu0
    %181 = vdwg.mxu0
    %v182 = vxor.u32 %v179, 2147483648
    %v183 = vmul.f32 %v182, 1.442695
    %v184 = vpow.pop %v183
    %v185 = vadd.f32 %v184, 1.0
    %v186 = vrcp.pop %v185
    %v187 = vmul.f32 1.0, %v186
    %v188 = vtanh.pop %v179
    %v189 = vmul.f32 %v187, 0.0
    %191 = vrot.lane.b32.xlu0 %v188, 64
    %v192 = vpop.permute.xlu0 %191
    %v194 = vmul.f32 %v187, %v192
    %196 = vrot.lane.b32.xlu0 %v194, 32
    %v197 = vpop.permute.xlu0 %196
    %v199 = vadd.f32 %v189, %v197
    %v200 = vtanh.pop %v199
    %202 = vrot.lane.b32.xlu0 %v200, 64
    %v203 = vpop.permute.xlu0 %202
    %v205 = vmul.f32 %v187, %v203
    %207 = vrot.lane.b32.xlu0 %v205, 32
    %v208 = vpop.permute.xlu0 %207
    %v210 = vsel %vm106, %v208, 0.0
    %v212 = vsel %vm108, %v210, 0
    %214 = vmatprep.subr.mxu0 0.0
    %215 = vmatpush1.msra.mxu0 %v71
    %216 = vmatprep.subr.mxu0 0.0
    %217 = vmatpush1.msra.mxu0 %v72
    %218 = vmatprep.subr.mxu0 0.0
    %219 = vmatpush1.msra.mxu0 %v73
    %220 = vmatprep.subr.mxu0 0.0
    %221 = vmatpush1.msra.mxu0 %v74
    %222 = vmatprep.subr.mxu0 0.0
    %223 = vmatpush1.msra.mxu0 %v75
    %224 = vmatprep.subr.mxu0 0.0
    %225 = vmatpush1.msra.mxu0 %v76
    %226 = vmatprep.subr.mxu0 0.0
    %227 = vmatpush1.msra.mxu0 %v77
    %228 = vmatprep.subr.mxu0 0.0
    %229 = vmatpush1.msra.mxu0 %v78
    %230 = vmatprep.subr.mxu0 0.0
    %231 = vmatpush1.msra.mxu0 0.0
    %232 = vmatprep.subr.mxu0 0.0
    %233 = vmatpush1.msra.mxu0 0.0
    %234 = vmatprep.subr.mxu0 0.0
    %235 = vmatpush1.msra.mxu0 0.0
    %236 = vmatprep.subr.mxu0 0.0
    %237 = vmatpush1.msra.mxu0 0.0
    %238 = vmatprep.subr.mxu0 0.0
    %239 = vmatpush1.msra.mxu0 0.0
    %240 = vmatprep.subr.mxu0 0.0
    %241 = vmatpush1.msra.mxu0 0.0
    %242 = vmatprep.subr.mxu0 0.0
    %243 = vmatpush1.msra.mxu0 0.0
    %244 = vmatprep.subr.mxu0 0.0
    %245 = vmatpush1.msra.mxu0 0.0
    %246 = vmatprep.subr.mxu0 0.0
    %247 = vmatpush1.msra.mxu0 0.0
    %248 = vmatprep.subr.mxu0 0.0
    %249 = vmatpush1.msra.mxu0 0.0
    %250 = vmatprep.subr.mxu0 0.0
    %251 = vmatpush1.msra.mxu0 0.0
    %252 = vmatprep.subr.mxu0 0.0
    %253 = vmatpush1.msra.mxu0 0.0
    %254 = vmatprep.subr.mxu0 0.0
    %255 = vmatpush1.msra.mxu0 0.0
    %256 = vmatprep.subr.mxu0 0.0
    %257 = vmatpush1.msra.mxu0 0.0
    %258 = vmatprep.subr.mxu0 0.0
    %259 = vmatpush1.msra.mxu0 0.0
    %260 = vmatprep.subr.mxu0 0.0
    %261 = vmatpush1.msra.mxu0 0.0
    %262 = vmatprep.subr.mxu0 0.0
    %263 = vmatpush1.msra.mxu0 0.0
    %264 = vmatprep.subr.mxu0 0.0
    %265 = vmatpush1.msra.mxu0 0.0
    %266 = vmatprep.subr.mxu0 0.0
    %267 = vmatpush1.msra.mxu0 0.0
    %268 = vmatprep.subr.mxu0 0.0
    %269 = vmatpush1.msra.mxu0 0.0
    %270 = vmatprep.subr.mxu0 0.0
    %271 = vmatpush1.msra.mxu0 0.0
    %272 = vmatprep.subr.mxu0 0.0
    %273 = vmatpush1.msra.mxu0 0.0
    %274 = vmatprep.subr.mxu0 0.0
    %275 = vmatpush1.msra.mxu0 0.0
    %276 = vmatprep.subr.mxu0 0.0
    %277 = vmatpush1.msra.mxu0 0.0
    %278 = vmatprep.mubr.f32.mxu0 0.0
    %279 = vmatmul.mubr.f32.gmra.mrb[0].mxu0 %v212
    %v280 = vpop.f32.mrb[0].mxu0
    %v281 = vadd.f32 %v92, %v280
    %v282 = vpop.f32.mrb[0].mxu0
    %283 = vdwg.mxu0
    %v284 = vxor.u32 %v281, 2147483648
    %v285 = vmul.f32 %v284, 1.442695
    %v286 = vpow.pop %v285
    %v287 = vadd.f32 %v286, 1.0
    %v288 = vrcp.pop %v287
    %v289 = vmul.f32 1.0, %v288
    %v290 = vtanh.pop %v281
    %v291 = vmul.f32 %v289, 0.0
    %293 = vrot.lane.b32.xlu0 %v290, 64
    %v294 = vpop.permute.xlu0 %293
    %v296 = vmul.f32 %v289, %v294
    %298 = vrot.lane.b32.xlu0 %v296, 32
    %v299 = vpop.permute.xlu0 %298
    %v301 = vadd.f32 %v291, %v299
    %v302 = vtanh.pop %v301
    %304 = vrot.lane.b32.xlu0 %v302, 64
    %v305 = vpop.permute.xlu0 %304
    %v307 = vmul.f32 %v289, %v305
    %s308 = scalar_lea.vmem [#allocation2], 2
    %v309 = vld [vmem:[%s308] sm:$0x3]
    %310 = vrot.lane.b32.xlu0 %v205, 64
    %v311 = vpop.permute.xlu0 %310
    %v313 = vsel %vm106, %v309, %v311
    %v315 = vsel %vm108, %v313, 0
    %317 = vmatprep.subr.mxu0 0.0
    %318 = vmatpush1.msra.mxu0 %v62
    %319 = vmatprep.subr.mxu0 0.0
    %320 = vmatpush1.msra.mxu0 %v63
    %321 = vmatprep.subr.mxu0 0.0
    %322 = vmatpush1.msra.mxu0 %v64
    %323 = vmatprep.subr.mxu0 0.0
    %324 = vmatpush1.msra.mxu0 %v65
    %325 = vmatprep.subr.mxu0 0.0
    %326 = vmatpush1.msra.mxu0 %v66
    %327 = vmatprep.subr.mxu0 0.0
    %328 = vmatpush1.msra.mxu0 %v67
    %329 = vmatprep.subr.mxu0 0.0
    %330 = vmatpush1.msra.mxu0 %v68
    %331 = vmatprep.subr.mxu0 0.0
    %332 = vmatpush1.msra.mxu0 %v69
    %333 = vmatprep.subr.mxu0 0.0
    %334 = vmatpush1.msra.mxu0 0.0
    %335 = vmatprep.subr.mxu0 0.0
    %336 = vmatpush1.msra.mxu0 0.0
    %337 = vmatprep.subr.mxu0 0.0
    %338 = vmatpush1.msra.mxu0 0.0
    %339 = vmatprep.subr.mxu0 0.0
    %340 = vmatpush1.msra.mxu0 0.0
    %341 = vmatprep.subr.mxu0 0.0
    %342 = vmatpush1.msra.mxu0 0.0
    %343 = vmatprep.subr.mxu0 0.0
    %344 = vmatpush1.msra.mxu0 0.0
    %345 = vmatprep.subr.mxu0 0.0
    %346 = vmatpush1.msra.mxu0 0.0
    %347 = vmatprep.subr.mxu0 0.0
    %348 = vmatpush1.msra.mxu0 0.0
    %349 = vmatprep.subr.mxu0 0.0
    %350 = vmatpush1.msra.mxu0 0.0
    %351 = vmatprep.subr.mxu0 0.0
    %352 = vmatpush1.msra.mxu0 0.0
    %353 = vmatprep.subr.mxu0 0.0
    %354 = vmatpush1.msra.mxu0 0.0
    %355 = vmatprep.subr.mxu0 0.0
    %356 = vmatpush1.msra.mxu0 0.0
    %357 = vmatprep.subr.mxu0 0.0
    %358 = vmatpush1.msra.mxu0 0.0
    %359 = vmatprep.subr.mxu0 0.0
    %360 = vmatpush1.msra.mxu0 0.0
    %361 = vmatprep.subr.mxu0 0.0
    %362 = vmatpush1.msra.mxu0 0.0
    %363 = vmatprep.subr.mxu0 0.0
    %364 = vmatpush1.msra.mxu0 0.0
    %365 = vmatprep.subr.mxu0 0.0
    %366 = vmatpush1.msra.mxu0 0.0
    %367 = vmatprep.subr.mxu0 0.0
    %368 = vmatpush1.msra.mxu0 0.0
    %369 = vmatprep.subr.mxu0 0.0
    %370 = vmatpush1.msra.mxu0 0.0
    %371 = vmatprep.subr.mxu0 0.0
    %372 = vmatpush1.msra.mxu0 0.0
    %373 = vmatprep.subr.mxu0 0.0
    %374 = vmatpush1.msra.mxu0 0.0
    %375 = vmatprep.subr.mxu0 0.0
    %376 = vmatpush1.msra.mxu0 0.0
    %377 = vmatprep.subr.mxu0 0.0
    %378 = vmatpush1.msra.mxu0 0.0
    %379 = vmatprep.subr.mxu0 0.0
    %380 = vmatpush1.msra.mxu0 0.0
    %381 = vmatprep.mubr.f32.mxu0 0.0
    %382 = vmatmul.mubr.f32.gmra.mrb[0].mxu0 %v315
    %v383 = vpop.f32.mrb[0].mxu0
    %v384 = vadd.f32 %v84, %v383
    %v385 = vpop.f32.mrb[0].mxu0
    %386 = vdwg.mxu0
    %v387 = vxor.u32 %v384, 2147483648
    %v388 = vmul.f32 %v387, 1.442695
    %v389 = vpow.pop %v388
    %v390 = vadd.f32 %v389, 1.0
    %v391 = vrcp.pop %v390
    %v392 = vmul.f32 1.0, %v391
    %v393 = vtanh.pop %v384
    %v394 = vmul.f32 %v392, %v199
    %396 = vrot.lane.b32.xlu0 %v393, 64
    %v397 = vpop.permute.xlu0 %396
    %v399 = vmul.f32 %v392, %v397
    %401 = vrot.lane.b32.xlu0 %v399, 32
    %v402 = vpop.permute.xlu0 %401
    %v404 = vadd.f32 %v394, %v402
    %v405 = vtanh.pop %v404
    %407 = vrot.lane.b32.xlu0 %v405, 64
    %v408 = vpop.permute.xlu0 %407
    %v410 = vmul.f32 %v392, %v408
    %412 = vrot.lane.b32.xlu0 %v410, 32
    %v413 = vpop.permute.xlu0 %412
    %416 = vrot.lane.b32.xlu0 %v307, 64
    %v417 = vpop.permute.xlu0 %416
    %v419 = vsel %vm106, %v413, %v417
    %v421 = vsel %vm108, %v419, 0
    %423 = vmatprep.subr.mxu0 0.0
    %424 = vmatpush1.msra.mxu0 %v71
    %425 = vmatprep.subr.mxu0 0.0
    %426 = vmatpush1.msra.mxu0 %v72
    %427 = vmatprep.subr.mxu0 0.0
    %428 = vmatpush1.msra.mxu0 %v73
    %429 = vmatprep.subr.mxu0 0.0
    %430 = vmatpush1.msra.mxu0 %v74
    %431 = vmatprep.subr.mxu0 0.0
    %432 = vmatpush1.msra.mxu0 %v75
    %433 = vmatprep.subr.mxu0 0.0
    %434 = vmatpush1.msra.mxu0 %v76
    %435 = vmatprep.subr.mxu0 0.0
    %436 = vmatpush1.msra.mxu0 %v77
    %437 = vmatprep.subr.mxu0 0.0
    %438 = vmatpush1.msra.mxu0 %v78
    %439 = vmatprep.subr.mxu0 0.0
    %440 = vmatpush1.msra.mxu0 0.0
    %441 = vmatprep.subr.mxu0 0.0
    %442 = vmatpush1.msra.mxu0 0.0
    %443 = vmatprep.subr.mxu0 0.0
    %444 = vmatpush1.msra.mxu0 0.0
    %445 = vmatprep.subr.mxu0 0.0
    %446 = vmatpush1.msra.mxu0 0.0
    %447 = vmatprep.subr.mxu0 0.0
    %448 = vmatpush1.msra.mxu0 0.0
    %449 = vmatprep.subr.mxu0 0.0
    %450 = vmatpush1.msra.mxu0 0.0
    %451 = vmatprep.subr.mxu0 0.0
    %452 = vmatpush1.msra.mxu0 0.0
    %453 = vmatprep.subr.mxu0 0.0
    %454 = vmatpush1.msra.mxu0 0.0
    %455 = vmatprep.subr.mxu0 0.0
    %456 = vmatpush1.msra.mxu0 0.0
    %457 = vmatprep.subr.mxu0 0.0
    %458 = vmatpush1.msra.mxu0 0.0
    %459 = vmatprep.subr.mxu0 0.0
    %460 = vmatpush1.msra.mxu0 0.0
    %461 = vmatprep.subr.mxu0 0.0
    %462 = vmatpush1.msra.mxu0 0.0
    %463 = vmatprep.subr.mxu0 0.0
    %464 = vmatpush1.msra.mxu0 0.0
    %465 = vmatprep.subr.mxu0 0.0
    %466 = vmatpush1.msra.mxu0 0.0
    %467 = vmatprep.subr.mxu0 0.0
    %468 = vmatpush1.msra.mxu0 0.0
    %469 = vmatprep.subr.mxu0 0.0
    %470 = vmatpush1.msra.mxu0 0.0
    %471 = vmatprep.subr.mxu0 0.0
    %472 = vmatpush1.msra.mxu0 0.0
    %473 = vmatprep.subr.mxu0 0.0
    %474 = vmatpush1.msra.mxu0 0.0
    %475 = vmatprep.subr.mxu0 0.0
    %476 = vmatpush1.msra.mxu0 0.0
    %477 = vmatprep.subr.mxu0 0.0
    %478 = vmatpush1.msra.mxu0 0.0
    %479 = vmatprep.subr.mxu0 0.0
    %480 = vmatpush1.msra.mxu0 0.0
    %481 = vmatprep.subr.mxu0 0.0
    %482 = vmatpush1.msra.mxu0 0.0
    %483 = vmatprep.subr.mxu0 0.0
    %484 = vmatpush1.msra.mxu0 0.0
    %485 = vmatprep.subr.mxu0 0.0
    %486 = vmatpush1.msra.mxu0 0.0
    %487 = vmatprep.mubr.f32.mxu0 0.0
    %488 = vmatmul.mubr.f32.gmra.mrb[0].mxu0 %v421
    %v489 = vpop.f32.mrb[0].mxu0
    %v490 = vadd.f32 %v92, %v489
    %v491 = vpop.f32.mrb[0].mxu0
    %492 = vdwg.mxu0
    %v493 = vxor.u32 %v490, 2147483648
    %v494 = vmul.f32 %v493, 1.442695
    %v495 = vpow.pop %v494
    %v496 = vadd.f32 %v495, 1.0
    %v497 = vrcp.pop %v496
    %v498 = vmul.f32 1.0, %v497
    %v499 = vtanh.pop %v490
    %v500 = vmul.f32 %v498, %v301
    %502 = vrot.lane.b32.xlu0 %v499, 64
    %v503 = vpop.permute.xlu0 %502
    %v505 = vmul.f32 %v498, %v503
    %507 = vrot.lane.b32.xlu0 %v505, 32
    %v508 = vpop.permute.xlu0 %507
    %v510 = vadd.f32 %v500, %v508
    %v511 = vtanh.pop %v510
    %513 = vrot.lane.b32.xlu0 %v511, 64
    %v514 = vpop.permute.xlu0 %513
    %v516 = vmul.f32 %v498, %v514
    %s517 = scalar_lea.vmem [#allocation2], 4
    %v518 = vld [vmem:[%s517] sm:$0x3]
    %519 = vrot.lane.b32.xlu0 %v410, 64
    %v520 = vpop.permute.xlu0 %519
    %v522 = vsel %vm106, %v518, %v520
    %v524 = vsel %vm108, %v522, 0
    %526 = vmatprep.subr.mxu0 0.0
    %527 = vmatpush1.msra.mxu0 %v62
    %528 = vmatprep.subr.mxu0 0.0
    %529 = vmatpush1.msra.mxu0 %v63
    %530 = vmatprep.subr.mxu0 0.0
    %531 = vmatpush1.msra.mxu0 %v64
    %532 = vmatprep.subr.mxu0 0.0
    %533 = vmatpush1.msra.mxu0 %v65
    %534 = vmatprep.subr.mxu0 0.0
    %535 = vmatpush1.msra.mxu0 %v66
    %536 = vmatprep.subr.mxu0 0.0
    %537 = vmatpush1.msra.mxu0 %v67
    %538 = vmatprep.subr.mxu0 0.0
    %539 = vmatpush1.msra.mxu0 %v68
    %540 = vmatprep.subr.mxu0 0.0
    %541 = vmatpush1.msra.mxu0 %v69
    %542 = vmatprep.subr.mxu0 0.0
    %543 = vmatpush1.msra.mxu0 0.0
    %544 = vmatprep.subr.mxu0 0.0
    %545 = vmatpush1.msra.mxu0 0.0
    %546 = vmatprep.subr.mxu0 0.0
    %547 = vmatpush1.msra.mxu0 0.0
    %548 = vmatprep.subr.mxu0 0.0
    %549 = vmatpush1.msra.mxu0 0.0
    %550 = vmatprep.subr.mxu0 0.0
    %551 = vmatpush1.msra.mxu0 0.0
    %552 = vmatprep.subr.mxu0 0.0
    %553 = vmatpush1.msra.mxu0 0.0
    %554 = vmatprep.subr.mxu0 0.0
    %555 = vmatpush1.msra.mxu0 0.0
    %556 = vmatprep.subr.mxu0 0.0
    %557 = vmatpush1.msra.mxu0 0.0
    %558 = vmatprep.subr.mxu0 0.0
    %559 = vmatpush1.msra.mxu0 0.0
    %560 = vmatprep.subr.mxu0 0.0
    %561 = vmatpush1.msra.mxu0 0.0
    %562 = vmatprep.subr.mxu0 0.0
    %563 = vmatpush1.msra.mxu0 0.0
    %564 = vmatprep.subr.mxu0 0.0
    %565 = vmatpush1.msra.mxu0 0.0
    %566 = vmatprep.subr.mxu0 0.0
    %567 = vmatpush1.msra.mxu0 0.0
    %568 = vmatprep.subr.mxu0 0.0
    %569 = vmatpush1.msra.mxu0 0.0
    %570 = vmatprep.subr.mxu0 0.0
    %571 = vmatpush1.msra.mxu0 0.0
    %572 = vmatprep.subr.mxu0 0.0
    %573 = vmatpush1.msra.mxu0 0.0
    %574 = vmatprep.subr.mxu0 0.0
    %575 = vmatpush1.msra.mxu0 0.0
    %576 = vmatprep.subr.mxu0 0.0
    %577 = vmatpush1.msra.mxu0 0.0
    %578 = vmatprep.subr.mxu0 0.0
    %579 = vmatpush1.msra.mxu0 0.0
    %580 = vmatprep.subr.mxu0 0.0
    %581 = vmatpush1.msra.mxu0 0.0
    %582 = vmatprep.subr.mxu0 0.0
    %583 = vmatpush1.msra.mxu0 0.0
    %584 = vmatprep.subr.mxu0 0.0
    %585 = vmatpush1.msra.mxu0 0.0
    %586 = vmatprep.subr.mxu0 0.0
    %587 = vmatpush1.msra.mxu0 0.0
    %588 = vmatprep.subr.mxu0 0.0
    %589 = vmatpush1.msra.mxu0 0.0
    %590 = vmatprep.mubr.f32.mxu0 0.0
    %591 = vmatmul.mubr.f32.gmra.mrb[0].mxu0 %v524
    %v592 = vpop.f32.mrb[0].mxu0
    %v593 = vadd.f32 %v84, %v592
    %v594 = vpop.f32.mrb[0].mxu0
    %595 = vdwg.mxu0
    %v596 = vxor.u32 %v593, 2147483648
    %v597 = vmul.f32 %v596, 1.442695
    %v598 = vpow.pop %v597
    %v599 = vadd.f32 %v598, 1.0
    %v600 = vrcp.pop %v599
    %v601 = vmul.f32 1.0, %v600
    %v602 = vtanh.pop %v593
    %v603 = vmul.f32 %v601, %v404
    %605 = vrot.lane.b32.xlu0 %v602, 64
    %v606 = vpop.permute.xlu0 %605
    %v608 = vmul.f32 %v601, %v606
    %610 = vrot.lane.b32.xlu0 %v608, 32
    %v611 = vpop.permute.xlu0 %610
    %v613 = vadd.f32 %v603, %v611
    %v614 = vtanh.pop %v613
    %616 = vrot.lane.b32.xlu0 %v614, 64
    %v617 = vpop.permute.xlu0 %616
    %v619 = vmul.f32 %v601, %v617
    %621 = vrot.lane.b32.xlu0 %v619, 32
    %v622 = vpop.permute.xlu0 %621
    %625 = vrot.lane.b32.xlu0 %v516, 64
    %v626 = vpop.permute.xlu0 %625
    %v628 = vsel %vm106, %v622, %v626
    %v630 = vsel %vm108, %v628, 0
    %632 = vmatprep.subr.mxu0 0.0
    %633 = vmatpush1.msra.mxu0 %v71
    %634 = vmatprep.subr.mxu0 0.0
    %635 = vmatpush1.msra.mxu0 %v72
    %636 = vmatprep.subr.mxu0 0.0
    %637 = vmatpush1.msra.mxu0 %v73
    %638 = vmatprep.subr.mxu0 0.0
    %639 = vmatpush1.msra.mxu0 %v74
    %640 = vmatprep.subr.mxu0 0.0
    %641 = vmatpush1.msra.mxu0 %v75
    %642 = vmatprep.subr.mxu0 0.0
    %643 = vmatpush1.msra.mxu0 %v76
    %644 = vmatprep.subr.mxu0 0.0
    %645 = vmatpush1.msra.mxu0 %v77
    %646 = vmatprep.subr.mxu0 0.0
    %647 = vmatpush1.msra.mxu0 %v78
    %648 = vmatprep.subr.mxu0 0.0
    %649 = vmatpush1.msra.mxu0 0.0
    %650 = vmatprep.subr.mxu0 0.0
    %651 = vmatpush1.msra.mxu0 0.0
    %652 = vmatprep.subr.mxu0 0.0
    %653 = vmatpush1.msra.mxu0 0.0
    %654 = vmatprep.subr.mxu0 0.0
    %655 = vmatpush1.msra.mxu0 0.0
    %656 = vmatprep.subr.mxu0 0.0
    %657 = vmatpush1.msra.mxu0 0.0
    %658 = vmatprep.subr.mxu0 0.0
    %659 = vmatpush1.msra.mxu0 0.0
    %660 = vmatprep.subr.mxu0 0.0
    %661 = vmatpush1.msra.mxu0 0.0
    %662 = vmatprep.subr.mxu0 0.0
    %663 = vmatpush1.msra.mxu0 0.0
    %664 = vmatprep.subr.mxu0 0.0
    %665 = vmatpush1.msra.mxu0 0.0
    %666 = vmatprep.subr.mxu0 0.0
    %667 = vmatpush1.msra.mxu0 0.0
    %668 = vmatprep.subr.mxu0 0.0
    %669 = vmatpush1.msra.mxu0 0.0
    %670 = vmatprep.subr.mxu0 0.0
    %671 = vmatpush1.msra.mxu0 0.0
    %672 = vmatprep.subr.mxu0 0.0
    %673 = vmatpush1.msra.mxu0 0.0
    %674 = vmatprep.subr.mxu0 0.0
    %675 = vmatpush1.msra.mxu0 0.0
    %676 = vmatprep.subr.mxu0 0.0
    %677 = vmatpush1.msra.mxu0 0.0
    %678 = vmatprep.subr.mxu0 0.0
    %679 = vmatpush1.msra.mxu0 0.0
    %680 = vmatprep.subr.mxu0 0.0
    %681 = vmatpush1.msra.mxu0 0.0
    %682 = vmatprep.subr.mxu0 0.0
    %683 = vmatpush1.msra.mxu0 0.0
    %684 = vmatprep.subr.mxu0 0.0
    %685 = vmatpush1.msra.mxu0 0.0
    %686 = vmatprep.subr.mxu0 0.0
    %687 = vmatpush1.msra.mxu0 0.0
    %688 = vmatprep.subr.mxu0 0.0
    %689 = vmatpush1.msra.mxu0 0.0
    %690 = vmatprep.subr.mxu0 0.0
    %691 = vmatpush1.msra.mxu0 0.0
    %692 = vmatprep.subr.mxu0 0.0
    %693 = vmatpush1.msra.mxu0 0.0
    %694 = vmatprep.subr.mxu0 0.0
    %695 = vmatpush1.msra.mxu0 0.0
    %696 = vmatprep.mubr.f32.mxu0 0.0
    %697 = vmatmul.mubr.f32.gmra.mrb[0].mxu0 %v630
    %v698 = vpop.f32.mrb[0].mxu0
    %v699 = vadd.f32 %v92, %v698
    %v700 = vpop.f32.mrb[0].mxu0
    %701 = vdwg.mxu0
    %v702 = vxor.u32 %v699, 2147483648
    %v703 = vmul.f32 %v702, 1.442695
    %v704 = vpow.pop %v703
    %v705 = vadd.f32 %v704, 1.0
    %v706 = vrcp.pop %v705
    %v707 = vmul.f32 1.0, %v706
    %v708 = vtanh.pop %v699
    %v709 = vmul.f32 %v707, %v510
    %711 = vrot.lane.b32.xlu0 %v708, 64
    %v712 = vpop.permute.xlu0 %711
    %v714 = vmul.f32 %v707, %v712
    %716 = vrot.lane.b32.xlu0 %v714, 32
    %v717 = vpop.permute.xlu0 %716
    %v719 = vadd.f32 %v709, %v717
    %v720 = vtanh.pop %v719
    %722 = vrot.lane.b32.xlu0 %v720, 64
    %v723 = vpop.permute.xlu0 %722
    %v725 = vmul.f32 %v707, %v723
    %s726 = scalar_lea.vmem [#allocation2], 6
    %v727 = vld [vmem:[%s726] sm:$0x3]
    %728 = vrot.lane.b32.xlu0 %v619, 64
    %v729 = vpop.permute.xlu0 %728
    %v731 = vsel %vm106, %v727, %v729
    %v733 = vsel %vm108, %v731, 0
    %735 = vmatprep.subr.mxu0 0.0
    %736 = vmatpush1.msra.mxu0 %v62
    %737 = vmatprep.subr.mxu0 0.0
    %738 = vmatpush1.msra.mxu0 %v63
    %739 = vmatprep.subr.mxu0 0.0
    %740 = vmatpush1.msra.mxu0 %v64
    %741 = vmatprep.subr.mxu0 0.0
    %742 = vmatpush1.msra.mxu0 %v65
    %743 = vmatprep.subr.mxu0 0.0
    %744 = vmatpush1.msra.mxu0 %v66
    %745 = vmatprep.subr.mxu0 0.0
    %746 = vmatpush1.msra.mxu0 %v67
    %747 = vmatprep.subr.mxu0 0.0
    %748 = vmatpush1.msra.mxu0 %v68
    %749 = vmatprep.subr.mxu0 0.0
    %750 = vmatpush1.msra.mxu0 %v69
    %751 = vmatprep.subr.mxu0 0.0
    %752 = vmatpush1.msra.mxu0 0.0
    %753 = vmatprep.subr.mxu0 0.0
    %754 = vmatpush1.msra.mxu0 0.0
    %755 = vmatprep.subr.mxu0 0.0
    %756 = vmatpush1.msra.mxu0 0.0
    %757 = vmatprep.subr.mxu0 0.0
    %758 = vmatpush1.msra.mxu0 0.0
    %759 = vmatprep.subr.mxu0 0.0
    %760 = vmatpush1.msra.mxu0 0.0
    %761 = vmatprep.subr.mxu0 0.0
    %762 = vmatpush1.msra.mxu0 0.0
    %763 = vmatprep.subr.mxu0 0.0
    %764 = vmatpush1.msra.mxu0 0.0
    %765 = vmatprep.subr.mxu0 0.0
    %766 = vmatpush1.msra.mxu0 0.0
    %767 = vmatprep.subr.mxu0 0.0
    %768 = vmatpush1.msra.mxu0 0.0
    %769 = vmatprep.subr.mxu0 0.0
    %770 = vmatpush1.msra.mxu0 0.0
    %771 = vmatprep.subr.mxu0 0.0
    %772 = vmatpush1.msra.mxu0 0.0
    %773 = vmatprep.subr.mxu0 0.0
    %774 = vmatpush1.msra.mxu0 0.0
    %775 = vmatprep.subr.mxu0 0.0
    %776 = vmatpush1.msra.mxu0 0.0
    %777 = vmatprep.subr.mxu0 0.0
    %778 = vmatpush1.msra.mxu0 0.0
    %779 = vmatprep.subr.mxu0 0.0
    %780 = vmatpush1.msra.mxu0 0.0
    %781 = vmatprep.subr.mxu0 0.0
    %782 = vmatpush1.msra.mxu0 0.0
    %783 = vmatprep.subr.mxu0 0.0
    %784 = vmatpush1.msra.mxu0 0.0
    %785 = vmatprep.subr.mxu0 0.0
    %786 = vmatpush1.msra.mxu0 0.0
    %787 = vmatprep.subr.mxu0 0.0
    %788 = vmatpush1.msra.mxu0 0.0
    %789 = vmatprep.subr.mxu0 0.0
    %790 = vmatpush1.msra.mxu0 0.0
    %791 = vmatprep.subr.mxu0 0.0
    %792 = vmatpush1.msra.mxu0 0.0
    %793 = vmatprep.subr.mxu0 0.0
    %794 = vmatpush1.msra.mxu0 0.0
    %795 = vmatprep.subr.mxu0 0.0
    %796 = vmatpush1.msra.mxu0 0.0
    %797 = vmatprep.subr.mxu0 0.0
    %798 = vmatpush1.msra.mxu0 0.0
    %799 = vmatprep.mubr.f32.mxu0 0.0
    %800 = vmatmul.mubr.f32.gmra.mrb[0].mxu0 %v733
    %v801 = vpop.f32.mrb[0].mxu0
    %v802 = vadd.f32 %v84, %v801
    %v803 = vpop.f32.mrb[0].mxu0
    %804 = vdwg.mxu0
    %v805 = vxor.u32 %v802, 2147483648
    %v806 = vmul.f32 %v805, 1.442695
    %v807 = vpow.pop %v806
    %v808 = vadd.f32 %v807, 1.0
    %v809 = vrcp.pop %v808
    %v810 = vmul.f32 1.0, %v809
    %v811 = vtanh.pop %v802
    %v812 = vmul.f32 %v810, %v613
    %814 = vrot.lane.b32.xlu0 %v811, 64
    %v815 = vpop.permute.xlu0 %814
    %v817 = vmul.f32 %v810, %v815
    %819 = vrot.lane.b32.xlu0 %v817, 32
    %v820 = vpop.permute.xlu0 %819
    %v822 = vadd.f32 %v812, %v820
    %v823 = vtanh.pop %v822
    %825 = vrot.lane.b32.xlu0 %v823, 64
    %v826 = vpop.permute.xlu0 %825
    %v828 = vmul.f32 %v810, %v826
    %830 = vrot.lane.b32.xlu0 %v828, 32
    %v831 = vpop.permute.xlu0 %830
    %834 = vrot.lane.b32.xlu0 %v725, 64
    %v835 = vpop.permute.xlu0 %834
    %v837 = vsel %vm106, %v831, %v835
    %v839 = vsel %vm108, %v837, 0
    %841 = vmatprep.subr.mxu0 0.0
    %842 = vmatpush1.msra.mxu0 %v71
    %843 = vmatprep.subr.mxu0 0.0
    %844 = vmatpush1.msra.mxu0 %v72
    %845 = vmatprep.subr.mxu0 0.0
    %846 = vmatpush1.msra.mxu0 %v73
    %847 = vmatprep.subr.mxu0 0.0
    %848 = vmatpush1.msra.mxu0 %v74
    %849 = vmatprep.subr.mxu0 0.0
    %850 = vmatpush1.msra.mxu0 %v75
    %851 = vmatprep.subr.mxu0 0.0
    %852 = vmatpush1.msra.mxu0 %v76
    %853 = vmatprep.subr.mxu0 0.0
    %854 = vmatpush1.msra.mxu0 %v77
    %855 = vmatprep.subr.mxu0 0.0
    %856 = vmatpush1.msra.mxu0 %v78
    %857 = vmatprep.subr.mxu0 0.0
    %858 = vmatpush1.msra.mxu0 0.0
    %859 = vmatprep.subr.mxu0 0.0
    %860 = vmatpush1.msra.mxu0 0.0
    %861 = vmatprep.subr.mxu0 0.0
    %862 = vmatpush1.msra.mxu0 0.0
    %863 = vmatprep.subr.mxu0 0.0
    %864 = vmatpush1.msra.mxu0 0.0
    %865 = vmatprep.subr.mxu0 0.0
    %866 = vmatpush1.msra.mxu0 0.0
    %867 = vmatprep.subr.mxu0 0.0
    %868 = vmatpush1.msra.mxu0 0.0
    %869 = vmatprep.subr.mxu0 0.0
    %870 = vmatpush1.msra.mxu0 0.0
    %871 = vmatprep.subr.mxu0 0.0
    %872 = vmatpush1.msra.mxu0 0.0
    %873 = vmatprep.subr.mxu0 0.0
    %874 = vmatpush1.msra.mxu0 0.0
    %875 = vmatprep.subr.mxu0 0.0
    %876 = vmatpush1.msra.mxu0 0.0
    %877 = vmatprep.subr.mxu0 0.0
    %878 = vmatpush1.msra.mxu0 0.0
    %879 = vmatprep.subr.mxu0 0.0
    %880 = vmatpush1.msra.mxu0 0.0
    %881 = vmatprep.subr.mxu0 0.0
    %882 = vmatpush1.msra.mxu0 0.0
    %883 = vmatprep.subr.mxu0 0.0
    %884 = vmatpush1.msra.mxu0 0.0
    %885 = vmatprep.subr.mxu0 0.0
    %886 = vmatpush1.msra.mxu0 0.0
    %887 = vmatprep.subr.mxu0 0.0
    %888 = vmatpush1.msra.mxu0 0.0
    %889 = vmatprep.subr.mxu0 0.0
    %890 = vmatpush1.msra.mxu0 0.0
    %891 = vmatprep.subr.mxu0 0.0
    %892 = vmatpush1.msra.mxu0 0.0
    %893 = vmatprep.subr.mxu0 0.0
    %894 = vmatpush1.msra.mxu0 0.0
    %895 = vmatprep.subr.mxu0 0.0
    %896 = vmatpush1.msra.mxu0 0.0
    %897 = vmatprep.subr.mxu0 0.0
    %898 = vmatpush1.msra.mxu0 0.0
    %899 = vmatprep.subr.mxu0 0.0
    %900 = vmatpush1.msra.mxu0 0.0
    %901 = vmatprep.subr.mxu0 0.0
    %902 = vmatpush1.msra.mxu0 0.0
    %903 = vmatprep.subr.mxu0 0.0
    %904 = vmatpush1.msra.mxu0 0.0
    %905 = vmatprep.mubr.f32.mxu0 0.0
    %906 = vmatmul.mubr.f32.gmra.mrb[0].mxu0 %v839
    %v907 = vpop.f32.mrb[0].mxu0
    %v908 = vadd.f32 %v92, %v907
    %v909 = vpop.f32.mrb[0].mxu0
    %910 = vdwg.mxu0
    %v911 = vxor.u32 %v908, 2147483648
    %v912 = vmul.f32 %v911, 1.442695
    %v913 = vpow.pop %v912
    %v914 = vadd.f32 %v913, 1.0
    %v915 = vrcp.pop %v914
    %v916 = vmul.f32 1.0, %v915
    %v917 = vtanh.pop %v908
    %v918 = vmul.f32 %v916, %v719
    %920 = vrot.lane.b32.xlu0 %v917, 64
    %v921 = vpop.permute.xlu0 %920
    %v923 = vmul.f32 %v916, %v921
    %925 = vrot.lane.b32.xlu0 %v923, 32
    %v926 = vpop.permute.xlu0 %925
    %v928 = vadd.f32 %v918, %v926
    %v929 = vtanh.pop %v928
    %931 = vrot.lane.b32.xlu0 %v929, 64
    %v932 = vpop.permute.xlu0 %931
    %v934 = vmul.f32 %v916, %v932
    %s935 = scalar_lea.vmem [#allocation2], 8
    %v936 = vld [vmem:[%s935] sm:$0x3]
    %937 = vrot.lane.b32.xlu0 %v828, 64
    %v938 = vpop.permute.xlu0 %937
    %v940 = vsel %vm106, %v936, %v938
    %v942 = vsel %vm108, %v940, 0
    %944 = vmatprep.subr.mxu0 0.0
    %945 = vmatpush1.msra.mxu0 %v62
    %946 = vmatprep.subr.mxu0 0.0
    %947 = vmatpush1.msra.mxu0 %v63
    %948 = vmatprep.subr.mxu0 0.0
    %949 = vmatpush1.msra.mxu0 %v64
    %950 = vmatprep.subr.mxu0 0.0
    %951 = vmatpush1.msra.mxu0 %v65
    %952 = vmatprep.subr.mxu0 0.0
    %953 = vmatpush1.msra.mxu0 %v66
    %954 = vmatprep.subr.mxu0 0.0
    %955 = vmatpush1.msra.mxu0 %v67
    %956 = vmatprep.subr.mxu0 0.0
    %957 = vmatpush1.msra.mxu0 %v68
    %958 = vmatprep.subr.mxu0 0.0
    %959 = vmatpush1.msra.mxu0 %v69
    %960 = vmatprep.subr.mxu0 0.0
    %961 = vmatpush1.msra.mxu0 0.0
    %962 = vmatprep.subr.mxu0 0.0
    %963 = vmatpush1.msra.mxu0 0.0
    %964 = vmatprep.subr.mxu0 0.0
    %965 = vmatpush1.msra.mxu0 0.0
    %966 = vmatprep.subr.mxu0 0.0
    %967 = vmatpush1.msra.mxu0 0.0
    %968 = vmatprep.subr.mxu0 0.0
    %969 = vmatpush1.msra.mxu0 0.0
    %970 = vmatprep.subr.mxu0 0.0
    %971 = vmatpush1.msra.mxu0 0.0
    %972 = vmatprep.subr.mxu0 0.0
    %973 = vmatpush1.msra.mxu0 0.0
    %974 = vmatprep.subr.mxu0 0.0
    %975 = vmatpush1.msra.mxu0 0.0
    %976 = vmatprep.subr.mxu0 0.0
    %977 = vmatpush1.msra.mxu0 0.0
    %978 = vmatprep.subr.mxu0 0.0
    %979 = vmatpush1.msra.mxu0 0.0
    %980 = vmatprep.subr.mxu0 0.0
    %981 = vmatpush1.msra.mxu0 0.0
    %982 = vmatprep.subr.mxu0 0.0
    %983 = vmatpush1.msra.mxu0 0.0
    %984 = vmatprep.subr.mxu0 0.0
    %985 = vmatpush1.msra.mxu0 0.0
    %986 = vmatprep.subr.mxu0 0.0
    %987 = vmatpush1.msra.mxu0 0.0
    %988 = vmatprep.subr.mxu0 0.0
    %989 = vmatpush1.msra.mxu0 0.0
    %990 = vmatprep.subr.mxu0 0.0
    %991 = vmatpush1.msra.mxu0 0.0
    %992 = vmatprep.subr.mxu0 0.0
    %993 = vmatpush1.msra.mxu0 0.0
    %994 = vmatprep.subr.mxu0 0.0
    %995 = vmatpush1.msra.mxu0 0.0
    %996 = vmatprep.subr.mxu0 0.0
    %997 = vmatpush1.msra.mxu0 0.0
    %998 = vmatprep.subr.mxu0 0.0
    %999 = vmatpush1.msra.mxu0 0.0
    %1000 = vmatprep.subr.mxu0 0.0
    %1001 = vmatpush1.msra.mxu0 0.0
    %1002 = vmatprep.subr.mxu0 0.0
    %1003 = vmatpush1.msra.mxu0 0.0
    %1004 = vmatprep.subr.mxu0 0.0
    %1005 = vmatpush1.msra.mxu0 0.0
    %1006 = vmatprep.subr.mxu0 0.0
    %1007 = vmatpush1.msra.mxu0 0.0
    %1008 = vmatprep.mubr.f32.mxu0 0.0
    %1009 = vmatmul.mubr.f32.gmra.mrb[0].mxu0 %v942
    %v1010 = vpop.f32.mrb[0].mxu0
    %v1011 = vadd.f32 %v84, %v1010
    %v1012 = vpop.f32.mrb[0].mxu0
    %1013 = vdwg.mxu0
    %v1014 = vxor.u32 %v1011, 2147483648
    %v1015 = vmul.f32 %v1014, 1.442695
    %v1016 = vpow.pop %v1015
    %v1017 = vadd.f32 %v1016, 1.0
    %v1018 = vrcp.pop %v1017
    %v1019 = vmul.f32 1.0, %v1018
    %v1020 = vtanh.pop %v1011
    %v1021 = vmul.f32 %v1019, %v822
    %1023 = vrot.lane.b32.xlu0 %v1020, 64
    %v1024 = vpop.permute.xlu0 %1023
    %v1026 = vmul.f32 %v1019, %v1024
    %1028 = vrot.lane.b32.xlu0 %v1026, 32
    %v1029 = vpop.permute.xlu0 %1028
    %v1031 = vadd.f32 %v1021, %v1029
    %v1032 = vtanh.pop %v1031
    %1034 = vrot.lane.b32.xlu0 %v1032, 64
    %v1035 = vpop.permute.xlu0 %1034
    %v1037 = vmul.f32 %v1019, %v1035
    %1039 = vrot.lane.b32.xlu0 %v1037, 32
    %v1040 = vpop.permute.xlu0 %1039
    %1043 = vrot.lane.b32.xlu0 %v934, 64
    %v1044 = vpop.permute.xlu0 %1043
    %v1046 = vsel %vm106, %v1040, %v1044
    %v1048 = vsel %vm108, %v1046, 0
    %1050 = vmatprep.subr.mxu0 0.0
    %1051 = vmatpush1.msra.mxu0 %v71
    %1052 = vmatprep.subr.mxu0 0.0
    %1053 = vmatpush1.msra.mxu0 %v72
    %1054 = vmatprep.subr.mxu0 0.0
    %1055 = vmatpush1.msra.mxu0 %v73
    %1056 = vmatprep.subr.mxu0 0.0
    %1057 = vmatpush1.msra.mxu0 %v74
    %1058 = vmatprep.subr.mxu0 0.0
    %1059 = vmatpush1.msra.mxu0 %v75
    %1060 = vmatprep.subr.mxu0 0.0
    %1061 = vmatpush1.msra.mxu0 %v76
    %1062 = vmatprep.subr.mxu0 0.0
    %1063 = vmatpush1.msra.mxu0 %v77
    %1064 = vmatprep.subr.mxu0 0.0
    %1065 = vmatpush1.msra.mxu0 %v78
    %1066 = vmatprep.subr.mxu0 0.0
    %1067 = vmatpush1.msra.mxu0 0.0
    %1068 = vmatprep.subr.mxu0 0.0
    %1069 = vmatpush1.msra.mxu0 0.0
    %1070 = vmatprep.subr.mxu0 0.0
    %1071 = vmatpush1.msra.mxu0 0.0
    %1072 = vmatprep.subr.mxu0 0.0
    %1073 = vmatpush1.msra.mxu0 0.0
    %1074 = vmatprep.subr.mxu0 0.0
    %1075 = vmatpush1.msra.mxu0 0.0
    %1076 = vmatprep.subr.mxu0 0.0
    %1077 = vmatpush1.msra.mxu0 0.0
    %1078 = vmatprep.subr.mxu0 0.0
    %1079 = vmatpush1.msra.mxu0 0.0
    %1080 = vmatprep.subr.mxu0 0.0
    %1081 = vmatpush1.msra.mxu0 0.0
    %1082 = vmatprep.subr.mxu0 0.0
    %1083 = vmatpush1.msra.mxu0 0.0
    %1084 = vmatprep.subr.mxu0 0.0
    %1085 = vmatpush1.msra.mxu0 0.0
    %1086 = vmatprep.subr.mxu0 0.0
    %1087 = vmatpush1.msra.mxu0 0.0
    %1088 = vmatprep.subr.mxu0 0.0
    %1089 = vmatpush1.msra.mxu0 0.0
    %1090 = vmatprep.subr.mxu0 0.0
    %1091 = vmatpush1.msra.mxu0 0.0
    %1092 = vmatprep.subr.mxu0 0.0
    %1093 = vmatpush1.msra.mxu0 0.0
    %1094 = vmatprep.subr.mxu0 0.0
    %1095 = vmatpush1.msra.mxu0 0.0
    %1096 = vmatprep.subr.mxu0 0.0
    %1097 = vmatpush1.msra.mxu0 0.0
    %1098 = vmatprep.subr.mxu0 0.0
    %1099 = vmatpush1.msra.mxu0 0.0
    %1100 = vmatprep.subr.mxu0 0.0
    %1101 = vmatpush1.msra.mxu0 0.0
    %1102 = vmatprep.subr.mxu0 0.0
    %1103 = vmatpush1.msra.mxu0 0.0
    %1104 = vmatprep.subr.mxu0 0.0
    %1105 = vmatpush1.msra.mxu0 0.0
    %1106 = vmatprep.subr.mxu0 0.0
    %1107 = vmatpush1.msra.mxu0 0.0
    %1108 = vmatprep.subr.mxu0 0.0
    %1109 = vmatpush1.msra.mxu0 0.0
    %1110 = vmatprep.subr.mxu0 0.0
    %1111 = vmatpush1.msra.mxu0 0.0
    %1112 = vmatprep.subr.mxu0 0.0
    %1113 = vmatpush1.msra.mxu0 0.0
    %1114 = vmatprep.mubr.f32.mxu0 0.0
    %1115 = vmatmul.mubr.f32.gmra.mrb[0].mxu0 %v1048
    %v1116 = vpop.f32.mrb[0].mxu0
    %v1117 = vadd.f32 %v92, %v1116
    %v1118 = vpop.f32.mrb[0].mxu0
    %1119 = vdwg.mxu0
    %v1120 = vxor.u32 %v1117, 2147483648
    %v1121 = vmul.f32 %v1120, 1.442695
    %v1122 = vpow.pop %v1121
    %v1123 = vadd.f32 %v1122, 1.0
    %v1124 = vrcp.pop %v1123
    %v1125 = vmul.f32 1.0, %v1124
    %v1126 = vtanh.pop %v1117
    %v1127 = vmul.f32 %v1125, %v928
    %1129 = vrot.lane.b32.xlu0 %v1126, 64
    %v1130 = vpop.permute.xlu0 %1129
    %v1132 = vmul.f32 %v1125, %v1130
    %1134 = vrot.lane.b32.xlu0 %v1132, 32
    %v1135 = vpop.permute.xlu0 %1134
    %v1137 = vadd.f32 %v1127, %v1135
    %v1138 = vtanh.pop %v1137
    %1140 = vrot.lane.b32.xlu0 %v1138, 64
    %v1141 = vpop.permute.xlu0 %1140
    %v1143 = vmul.f32 %v1125, %v1141
    %s1144 = scalar_lea.vmem [#allocation2], 10
    %v1145 = vld [vmem:[%s1144] sm:$0x3]
    %1146 = vrot.lane.b32.xlu0 %v1037, 64
    %v1147 = vpop.permute.xlu0 %1146
    %v1149 = vsel %vm106, %v1145, %v1147
    %v1151 = vsel %vm108, %v1149, 0
    %1153 = vmatprep.subr.mxu0 0.0
    %1154 = vmatpush1.msra.mxu0 %v62
    %1155 = vmatprep.subr.mxu0 0.0
    %1156 = vmatpush1.msra.mxu0 %v63
    %1157 = vmatprep.subr.mxu0 0.0
    %1158 = vmatpush1.msra.mxu0 %v64
    %1159 = vmatprep.subr.mxu0 0.0
    %1160 = vmatpush1.msra.mxu0 %v65
    %1161 = vmatprep.subr.mxu0 0.0
    %1162 = vmatpush1.msra.mxu0 %v66
    %1163 = vmatprep.subr.mxu0 0.0
    %1164 = vmatpush1.msra.mxu0 %v67
    %1165 = vmatprep.subr.mxu0 0.0
    %1166 = vmatpush1.msra.mxu0 %v68
    %1167 = vmatprep.subr.mxu0 0.0
    %1168 = vmatpush1.msra.mxu0 %v69
    %1169 = vmatprep.subr.mxu0 0.0
    %1170 = vmatpush1.msra.mxu0 0.0
    %1171 = vmatprep.subr.mxu0 0.0
    %1172 = vmatpush1.msra.mxu0 0.0
    %1173 = vmatprep.subr.mxu0 0.0
    %1174 = vmatpush1.msra.mxu0 0.0
    %1175 = vmatprep.subr.mxu0 0.0
    %1176 = vmatpush1.msra.mxu0 0.0
    %1177 = vmatprep.subr.mxu0 0.0
    %1178 = vmatpush1.msra.mxu0 0.0
    %1179 = vmatprep.subr.mxu0 0.0
    %1180 = vmatpush1.msra.mxu0 0.0
    %1181 = vmatprep.subr.mxu0 0.0
    %1182 = vmatpush1.msra.mxu0 0.0
    %1183 = vmatprep.subr.mxu0 0.0
    %1184 = vmatpush1.msra.mxu0 0.0
    %1185 = vmatprep.subr.mxu0 0.0
    %1186 = vmatpush1.msra.mxu0 0.0
    %1187 = vmatprep.subr.mxu0 0.0
    %1188 = vmatpush1.msra.mxu0 0.0
    %1189 = vmatprep.subr.mxu0 0.0
    %1190 = vmatpush1.msra.mxu0 0.0
    %1191 = vmatprep.subr.mxu0 0.0
    %1192 = vmatpush1.msra.mxu0 0.0
    %1193 = vmatprep.subr.mxu0 0.0
    %1194 = vmatpush1.msra.mxu0 0.0
    %1195 = vmatprep.subr.mxu0 0.0
    %1196 = vmatpush1.msra.mxu0 0.0
    %1197 = vmatprep.subr.mxu0 0.0
    %1198 = vmatpush1.msra.mxu0 0.0
    %1199 = vmatprep.subr.mxu0 0.0
    %1200 = vmatpush1.msra.mxu0 0.0
    %1201 = vmatprep.subr.mxu0 0.0
    %1202 = vmatpush1.msra.mxu0 0.0
    %1203 = vmatprep.subr.mxu0 0.0
    %1204 = vmatpush1.msra.mxu0 0.0
    %1205 = vmatprep.subr.mxu0 0.0
    %1206 = vmatpush1.msra.mxu0 0.0
    %1207 = vmatprep.subr.mxu0 0.0
    %1208 = vmatpush1.msra.mxu0 0.0
    %1209 = vmatprep.subr.mxu0 0.0
    %1210 = vmatpush1.msra.mxu0 0.0
    %1211 = vmatprep.subr.mxu0 0.0
    %1212 = vmatpush1.msra.mxu0 0.0
    %1213 = vmatprep.subr.mxu0 0.0
    %1214 = vmatpush1.msra.mxu0 0.0
    %1215 = vmatprep.subr.mxu0 0.0
    %1216 = vmatpush1.msra.mxu0 0.0
    %1217 = vmatprep.mubr.f32.mxu0 0.0
    %1218 = vmatmul.mubr.f32.gmra.mrb[0].mxu0 %v1151
    %v1219 = vpop.f32.mrb[0].mxu0
    %v1220 = vadd.f32 %v84, %v1219
    %v1221 = vpop.f32.mrb[0].mxu0
    %1222 = vdwg.mxu0
    %v1223 = vxor.u32 %v1220, 2147483648
    %v1224 = vmul.f32 %v1223, 1.442695
    %v1225 = vpow.pop %v1224
    %v1226 = vadd.f32 %v1225, 1.0
    %v1227 = vrcp.pop %v1226
    %v1228 = vmul.f32 1.0, %v1227
    %v1229 = vtanh.pop %v1220
    %v1230 = vmul.f32 %v1228, %v1031
    %1232 = vrot.lane.b32.xlu0 %v1229, 64
    %v1233 = vpop.permute.xlu0 %1232
    %v1235 = vmul.f32 %v1228, %v1233
    %1237 = vrot.lane.b32.xlu0 %v1235, 32
    %v1238 = vpop.permute.xlu0 %1237
    %v1240 = vadd.f32 %v1230, %v1238
    %v1241 = vtanh.pop %v1240
    %1243 = vrot.lane.b32.xlu0 %v1241, 64
    %v1244 = vpop.permute.xlu0 %1243
    %v1246 = vmul.f32 %v1228, %v1244
    %1248 = vrot.lane.b32.xlu0 %v1246, 32
    %v1249 = vpop.permute.xlu0 %1248
    %1252 = vrot.lane.b32.xlu0 %v1143, 64
    %v1253 = vpop.permute.xlu0 %1252
    %v1255 = vsel %vm106, %v1249, %v1253
    %v1257 = vsel %vm108, %v1255, 0
    %1259 = vmatprep.subr.mxu0 0.0
    %1260 = vmatpush1.msra.mxu0 %v71
    %1261 = vmatprep.subr.mxu0 0.0
    %1262 = vmatpush1.msra.mxu0 %v72
    %1263 = vmatprep.subr.mxu0 0.0
    %1264 = vmatpush1.msra.mxu0 %v73
    %1265 = vmatprep.subr.mxu0 0.0
    %1266 = vmatpush1.msra.mxu0 %v74
    %1267 = vmatprep.subr.mxu0 0.0
    %1268 = vmatpush1.msra.mxu0 %v75
    %1269 = vmatprep.subr.mxu0 0.0
    %1270 = vmatpush1.msra.mxu0 %v76
    %1271 = vmatprep.subr.mxu0 0.0
    %1272 = vmatpush1.msra.mxu0 %v77
    %1273 = vmatprep.subr.mxu0 0.0
    %1274 = vmatpush1.msra.mxu0 %v78
    %1275 = vmatprep.subr.mxu0 0.0
    %1276 = vmatpush1.msra.mxu0 0.0
    %1277 = vmatprep.subr.mxu0 0.0
    %1278 = vmatpush1.msra.mxu0 0.0
    %1279 = vmatprep.subr.mxu0 0.0
    %1280 = vmatpush1.msra.mxu0 0.0
    %1281 = vmatprep.subr.mxu0 0.0
    %1282 = vmatpush1.msra.mxu0 0.0
    %1283 = vmatprep.subr.mxu0 0.0
    %1284 = vmatpush1.msra.mxu0 0.0
    %1285 = vmatprep.subr.mxu0 0.0
    %1286 = vmatpush1.msra.mxu0 0.0
    %1287 = vmatprep.subr.mxu0 0.0
    %1288 = vmatpush1.msra.mxu0 0.0
    %1289 = vmatprep.subr.mxu0 0.0
    %1290 = vmatpush1.msra.mxu0 0.0
    %1291 = vmatprep.subr.mxu0 0.0
    %1292 = vmatpush1.msra.mxu0 0.0
    %1293 = vmatprep.subr.mxu0 0.0
    %1294 = vmatpush1.msra.mxu0 0.0
    %1295 = vmatprep.subr.mxu0 0.0
    %1296 = vmatpush1.msra.mxu0 0.0
    %1297 = vmatprep.subr.mxu0 0.0
    %1298 = vmatpush1.msra.mxu0 0.0
    %1299 = vmatprep.subr.mxu0 0.0
    %1300 = vmatpush1.msra.mxu0 0.0
    %1301 = vmatprep.subr.mxu0 0.0
    %1302 = vmatpush1.msra.mxu0 0.0
    %1303 = vmatprep.subr.mxu0 0.0
    %1304 = vmatpush1.msra.mxu0 0.0
    %1305 = vmatprep.subr.mxu0 0.0
    %1306 = vmatpush1.msra.mxu0 0.0
    %1307 = vmatprep.subr.mxu0 0.0
    %1308 = vmatpush1.msra.mxu0 0.0
    %1309 = vmatprep.subr.mxu0 0.0
    %1310 = vmatpush1.msra.mxu0 0.0
    %1311 = vmatprep.subr.mxu0 0.0
    %1312 = vmatpush1.msra.mxu0 0.0
    %1313 = vmatprep.subr.mxu0 0.0
    %1314 = vmatpush1.msra.mxu0 0.0
    %1315 = vmatprep.subr.mxu0 0.0
    %1316 = vmatpush1.msra.mxu0 0.0
    %1317 = vmatprep.subr.mxu0 0.0
    %1318 = vmatpush1.msra.mxu0 0.0
    %1319 = vmatprep.subr.mxu0 0.0
    %1320 = vmatpush1.msra.mxu0 0.0
    %1321 = vmatprep.subr.mxu0 0.0
    %1322 = vmatpush1.msra.mxu0 0.0
    %1323 = vmatprep.mubr.f32.mxu0 0.0
    %1324 = vmatmul.mubr.f32.gmra.mrb[0].mxu0 %v1257
    %v1325 = vpop.f32.mrb[0].mxu0
    %v1326 = vadd.f32 %v92, %v1325
    %v1327 = vpop.f32.mrb[0].mxu0
    %1328 = vdwg.mxu0
    %v1329 = vxor.u32 %v1326, 2147483648
    %v1330 = vmul.f32 %v1329, 1.442695
    %v1331 = vpow.pop %v1330
    %v1332 = vadd.f32 %v1331, 1.0
    %v1333 = vrcp.pop %v1332
    %v1334 = vmul.f32 1.0, %v1333
    %v1335 = vtanh.pop %v1326
    %v1336 = vmul.f32 %v1334, %v1137
    %1338 = vrot.lane.b32.xlu0 %v1335, 64
    %v1339 = vpop.permute.xlu0 %1338
    %v1341 = vmul.f32 %v1334, %v1339
    %1343 = vrot.lane.b32.xlu0 %v1341, 32
    %v1344 = vpop.permute.xlu0 %1343
    %v1346 = vadd.f32 %v1336, %v1344
    %v1347 = vtanh.pop %v1346
    %1349 = vrot.lane.b32.xlu0 %v1347, 64
    %v1350 = vpop.permute.xlu0 %1349
    %v1352 = vmul.f32 %v1334, %v1350
    %s1353 = scalar_lea.vmem [#allocation2], 12
    %v1354 = vld [vmem:[%s1353] sm:$0x3]
    %1355 = vrot.lane.b32.xlu0 %v1246, 64
    %v1356 = vpop.permute.xlu0 %1355
    %v1358 = vsel %vm106, %v1354, %v1356
    %v1360 = vsel %vm108, %v1358, 0
    %1362 = vmatprep.subr.mxu0 0.0
    %1363 = vmatpush1.msra.mxu0 %v62
    %1364 = vmatprep.subr.mxu0 0.0
    %1365 = vmatpush1.msra.mxu0 %v63
    %1366 = vmatprep.subr.mxu0 0.0
    %1367 = vmatpush1.msra.mxu0 %v64
    %1368 = vmatprep.subr.mxu0 0.0
    %1369 = vmatpush1.msra.mxu0 %v65
    %1370 = vmatprep.subr.mxu0 0.0
    %1371 = vmatpush1.msra.mxu0 %v66
    %1372 = vmatprep.subr.mxu0 0.0
    %1373 = vmatpush1.msra.mxu0 %v67
    %1374 = vmatprep.subr.mxu0 0.0
    %1375 = vmatpush1.msra.mxu0 %v68
    %1376 = vmatprep.subr.mxu0 0.0
    %1377 = vmatpush1.msra.mxu0 %v69
    %1378 = vmatprep.subr.mxu0 0.0
    %1379 = vmatpush1.msra.mxu0 0.0
    %1380 = vmatprep.subr.mxu0 0.0
    %1381 = vmatpush1.msra.mxu0 0.0
    %1382 = vmatprep.subr.mxu0 0.0
    %1383 = vmatpush1.msra.mxu0 0.0
    %1384 = vmatprep.subr.mxu0 0.0
    %1385 = vmatpush1.msra.mxu0 0.0
    %1386 = vmatprep.subr.mxu0 0.0
    %1387 = vmatpush1.msra.mxu0 0.0
    %1388 = vmatprep.subr.mxu0 0.0
    %1389 = vmatpush1.msra.mxu0 0.0
    %1390 = vmatprep.subr.mxu0 0.0
    %1391 = vmatpush1.msra.mxu0 0.0
    %1392 = vmatprep.subr.mxu0 0.0
    %1393 = vmatpush1.msra.mxu0 0.0
    %1394 = vmatprep.subr.mxu0 0.0
    %1395 = vmatpush1.msra.mxu0 0.0
    %1396 = vmatprep.subr.mxu0 0.0
    %1397 = vmatpush1.msra.mxu0 0.0
    %1398 = vmatprep.subr.mxu0 0.0
    %1399 = vmatpush1.msra.mxu0 0.0
    %1400 = vmatprep.subr.mxu0 0.0
    %1401 = vmatpush1.msra.mxu0 0.0
    %1402 = vmatprep.subr.mxu0 0.0
    %1403 = vmatpush1.msra.mxu0 0.0
    %1404 = vmatprep.subr.mxu0 0.0
    %1405 = vmatpush1.msra.mxu0 0.0
    %1406 = vmatprep.subr.mxu0 0.0
    %1407 = vmatpush1.msra.mxu0 0.0
    %1408 = vmatprep.subr.mxu0 0.0
    %1409 = vmatpush1.msra.mxu0 0.0
    %1410 = vmatprep.subr.mxu0 0.0
    %1411 = vmatpush1.msra.mxu0 0.0
    %1412 = vmatprep.subr.mxu0 0.0
    %1413 = vmatpush1.msra.mxu0 0.0
    %1414 = vmatprep.subr.mxu0 0.0
    %1415 = vmatpush1.msra.mxu0 0.0
    %1416 = vmatprep.subr.mxu0 0.0
    %1417 = vmatpush1.msra.mxu0 0.0
    %1418 = vmatprep.subr.mxu0 0.0
    %1419 = vmatpush1.msra.mxu0 0.0
    %1420 = vmatprep.subr.mxu0 0.0
    %1421 = vmatpush1.msra.mxu0 0.0
    %1422 = vmatprep.subr.mxu0 0.0
    %1423 = vmatpush1.msra.mxu0 0.0
    %1424 = vmatprep.subr.mxu0 0.0
    %1425 = vmatpush1.msra.mxu0 0.0
    %1426 = vmatprep.mubr.f32.mxu0 0.0
    %1427 = vmatmul.mubr.f32.gmra.mrb[0].mxu0 %v1360
    %v1428 = vpop.f32.mrb[0].mxu0
    %v1429 = vadd.f32 %v84, %v1428
    %v1430 = vpop.f32.mrb[0].mxu0
    %1431 = vdwg.mxu0
    %v1432 = vxor.u32 %v1429, 2147483648
    %v1433 = vmul.f32 %v1432, 1.442695
    %v1434 = vpow.pop %v1433
    %v1435 = vadd.f32 %v1434, 1.0
    %v1436 = vrcp.pop %v1435
    %v1437 = vmul.f32 1.0, %v1436
    %v1438 = vtanh.pop %v1429
    %v1439 = vmul.f32 %v1437, %v1240
    %1441 = vrot.lane.b32.xlu0 %v1438, 64
    %v1442 = vpop.permute.xlu0 %1441
    %v1444 = vmul.f32 %v1437, %v1442
    %1446 = vrot.lane.b32.xlu0 %v1444, 32
    %v1447 = vpop.permute.xlu0 %1446
    %v1449 = vadd.f32 %v1439, %v1447
    %v1450 = vtanh.pop %v1449
    %1452 = vrot.lane.b32.xlu0 %v1450, 64
    %v1453 = vpop.permute.xlu0 %1452
    %v1455 = vmul.f32 %v1437, %v1453
    %1457 = vrot.lane.b32.xlu0 %v1455, 32
    %v1458 = vpop.permute.xlu0 %1457
    %1461 = vrot.lane.b32.xlu0 %v1352, 64
    %v1462 = vpop.permute.xlu0 %1461
    %v1464 = vsel %vm106, %v1458, %v1462
    %v1466 = vsel %vm108, %v1464, 0
    %1468 = vmatprep.subr.mxu0 0.0
    %1469 = vmatpush1.msra.mxu0 %v71
    %1470 = vmatprep.subr.mxu0 0.0
    %1471 = vmatpush1.msra.mxu0 %v72
    %1472 = vmatprep.subr.mxu0 0.0
    %1473 = vmatpush1.msra.mxu0 %v73
    %1474 = vmatprep.subr.mxu0 0.0
    %1475 = vmatpush1.msra.mxu0 %v74
    %1476 = vmatprep.subr.mxu0 0.0
    %1477 = vmatpush1.msra.mxu0 %v75
    %1478 = vmatprep.subr.mxu0 0.0
    %1479 = vmatpush1.msra.mxu0 %v76
    %1480 = vmatprep.subr.mxu0 0.0
    %1481 = vmatpush1.msra.mxu0 %v77
    %1482 = vmatprep.subr.mxu0 0.0
    %1483 = vmatpush1.msra.mxu0 %v78
    %1484 = vmatprep.subr.mxu0 0.0
    %1485 = vmatpush1.msra.mxu0 0.0
    %1486 = vmatprep.subr.mxu0 0.0
    %1487 = vmatpush1.msra.mxu0 0.0
    %1488 = vmatprep.subr.mxu0 0.0
    %1489 = vmatpush1.msra.mxu0 0.0
    %1490 = vmatprep.subr.mxu0 0.0
    %1491 = vmatpush1.msra.mxu0 0.0
    %1492 = vmatprep.subr.mxu0 0.0
    %1493 = vmatpush1.msra.mxu0 0.0
    %1494 = vmatprep.subr.mxu0 0.0
    %1495 = vmatpush1.msra.mxu0 0.0
    %1496 = vmatprep.subr.mxu0 0.0
    %1497 = vmatpush1.msra.mxu0 0.0
    %1498 = vmatprep.subr.mxu0 0.0
    %1499 = vmatpush1.msra.mxu0 0.0
    %1500 = vmatprep.subr.mxu0 0.0
    %1501 = vmatpush1.msra.mxu0 0.0
    %1502 = vmatprep.subr.mxu0 0.0
    %1503 = vmatpush1.msra.mxu0 0.0
    %1504 = vmatprep.subr.mxu0 0.0
    %1505 = vmatpush1.msra.mxu0 0.0
    %1506 = vmatprep.subr.mxu0 0.0
    %1507 = vmatpush1.msra.mxu0 0.0
    %1508 = vmatprep.subr.mxu0 0.0
    %1509 = vmatpush1.msra.mxu0 0.0
    %1510 = vmatprep.subr.mxu0 0.0
    %1511 = vmatpush1.msra.mxu0 0.0
    %1512 = vmatprep.subr.mxu0 0.0
    %1513 = vmatpush1.msra.mxu0 0.0
    %1514 = vmatprep.subr.mxu0 0.0
    %1515 = vmatpush1.msra.mxu0 0.0
    %1516 = vmatprep.subr.mxu0 0.0
    %1517 = vmatpush1.msra.mxu0 0.0
    %1518 = vmatprep.subr.mxu0 0.0
    %1519 = vmatpush1.msra.mxu0 0.0
    %1520 = vmatprep.subr.mxu0 0.0
    %1521 = vmatpush1.msra.mxu0 0.0
    %1522 = vmatprep.subr.mxu0 0.0
    %1523 = vmatpush1.msra.mxu0 0.0
    %1524 = vmatprep.subr.mxu0 0.0
    %1525 = vmatpush1.msra.mxu0 0.0
    %1526 = vmatprep.subr.mxu0 0.0
    %1527 = vmatpush1.msra.mxu0 0.0
    %1528 = vmatprep.subr.mxu0 0.0
    %1529 = vmatpush1.msra.mxu0 0.0
    %1530 = vmatprep.subr.mxu0 0.0
    %1531 = vmatpush1.msra.mxu0 0.0
    %1532 = vmatprep.mubr.f32.mxu0 0.0
    %1533 = vmatmul.mubr.f32.gmra.mrb[0].mxu0 %v1466
    %v1534 = vpop.f32.mrb[0].mxu0
    %v1535 = vadd.f32 %v92, %v1534
    %v1536 = vpop.f32.mrb[0].mxu0
    %1537 = vdwg.mxu0
    %v1538 = vxor.u32 %v1535, 2147483648
    %v1539 = vmul.f32 %v1538, 1.442695
    %v1540 = vpow.pop %v1539
    %v1541 = vadd.f32 %v1540, 1.0
    %v1542 = vrcp.pop %v1541
    %v1543 = vmul.f32 1.0, %v1542
    %v1544 = vtanh.pop %v1535
    %v1545 = vmul.f32 %v1543, %v1346
    %1547 = vrot.lane.b32.xlu0 %v1544, 64
    %v1548 = vpop.permute.xlu0 %1547
    %v1550 = vmul.f32 %v1543, %v1548
    %1552 = vrot.lane.b32.xlu0 %v1550, 32
    %v1553 = vpop.permute.xlu0 %1552
    %v1555 = vadd.f32 %v1545, %v1553
    %v1556 = vtanh.pop %v1555
    %1558 = vrot.lane.b32.xlu0 %v1556, 64
    %v1559 = vpop.permute.xlu0 %1558
    %v1561 = vmul.f32 %v1543, %v1559
    %s1562 = scalar_lea.vmem [#allocation2], 14
    %v1563 = vld [vmem:[%s1562] sm:$0x3]
    %1564 = vrot.lane.b32.xlu0 %v1455, 64
    %v1565 = vpop.permute.xlu0 %1564
    %v1567 = vsel %vm106, %v1563, %v1565
    %v1569 = vsel %vm108, %v1567, 0
    %1571 = vmatprep.subr.mxu0 0.0
    %1572 = vmatpush1.msra.mxu0 %v62
    %1573 = vmatprep.subr.mxu0 0.0
    %1574 = vmatpush1.msra.mxu0 %v63
    %1575 = vmatprep.subr.mxu0 0.0
    %1576 = vmatpush1.msra.mxu0 %v64
    %1577 = vmatprep.subr.mxu0 0.0
    %1578 = vmatpush1.msra.mxu0 %v65
    %1579 = vmatprep.subr.mxu0 0.0
    %1580 = vmatpush1.msra.mxu0 %v66
    %1581 = vmatprep.subr.mxu0 0.0
    %1582 = vmatpush1.msra.mxu0 %v67
    %1583 = vmatprep.subr.mxu0 0.0
    %1584 = vmatpush1.msra.mxu0 %v68
    %1585 = vmatprep.subr.mxu0 0.0
    %1586 = vmatpush1.msra.mxu0 %v69
    %1587 = vmatprep.subr.mxu0 0.0
    %1588 = vmatpush1.msra.mxu0 0.0
    %1589 = vmatprep.subr.mxu0 0.0
    %1590 = vmatpush1.msra.mxu0 0.0
    %1591 = vmatprep.subr.mxu0 0.0
    %1592 = vmatpush1.msra.mxu0 0.0
    %1593 = vmatprep.subr.mxu0 0.0
    %1594 = vmatpush1.msra.mxu0 0.0
    %1595 = vmatprep.subr.mxu0 0.0
    %1596 = vmatpush1.msra.mxu0 0.0
    %1597 = vmatprep.subr.mxu0 0.0
    %1598 = vmatpush1.msra.mxu0 0.0
    %1599 = vmatprep.subr.mxu0 0.0
    %1600 = vmatpush1.msra.mxu0 0.0
    %1601 = vmatprep.subr.mxu0 0.0
    %1602 = vmatpush1.msra.mxu0 0.0
    %1603 = vmatprep.subr.mxu0 0.0
    %1604 = vmatpush1.msra.mxu0 0.0
    %1605 = vmatprep.subr.mxu0 0.0
    %1606 = vmatpush1.msra.mxu0 0.0
    %1607 = vmatprep.subr.mxu0 0.0
    %1608 = vmatpush1.msra.mxu0 0.0
    %1609 = vmatprep.subr.mxu0 0.0
    %1610 = vmatpush1.msra.mxu0 0.0
    %1611 = vmatprep.subr.mxu0 0.0
    %1612 = vmatpush1.msra.mxu0 0.0
    %1613 = vmatprep.subr.mxu0 0.0
    %1614 = vmatpush1.msra.mxu0 0.0
    %1615 = vmatprep.subr.mxu0 0.0
    %1616 = vmatpush1.msra.mxu0 0.0
    %1617 = vmatprep.subr.mxu0 0.0
    %1618 = vmatpush1.msra.mxu0 0.0
    %1619 = vmatprep.subr.mxu0 0.0
    %1620 = vmatpush1.msra.mxu0 0.0
    %1621 = vmatprep.subr.mxu0 0.0
    %1622 = vmatpush1.msra.mxu0 0.0
    %1623 = vmatprep.subr.mxu0 0.0
    %1624 = vmatpush1.msra.mxu0 0.0
    %1625 = vmatprep.subr.mxu0 0.0
    %1626 = vmatpush1.msra.mxu0 0.0
    %1627 = vmatprep.subr.mxu0 0.0
    %1628 = vmatpush1.msra.mxu0 0.0
    %1629 = vmatprep.subr.mxu0 0.0
    %1630 = vmatpush1.msra.mxu0 0.0
    %1631 = vmatprep.subr.mxu0 0.0
    %1632 = vmatpush1.msra.mxu0 0.0
    %1633 = vmatprep.subr.mxu0 0.0
    %1634 = vmatpush1.msra.mxu0 0.0
    %1635 = vmatprep.mubr.f32.mxu0 0.0
    %1636 = vmatmul.mubr.f32.gmra.mrb[0].mxu0 %v1569
    %v1637 = vpop.f32.mrb[0].mxu0
    %v1638 = vadd.f32 %v84, %v1637
    %v1639 = vpop.f32.mrb[0].mxu0
    %1640 = vdwg.mxu0
    %v1641 = vxor.u32 %v1638, 2147483648
    %v1642 = vmul.f32 %v1641, 1.442695
    %v1643 = vpow.pop %v1642
    %v1644 = vadd.f32 %v1643, 1.0
    %v1645 = vrcp.pop %v1644
    %v1646 = vmul.f32 1.0, %v1645
    %v1647 = vtanh.pop %v1638
    %v1648 = vmul.f32 %v1646, %v1449
    %1650 = vrot.lane.b32.xlu0 %v1647, 64
    %v1651 = vpop.permute.xlu0 %1650
    %v1653 = vmul.f32 %v1646, %v1651
    %1655 = vrot.lane.b32.xlu0 %v1653, 32
    %v1656 = vpop.permute.xlu0 %1655
    %v1658 = vadd.f32 %v1648, %v1656
    %v1659 = vtanh.pop %v1658
    %1661 = vrot.lane.b32.xlu0 %v1659, 64
    %v1662 = vpop.permute.xlu0 %1661
    %v1664 = vmul.f32 %v1646, %v1662
    %1666 = vrot.lane.b32.xlu0 %v1664, 32
    %v1667 = vpop.permute.xlu0 %1666
    %1670 = vrot.lane.b32.xlu0 %v1561, 64
    %v1671 = vpop.permute.xlu0 %1670
    %v1673 = vsel %vm106, %v1667, %v1671
    %v1675 = vsel %vm108, %v1673, 0
    %1677 = vmatprep.subr.mxu0 0.0
    %1678 = vmatpush1.msra.mxu0 %v71
    %1679 = vmatprep.subr.mxu0 0.0
    %1680 = vmatpush1.msra.mxu0 %v72
    %1681 = vmatprep.subr.mxu0 0.0
    %1682 = vmatpush1.msra.mxu0 %v73
    %1683 = vmatprep.subr.mxu0 0.0
    %1684 = vmatpush1.msra.mxu0 %v74
    %1685 = vmatprep.subr.mxu0 0.0
    %1686 = vmatpush1.msra.mxu0 %v75
    %1687 = vmatprep.subr.mxu0 0.0
    %1688 = vmatpush1.msra.mxu0 %v76
    %1689 = vmatprep.subr.mxu0 0.0
    %1690 = vmatpush1.msra.mxu0 %v77
    %1691 = vmatprep.subr.mxu0 0.0
    %1692 = vmatpush1.msra.mxu0 %v78
    %1693 = vmatprep.subr.mxu0 0.0
    %1694 = vmatpush1.msra.mxu0 0.0
    %1695 = vmatprep.subr.mxu0 0.0
    %1696 = vmatpush1.msra.mxu0 0.0
    %1697 = vmatprep.subr.mxu0 0.0
    %1698 = vmatpush1.msra.mxu0 0.0
    %1699 = vmatprep.subr.mxu0 0.0
    %1700 = vmatpush1.msra.mxu0 0.0
    %1701 = vmatprep.subr.mxu0 0.0
    %1702 = vmatpush1.msra.mxu0 0.0
    %1703 = vmatprep.subr.mxu0 0.0
    %1704 = vmatpush1.msra.mxu0 0.0
    %1705 = vmatprep.subr.mxu0 0.0
    %1706 = vmatpush1.msra.mxu0 0.0
    %1707 = vmatprep.subr.mxu0 0.0
    %1708 = vmatpush1.msra.mxu0 0.0
    %1709 = vmatprep.subr.mxu0 0.0
    %1710 = vmatpush1.msra.mxu0 0.0
    %1711 = vmatprep.subr.mxu0 0.0
    %1712 = vmatpush1.msra.mxu0 0.0
    %1713 = vmatprep.subr.mxu0 0.0
    %1714 = vmatpush1.msra.mxu0 0.0
    %1715 = vmatprep.subr.mxu0 0.0
    %1716 = vmatpush1.msra.mxu0 0.0
    %1717 = vmatprep.subr.mxu0 0.0
    %1718 = vmatpush1.msra.mxu0 0.0
    %1719 = vmatprep.subr.mxu0 0.0
    %1720 = vmatpush1.msra.mxu0 0.0
    %1721 = vmatprep.subr.mxu0 0.0
    %1722 = vmatpush1.msra.mxu0 0.0
    %1723 = vmatprep.subr.mxu0 0.0
    %1724 = vmatpush1.msra.mxu0 0.0
    %1725 = vmatprep.subr.mxu0 0.0
    %1726 = vmatpush1.msra.mxu0 0.0
    %1727 = vmatprep.subr.mxu0 0.0
    %1728 = vmatpush1.msra.mxu0 0.0
    %1729 = vmatprep.subr.mxu0 0.0
    %1730 = vmatpush1.msra.mxu0 0.0
    %1731 = vmatprep.subr.mxu0 0.0
    %1732 = vmatpush1.msra.mxu0 0.0
    %1733 = vmatprep.subr.mxu0 0.0
    %1734 = vmatpush1.msra.mxu0 0.0
    %1735 = vmatprep.subr.mxu0 0.0
    %1736 = vmatpush1.msra.mxu0 0.0
    %1737 = vmatprep.subr.mxu0 0.0
    %1738 = vmatpush1.msra.mxu0 0.0
    %1739 = vmatprep.subr.mxu0 0.0
    %1740 = vmatpush1.msra.mxu0 0.0
    %1741 = vmatprep.mubr.f32.mxu0 0.0
    %1742 = vmatmul.mubr.f32.gmra.mrb[0].mxu0 %v1675
    %v1743 = vpop.f32.mrb[0].mxu0
    %v1744 = vadd.f32 %v92, %v1743
    %v1745 = vpop.f32.mrb[0].mxu0
    %1746 = vdwg.mxu0
    %v1747 = vxor.u32 %v1744, 2147483648
    %v1748 = vmul.f32 %v1747, 1.442695
    %v1749 = vpow.pop %v1748
    %v1750 = vadd.f32 %v1749, 1.0
    %v1751 = vrcp.pop %v1750
    %v1752 = vmul.f32 1.0, %v1751
    %v1753 = vtanh.pop %v1744
    %v1754 = vmul.f32 %v1752, %v1555
    %1756 = vrot.lane.b32.xlu0 %v1753, 64
    %v1757 = vpop.permute.xlu0 %1756
    %v1759 = vmul.f32 %v1752, %v1757
    %1761 = vrot.lane.b32.xlu0 %v1759, 32
    %v1762 = vpop.permute.xlu0 %1761
    %v1764 = vadd.f32 %v1754, %v1762
    %v1765 = vtanh.pop %v1764
    %1767 = vrot.lane.b32.xlu0 %v1765, 64
    %v1768 = vpop.permute.xlu0 %1767
    %v1770 = vmul.f32 %v1752, %v1768
    %1772 = vrot.lane.b32.xlu0 %v1770, 32
    %v1773 = vpop.permute.xlu0 %1772
    %v1774 = vsel %vm106, %v1773, 0
    %1776 = vmatprep.subr.mxu0 0.0
    %1777 = vmatpush1.msra.mxu0 %v94
    %1778 = vmatprep.subr.mxu0 0.0
    %1779 = vmatpush1.msra.mxu0 %v95
    %1780 = vmatprep.subr.mxu0 0.0
    %1781 = vmatpush1.msra.mxu0 %v96
    %1782 = vmatprep.subr.mxu0 0.0
    %1783 = vmatpush1.msra.mxu0 %v97
    %1784 = vmatprep.subr.mxu0 0.0
    %1785 = vmatpush1.msra.mxu0 0.0
    %1786 = vmatprep.subr.mxu0 0.0
    %1787 = vmatpush1.msra.mxu0 0.0
    %1788 = vmatprep.subr.mxu0 0.0
    %1789 = vmatpush1.msra.mxu0 0.0
    %1790 = vmatprep.subr.mxu0 0.0
    %1791 = vmatpush1.msra.mxu0 0.0
    %1792 = vmatprep.subr.mxu0 0.0
    %1793 = vmatpush1.msra.mxu0 0.0
    %1794 = vmatprep.subr.mxu0 0.0
    %1795 = vmatpush1.msra.mxu0 0.0
    %1796 = vmatprep.subr.mxu0 0.0
    %1797 = vmatpush1.msra.mxu0 0.0
    %1798 = vmatprep.subr.mxu0 0.0
    %1799 = vmatpush1.msra.mxu0 0.0
    %1800 = vmatprep.subr.mxu0 0.0
    %1801 = vmatpush1.msra.mxu0 0.0
    %1802 = vmatprep.subr.mxu0 0.0
    %1803 = vmatpush1.msra.mxu0 0.0
    %1804 = vmatprep.subr.mxu0 0.0
    %1805 = vmatpush1.msra.mxu0 0.0
    %1806 = vmatprep.subr.mxu0 0.0
    %1807 = vmatpush1.msra.mxu0 0.0
    %1808 = vmatprep.subr.mxu0 0.0
    %1809 = vmatpush1.msra.mxu0 0.0
    %1810 = vmatprep.subr.mxu0 0.0
    %1811 = vmatpush1.msra.mxu0 0.0
    %1812 = vmatprep.subr.mxu0 0.0
    %1813 = vmatpush1.msra.mxu0 0.0
    %1814 = vmatprep.subr.mxu0 0.0
    %1815 = vmatpush1.msra.mxu0 0.0
    %1816 = vmatprep.subr.mxu0 0.0
    %1817 = vmatpush1.msra.mxu0 0.0
    %1818 = vmatprep.subr.mxu0 0.0
    %1819 = vmatpush1.msra.mxu0 0.0
    %1820 = vmatprep.subr.mxu0 0.0
    %1821 = vmatpush1.msra.mxu0 0.0
    %1822 = vmatprep.subr.mxu0 0.0
    %1823 = vmatpush1.msra.mxu0 0.0
    %1824 = vmatprep.subr.mxu0 0.0
    %1825 = vmatpush1.msra.mxu0 0.0
    %1826 = vmatprep.subr.mxu0 0.0
    %1827 = vmatpush1.msra.mxu0 0.0
    %1828 = vmatprep.subr.mxu0 0.0
    %1829 = vmatpush1.msra.mxu0 0.0
    %1830 = vmatprep.subr.mxu0 0.0
    %1831 = vmatpush1.msra.mxu0 0.0
    %1832 = vmatprep.subr.mxu0 0.0
    %1833 = vmatpush1.msra.mxu0 0.0
    %1834 = vmatprep.subr.mxu0 0.0
    %1835 = vmatpush1.msra.mxu0 0.0
    %1836 = vmatprep.subr.mxu0 0.0
    %1837 = vmatpush1.msra.mxu0 0.0
    %1838 = vmatprep.subr.mxu0 0.0
    %1839 = vmatpush1.msra.mxu0 0.0
    %1840 = vmatprep.mubr.f32.mxu0 0.0
    %1841 = vmatmul.mubr.f32.gmra.mrb[0].mxu0 %v1774
    %v1842 = vpop.f32.mrb[0].mxu0
    %v1843 = vadd.f32 %v103, %v1842
    %v1844 = vpop.f32.mrb[0].mxu0
    %1845 = vdwg.mxu0
    %1846 = vst [vmem:[#allocation8] sm:$0x3] %v1843
    %1847 = vrot.lane.b32.xlu0 %v1664, 64
    %v1848 = vpop.permute.xlu0 %1847
    %v1850 = vsel %vm106, %v1843, %v1848
    %v1852 = vsel %vm108, %v1850, 0
    %1854 = vmatprep.subr.mxu0 0.0
    %1855 = vmatpush1.msra.mxu0 %v62
    %1856 = vmatprep.subr.mxu0 0.0
    %1857 = vmatpush1.msra.mxu0 %v63
    %1858 = vmatprep.subr.mxu0 0.0
    %1859 = vmatpush1.msra.mxu0 %v64
    %1860 = vmatprep.subr.mxu0 0.0
    %1861 = vmatpush1.msra.mxu0 %v65
    %1862 = vmatprep.subr.mxu0 0.0
    %1863 = vmatpush1.msra.mxu0 %v66
    %1864 = vmatprep.subr.mxu0 0.0
    %1865 = vmatpush1.msra.mxu0 %v67
    %1866 = vmatprep.subr.mxu0 0.0
    %1867 = vmatpush1.msra.mxu0 %v68
    %1868 = vmatprep.subr.mxu0 0.0
    %1869 = vmatpush1.msra.mxu0 %v69
    %1870 = vmatprep.subr.mxu0 0.0
    %1871 = vmatpush1.msra.mxu0 0.0
    %1872 = vmatprep.subr.mxu0 0.0
    %1873 = vmatpush1.msra.mxu0 0.0
    %1874 = vmatprep.subr.mxu0 0.0
    %1875 = vmatpush1.msra.mxu0 0.0
    %1876 = vmatprep.subr.mxu0 0.0
    %1877 = vmatpush1.msra.mxu0 0.0
    %1878 = vmatprep.subr.mxu0 0.0
    %1879 = vmatpush1.msra.mxu0 0.0
    %1880 = vmatprep.subr.mxu0 0.0
    %1881 = vmatpush1.msra.mxu0 0.0
    %1882 = vmatprep.subr.mxu0 0.0
    %1883 = vmatpush1.msra.mxu0 0.0
    %1884 = vmatprep.subr.mxu0 0.0
    %1885 = vmatpush1.msra.mxu0 0.0
    %1886 = vmatprep.subr.mxu0 0.0
    %1887 = vmatpush1.msra.mxu0 0.0
    %1888 = vmatprep.subr.mxu0 0.0
    %1889 = vmatpush1.msra.mxu0 0.0
    %1890 = vmatprep.subr.mxu0 0.0
    %1891 = vmatpush1.msra.mxu0 0.0
    %1892 = vmatprep.subr.mxu0 0.0
    %1893 = vmatpush1.msra.mxu0 0.0
    %1894 = vmatprep.subr.mxu0 0.0
    %1895 = vmatpush1.msra.mxu0 0.0
    %1896 = vmatprep.subr.mxu0 0.0
    %1897 = vmatpush1.msra.mxu0 0.0
    %1898 = vmatprep.subr.mxu0 0.0
    %1899 = vmatpush1.msra.mxu0 0.0
    %1900 = vmatprep.subr.mxu0 0.0
    %1901 = vmatpush1.msra.mxu0 0.0
    %1902 = vmatprep.subr.mxu0 0.0
    %1903 = vmatpush1.msra.mxu0 0.0
    %1904 = vmatprep.subr.mxu0 0.0
    %1905 = vmatpush1.msra.mxu0 0.0
    %1906 = vmatprep.subr.mxu0 0.0
    %1907 = vmatpush1.msra.mxu0 0.0
    %1908 = vmatprep.subr.mxu0 0.0
    %1909 = vmatpush1.msra.mxu0 0.0
    %1910 = vmatprep.subr.mxu0 0.0
    %1911 = vmatpush1.msra.mxu0 0.0
    %1912 = vmatprep.subr.mxu0 0.0
    %1913 = vmatpush1.msra.mxu0 0.0
    %1914 = vmatprep.subr.mxu0 0.0
    %1915 = vmatpush1.msra.mxu0 0.0
    %1916 = vmatprep.subr.mxu0 0.0
    %1917 = vmatpush1.msra.mxu0 0.0
    %1918 = vmatprep.mubr.f32.mxu0 0.0
    %1919 = vmatmul.mubr.f32.gmra.mrb[0].mxu0 %v1852
    %v1920 = vpop.f32.mrb[0].mxu0
    %v1921 = vadd.f32 %v84, %v1920
    %v1922 = vpop.f32.mrb[0].mxu0
    %1923 = vdwg.mxu0
    %v1924 = vxor.u32 %v1921, 2147483648
    %v1925 = vmul.f32 %v1924, 1.442695
    %v1926 = vpow.pop %v1925
    %v1927 = vadd.f32 %v1926, 1.0
    %v1928 = vrcp.pop %v1927
    %v1929 = vmul.f32 1.0, %v1928
    %v1930 = vtanh.pop %v1921
    %v1931 = vmul.f32 %v1929, %v1658
    %1933 = vrot.lane.b32.xlu0 %v1930, 64
    %v1934 = vpop.permute.xlu0 %1933
    %v1936 = vmul.f32 %v1929, %v1934
    %1938 = vrot.lane.b32.xlu0 %v1936, 32
    %v1939 = vpop.permute.xlu0 %1938
    %v1941 = vadd.f32 %v1931, %v1939
    %v1942 = vtanh.pop %v1941
    %1944 = vrot.lane.b32.xlu0 %v1942, 64
    %v1945 = vpop.permute.xlu0 %1944
    %v1947 = vmul.f32 %v1929, %v1945
    %1949 = vrot.lane.b32.xlu0 %v1947, 32
    %v1950 = vpop.permute.xlu0 %1949
    %1952 = vrot.lane.b32.xlu0 %v1770, 64
    %v1953 = vpop.permute.xlu0 %1952
    %v1955 = vsel %vm106, %v1950, %v1953
    %v1957 = vsel %vm108, %v1955, 0
    %1959 = vmatprep.subr.mxu0 0.0
    %1960 = vmatpush1.msra.mxu0 %v71
    %1961 = vmatprep.subr.mxu0 0.0
    %1962 = vmatpush1.msra.mxu0 %v72
    %1963 = vmatprep.subr.mxu0 0.0
    %1964 = vmatpush1.msra.mxu0 %v73
    %1965 = vmatprep.subr.mxu0 0.0
    %1966 = vmatpush1.msra.mxu0 %v74
    %1967 = vmatprep.subr.mxu0 0.0
    %1968 = vmatpush1.msra.mxu0 %v75
    %1969 = vmatprep.subr.mxu0 0.0
    %1970 = vmatpush1.msra.mxu0 %v76
    %1971 = vmatprep.subr.mxu0 0.0
    %1972 = vmatpush1.msra.mxu0 %v77
    %1973 = vmatprep.subr.mxu0 0.0
    %1974 = vmatpush1.msra.mxu0 %v78
    %1975 = vmatprep.subr.mxu0 0.0
    %1976 = vmatpush1.msra.mxu0 0.0
    %1977 = vmatprep.subr.mxu0 0.0
    %1978 = vmatpush1.msra.mxu0 0.0
    %1979 = vmatprep.subr.mxu0 0.0
    %1980 = vmatpush1.msra.mxu0 0.0
    %1981 = vmatprep.subr.mxu0 0.0
    %1982 = vmatpush1.msra.mxu0 0.0
    %1983 = vmatprep.subr.mxu0 0.0
    %1984 = vmatpush1.msra.mxu0 0.0
    %1985 = vmatprep.subr.mxu0 0.0
    %1986 = vmatpush1.msra.mxu0 0.0
    %1987 = vmatprep.subr.mxu0 0.0
    %1988 = vmatpush1.msra.mxu0 0.0
    %1989 = vmatprep.subr.mxu0 0.0
    %1990 = vmatpush1.msra.mxu0 0.0
    %1991 = vmatprep.subr.mxu0 0.0
    %1992 = vmatpush1.msra.mxu0 0.0
    %1993 = vmatprep.subr.mxu0 0.0
    %1994 = vmatpush1.msra.mxu0 0.0
    %1995 = vmatprep.subr.mxu0 0.0
    %1996 = vmatpush1.msra.mxu0 0.0
    %1997 = vmatprep.subr.mxu0 0.0
    %1998 = vmatpush1.msra.mxu0 0.0
    %1999 = vmatprep.subr.mxu0 0.0
    %2000 = vmatpush1.msra.mxu0 0.0
    %2001 = vmatprep.subr.mxu0 0.0
    %2002 = vmatpush1.msra.mxu0 0.0
    %2003 = vmatprep.subr.mxu0 0.0
    %2004 = vmatpush1.msra.mxu0 0.0
    %2005 = vmatprep.subr.mxu0 0.0
    %2006 = vmatpush1.msra.mxu0 0.0
    %2007 = vmatprep.subr.mxu0 0.0
    %2008 = vmatpush1.msra.mxu0 0.0
    %2009 = vmatprep.subr.mxu0 0.0
    %2010 = vmatpush1.msra.mxu0 0.0
    %2011 = vmatprep.subr.mxu0 0.0
    %2012 = vmatpush1.msra.mxu0 0.0
    %2013 = vmatprep.subr.mxu0 0.0
    %2014 = vmatpush1.msra.mxu0 0.0
    %2015 = vmatprep.subr.mxu0 0.0
    %2016 = vmatpush1.msra.mxu0 0.0
    %2017 = vmatprep.subr.mxu0 0.0
    %2018 = vmatpush1.msra.mxu0 0.0
    %2019 = vmatprep.subr.mxu0 0.0
    %2020 = vmatpush1.msra.mxu0 0.0
    %2021 = vmatprep.subr.mxu0 0.0
    %2022 = vmatpush1.msra.mxu0 0.0
    %2023 = vmatprep.mubr.f32.mxu0 0.0
    %2024 = vmatmul.mubr.f32.gmra.mrb[0].mxu0 %v1957
    %v2025 = vpop.f32.mrb[0].mxu0
    %v2026 = vadd.f32 %v92, %v2025
    %v2027 = vpop.f32.mrb[0].mxu0
    %2028 = vdwg.mxu0
    %v2029 = vxor.u32 %v2026, 2147483648
    %v2030 = vmul.f32 %v2029, 1.442695
    %v2031 = vpow.pop %v2030
    %v2032 = vadd.f32 %v2031, 1.0
    %v2033 = vrcp.pop %v2032
    %v2034 = vmul.f32 1.0, %v2033
    %v2035 = vtanh.pop %v2026
    %v2036 = vmul.f32 %v2034, %v1764
    %2038 = vrot.lane.b32.xlu0 %v2035, 64
    %v2039 = vpop.permute.xlu0 %2038
    %v2041 = vmul.f32 %v2034, %v2039
    %2043 = vrot.lane.b32.xlu0 %v2041, 32
    %v2044 = vpop.permute.xlu0 %2043
    %v2046 = vadd.f32 %v2036, %v2044
    %v2047 = vtanh.pop %v2046
    %2049 = vrot.lane.b32.xlu0 %v2047, 64
    %v2050 = vpop.permute.xlu0 %2049
    %v2052 = vmul.f32 %v2034, %v2050
    %2054 = vrot.lane.b32.xlu0 %v2052, 32
    %v2055 = vpop.permute.xlu0 %2054
    %v2056 = vsel %vm106, %v2055, 0
    %2058 = vmatprep.subr.mxu0 0.0
    %2059 = vmatpush1.msra.mxu0 %v94
    %2060 = vmatprep.subr.mxu0 0.0
    %2061 = vmatpush1.msra.mxu0 %v95
    %2062 = vmatprep.subr.mxu0 0.0
    %2063 = vmatpush1.msra.mxu0 %v96
    %2064 = vmatprep.subr.mxu0 0.0
    %2065 = vmatpush1.msra.mxu0 %v97
    %2066 = vmatprep.subr.mxu0 0.0
    %2067 = vmatpush1.msra.mxu0 0.0
    %2068 = vmatprep.subr.mxu0 0.0
    %2069 = vmatpush1.msra.mxu0 0.0
    %2070 = vmatprep.subr.mxu0 0.0
    %2071 = vmatpush1.msra.mxu0 0.0
    %2072 = vmatprep.subr.mxu0 0.0
    %2073 = vmatpush1.msra.mxu0 0.0
    %2074 = vmatprep.subr.mxu0 0.0
    %2075 = vmatpush1.msra.mxu0 0.0
    %2076 = vmatprep.subr.mxu0 0.0
    %2077 = vmatpush1.msra.mxu0 0.0
    %2078 = vmatprep.subr.mxu0 0.0
    %2079 = vmatpush1.msra.mxu0 0.0
    %2080 = vmatprep.subr.mxu0 0.0
    %2081 = vmatpush1.msra.mxu0 0.0
    %2082 = vmatprep.subr.mxu0 0.0
    %2083 = vmatpush1.msra.mxu0 0.0
    %2084 = vmatprep.subr.mxu0 0.0
    %2085 = vmatpush1.msra.mxu0 0.0
    %2086 = vmatprep.subr.mxu0 0.0
    %2087 = vmatpush1.msra.mxu0 0.0
    %2088 = vmatprep.subr.mxu0 0.0
    %2089 = vmatpush1.msra.mxu0 0.0
    %2090 = vmatprep.subr.mxu0 0.0
    %2091 = vmatpush1.msra.mxu0 0.0
    %2092 = vmatprep.subr.mxu0 0.0
    %2093 = vmatpush1.msra.mxu0 0.0
    %2094 = vmatprep.subr.mxu0 0.0
    %2095 = vmatpush1.msra.mxu0 0.0
    %2096 = vmatprep.subr.mxu0 0.0
    %2097 = vmatpush1.msra.mxu0 0.0
    %2098 = vmatprep.subr.mxu0 0.0
    %2099 = vmatpush1.msra.mxu0 0.0
    %2100 = vmatprep.subr.mxu0 0.0
    %2101 = vmatpush1.msra.mxu0 0.0
    %2102 = vmatprep.subr.mxu0 0.0
    %2103 = vmatpush1.msra.mxu0 0.0
    %2104 = vmatprep.subr.mxu0 0.0
    %2105 = vmatpush1.msra.mxu0 0.0
    %2106 = vmatprep.subr.mxu0 0.0
    %2107 = vmatpush1.msra.mxu0 0.0
    %2108 = vmatprep.subr.mxu0 0.0
    %2109 = vmatpush1.msra.mxu0 0.0
    %2110 = vmatprep.subr.mxu0 0.0
    %2111 = vmatpush1.msra.mxu0 0.0
    %2112 = vmatprep.subr.mxu0 0.0
    %2113 = vmatpush1.msra.mxu0 0.0
    %2114 = vmatprep.subr.mxu0 0.0
    %2115 = vmatpush1.msra.mxu0 0.0
    %2116 = vmatprep.subr.mxu0 0.0
    %2117 = vmatpush1.msra.mxu0 0.0
    %2118 = vmatprep.subr.mxu0 0.0
    %2119 = vmatpush1.msra.mxu0 0.0
    %2120 = vmatprep.subr.mxu0 0.0
    %2121 = vmatpush1.msra.mxu0 0.0
    %2122 = vmatprep.mubr.f32.mxu0 0.0
    %2123 = vmatmul.mubr.f32.gmra.mrb[0].mxu0 %v2056
    %v2124 = vpop.f32.mrb[0].mxu0
    %v2125 = vadd.f32 %v103, %v2124
    %v2126 = vpop.f32.mrb[0].mxu0
    %2127 = vdwg.mxu0
    %s2128 = scalar_lea.vmem [#allocation8], 2
    %2129 = vst [vmem:[%s2128] sm:$0x3] %v2125
    %2130 = vrot.lane.b32.xlu0 %v1947, 64
    %v2131 = vpop.permute.xlu0 %2130
    %v2133 = vsel %vm106, %v2125, %v2131
    %v2135 = vsel %vm108, %v2133, 0
    %2137 = vmatprep.subr.mxu0 0.0
    %2138 = vmatpush1.msra.mxu0 %v62
    %2139 = vmatprep.subr.mxu0 0.0
    %2140 = vmatpush1.msra.mxu0 %v63
    %2141 = vmatprep.subr.mxu0 0.0
    %2142 = vmatpush1.msra.mxu0 %v64
    %2143 = vmatprep.subr.mxu0 0.0
    %2144 = vmatpush1.msra.mxu0 %v65
    %2145 = vmatprep.subr.mxu0 0.0
    %2146 = vmatpush1.msra.mxu0 %v66
    %2147 = vmatprep.subr.mxu0 0.0
    %2148 = vmatpush1.msra.mxu0 %v67
    %2149 = vmatprep.subr.mxu0 0.0
    %2150 = vmatpush1.msra.mxu0 %v68
    %2151 = vmatprep.subr.mxu0 0.0
    %2152 = vmatpush1.msra.mxu0 %v69
    %2153 = vmatprep.subr.mxu0 0.0
    %2154 = vmatpush1.msra.mxu0 0.0
    %2155 = vmatprep.subr.mxu0 0.0
    %2156 = vmatpush1.msra.mxu0 0.0
    %2157 = vmatprep.subr.mxu0 0.0
    %2158 = vmatpush1.msra.mxu0 0.0
    %2159 = vmatprep.subr.mxu0 0.0
    %2160 = vmatpush1.msra.mxu0 0.0
    %2161 = vmatprep.subr.mxu0 0.0
    %2162 = vmatpush1.msra.mxu0 0.0
    %2163 = vmatprep.subr.mxu0 0.0
    %2164 = vmatpush1.msra.mxu0 0.0
    %2165 = vmatprep.subr.mxu0 0.0
    %2166 = vmatpush1.msra.mxu0 0.0
    %2167 = vmatprep.subr.mxu0 0.0
    %2168 = vmatpush1.msra.mxu0 0.0
    %2169 = vmatprep.subr.mxu0 0.0
    %2170 = vmatpush1.msra.mxu0 0.0
    %2171 = vmatprep.subr.mxu0 0.0
    %2172 = vmatpush1.msra.mxu0 0.0
    %2173 = vmatprep.subr.mxu0 0.0
    %2174 = vmatpush1.msra.mxu0 0.0
    %2175 = vmatprep.subr.mxu0 0.0
    %2176 = vmatpush1.msra.mxu0 0.0
    %2177 = vmatprep.subr.mxu0 0.0
    %2178 = vmatpush1.msra.mxu0 0.0
    %2179 = vmatprep.subr.mxu0 0.0
    %2180 = vmatpush1.msra.mxu0 0.0
    %2181 = vmatprep.subr.mxu0 0.0
    %2182 = vmatpush1.msra.mxu0 0.0
    %2183 = vmatprep.subr.mxu0 0.0
    %2184 = vmatpush1.msra.mxu0 0.0
    %2185 = vmatprep.subr.mxu0 0.0
    %2186 = vmatpush1.msra.mxu0 0.0
    %2187 = vmatprep.subr.mxu0 0.0
    %2188 = vmatpush1.msra.mxu0 0.0
    %2189 = vmatprep.subr.mxu0 0.0
    %2190 = vmatpush1.msra.mxu0 0.0
    %2191 = vmatprep.subr.mxu0 0.0
    %2192 = vmatpush1.msra.mxu0 0.0
    %2193 = vmatprep.subr.mxu0 0.0
    %2194 = vmatpush1.msra.mxu0 0.0
    %2195 = vmatprep.subr.mxu0 0.0
    %2196 = vmatpush1.msra.mxu0 0.0
    %2197 = vmatprep.subr.mxu0 0.0
    %2198 = vmatpush1.msra.mxu0 0.0
    %2199 = vmatprep.subr.mxu0 0.0
    %2200 = vmatpush1.msra.mxu0 0.0
    %2201 = vmatprep.mubr.f32.mxu0 0.0
    %2202 = vmatmul.mubr.f32.gmra.mrb[0].mxu0 %v2135
    %v2203 = vpop.f32.mrb[0].mxu0
    %v2204 = vadd.f32 %v84, %v2203
    %v2205 = vpop.f32.mrb[0].mxu0
    %2206 = vdwg.mxu0
    %v2207 = vxor.u32 %v2204, 2147483648
    %v2208 = vmul.f32 %v2207, 1.442695
    %v2209 = vpow.pop %v2208
    %v2210 = vadd.f32 %v2209, 1.0
    %v2211 = vrcp.pop %v2210
    %v2212 = vmul.f32 1.0, %v2211
    %v2213 = vtanh.pop %v2204
    %v2214 = vmul.f32 %v2212, %v1941
    %2216 = vrot.lane.b32.xlu0 %v2213, 64
    %v2217 = vpop.permute.xlu0 %2216
    %v2219 = vmul.f32 %v2212, %v2217
    %2221 = vrot.lane.b32.xlu0 %v2219, 32
    %v2222 = vpop.permute.xlu0 %2221
    %v2224 = vadd.f32 %v2214, %v2222
    %v2225 = vtanh.pop %v2224
    %2227 = vrot.lane.b32.xlu0 %v2225, 64
    %v2228 = vpop.permute.xlu0 %2227
    %v2230 = vmul.f32 %v2212, %v2228
    %2232 = vrot.lane.b32.xlu0 %v2230, 32
    %v2233 = vpop.permute.xlu0 %2232
    %2235 = vrot.lane.b32.xlu0 %v2052, 64
    %v2236 = vpop.permute.xlu0 %2235
    %v2238 = vsel %vm106, %v2233, %v2236
    %v2240 = vsel %vm108, %v2238, 0
    %2242 = vmatprep.subr.mxu0 0.0
    %2243 = vmatpush1.msra.mxu0 %v71
    %2244 = vmatprep.subr.mxu0 0.0
    %2245 = vmatpush1.msra.mxu0 %v72
    %2246 = vmatprep.subr.mxu0 0.0
    %2247 = vmatpush1.msra.mxu0 %v73
    %2248 = vmatprep.subr.mxu0 0.0
    %2249 = vmatpush1.msra.mxu0 %v74
    %2250 = vmatprep.subr.mxu0 0.0
    %2251 = vmatpush1.msra.mxu0 %v75
    %2252 = vmatprep.subr.mxu0 0.0
    %2253 = vmatpush1.msra.mxu0 %v76
    %2254 = vmatprep.subr.mxu0 0.0
    %2255 = vmatpush1.msra.mxu0 %v77
    %2256 = vmatprep.subr.mxu0 0.0
    %2257 = vmatpush1.msra.mxu0 %v78
    %2258 = vmatprep.subr.mxu0 0.0
    %2259 = vmatpush1.msra.mxu0 0.0
    %2260 = vmatprep.subr.mxu0 0.0
    %2261 = vmatpush1.msra.mxu0 0.0
    %2262 = vmatprep.subr.mxu0 0.0
    %2263 = vmatpush1.msra.mxu0 0.0
    %2264 = vmatprep.subr.mxu0 0.0
    %2265 = vmatpush1.msra.mxu0 0.0
    %2266 = vmatprep.subr.mxu0 0.0
    %2267 = vmatpush1.msra.mxu0 0.0
    %2268 = vmatprep.subr.mxu0 0.0
    %2269 = vmatpush1.msra.mxu0 0.0
    %2270 = vmatprep.subr.mxu0 0.0
    %2271 = vmatpush1.msra.mxu0 0.0
    %2272 = vmatprep.subr.mxu0 0.0
    %2273 = vmatpush1.msra.mxu0 0.0
    %2274 = vmatprep.subr.mxu0 0.0
    %2275 = vmatpush1.msra.mxu0 0.0
    %2276 = vmatprep.subr.mxu0 0.0
    %2277 = vmatpush1.msra.mxu0 0.0
    %2278 = vmatprep.subr.mxu0 0.0
    %2279 = vmatpush1.msra.mxu0 0.0
    %2280 = vmatprep.subr.mxu0 0.0
    %2281 = vmatpush1.msra.mxu0 0.0
    %2282 = vmatprep.subr.mxu0 0.0
    %2283 = vmatpush1.msra.mxu0 0.0
    %2284 = vmatprep.subr.mxu0 0.0
    %2285 = vmatpush1.msra.mxu0 0.0
    %2286 = vmatprep.subr.mxu0 0.0
    %2287 = vmatpush1.msra.mxu0 0.0
    %2288 = vmatprep.subr.mxu0 0.0
    %2289 = vmatpush1.msra.mxu0 0.0
    %2290 = vmatprep.subr.mxu0 0.0
    %2291 = vmatpush1.msra.mxu0 0.0
    %2292 = vmatprep.subr.mxu0 0.0
    %2293 = vmatpush1.msra.mxu0 0.0
    %2294 = vmatprep.subr.mxu0 0.0
    %2295 = vmatpush1.msra.mxu0 0.0
    %2296 = vmatprep.subr.mxu0 0.0
    %2297 = vmatpush1.msra.mxu0 0.0
    %2298 = vmatprep.subr.mxu0 0.0
    %2299 = vmatpush1.msra.mxu0 0.0
    %2300 = vmatprep.subr.mxu0 0.0
    %2301 = vmatpush1.msra.mxu0 0.0
    %2302 = vmatprep.subr.mxu0 0.0
    %2303 = vmatpush1.msra.mxu0 0.0
    %2304 = vmatprep.subr.mxu0 0.0
    %2305 = vmatpush1.msra.mxu0 0.0
    %2306 = vmatprep.mubr.f32.mxu0 0.0
    %2307 = vmatmul.mubr.f32.gmra.mrb[0].mxu0 %v2240
    %v2308 = vpop.f32.mrb[0].mxu0
    %v2309 = vadd.f32 %v92, %v2308
    %v2310 = vpop.f32.mrb[0].mxu0
    %2311 = vdwg.mxu0
    %v2312 = vxor.u32 %v2309, 2147483648
    %v2313 = vmul.f32 %v2312, 1.442695
    %v2314 = vpow.pop %v2313
    %v2315 = vadd.f32 %v2314, 1.0
    %v2316 = vrcp.pop %v2315
    %v2317 = vmul.f32 1.0, %v2316
    %v2318 = vtanh.pop %v2309
    %v2319 = vmul.f32 %v2317, %v2046
    %2321 = vrot.lane.b32.xlu0 %v2318, 64
    %v2322 = vpop.permute.xlu0 %2321
    %v2324 = vmul.f32 %v2317, %v2322
    %2326 = vrot.lane.b32.xlu0 %v2324, 32
    %v2327 = vpop.permute.xlu0 %2326
    %v2329 = vadd.f32 %v2319, %v2327
    %v2330 = vtanh.pop %v2329
    %2332 = vrot.lane.b32.xlu0 %v2330, 64
    %v2333 = vpop.permute.xlu0 %2332
    %v2335 = vmul.f32 %v2317, %v2333
    %2337 = vrot.lane.b32.xlu0 %v2335, 32
    %v2338 = vpop.permute.xlu0 %2337
    %v2339 = vsel %vm106, %v2338, 0
    %2341 = vmatprep.subr.mxu0 0.0
    %2342 = vmatpush1.msra.mxu0 %v94
    %2343 = vmatprep.subr.mxu0 0.0
    %2344 = vmatpush1.msra.mxu0 %v95
    %2345 = vmatprep.subr.mxu0 0.0
    %2346 = vmatpush1.msra.mxu0 %v96
    %2347 = vmatprep.subr.mxu0 0.0
    %2348 = vmatpush1.msra.mxu0 %v97
    %2349 = vmatprep.subr.mxu0 0.0
    %2350 = vmatpush1.msra.mxu0 0.0
    %2351 = vmatprep.subr.mxu0 0.0
    %2352 = vmatpush1.msra.mxu0 0.0
    %2353 = vmatprep.subr.mxu0 0.0
    %2354 = vmatpush1.msra.mxu0 0.0
    %2355 = vmatprep.subr.mxu0 0.0
    %2356 = vmatpush1.msra.mxu0 0.0
    %2357 = vmatprep.subr.mxu0 0.0
    %2358 = vmatpush1.msra.mxu0 0.0
    %2359 = vmatprep.subr.mxu0 0.0
    %2360 = vmatpush1.msra.mxu0 0.0
    %2361 = vmatprep.subr.mxu0 0.0
    %2362 = vmatpush1.msra.mxu0 0.0
    %2363 = vmatprep.subr.mxu0 0.0
    %2364 = vmatpush1.msra.mxu0 0.0
    %2365 = vmatprep.subr.mxu0 0.0
    %2366 = vmatpush1.msra.mxu0 0.0
    %2367 = vmatprep.subr.mxu0 0.0
    %2368 = vmatpush1.msra.mxu0 0.0
    %2369 = vmatprep.subr.mxu0 0.0
    %2370 = vmatpush1.msra.mxu0 0.0
    %2371 = vmatprep.subr.mxu0 0.0
    %2372 = vmatpush1.msra.mxu0 0.0
    %2373 = vmatprep.subr.mxu0 0.0
    %2374 = vmatpush1.msra.mxu0 0.0
    %2375 = vmatprep.subr.mxu0 0.0
    %2376 = vmatpush1.msra.mxu0 0.0
    %2377 = vmatprep.subr.mxu0 0.0
    %2378 = vmatpush1.msra.mxu0 0.0
    %2379 = vmatprep.subr.mxu0 0.0
    %2380 = vmatpush1.msra.mxu0 0.0
    %2381 = vmatprep.subr.mxu0 0.0
    %2382 = vmatpush1.msra.mxu0 0.0
    %2383 = vmatprep.subr.mxu0 0.0
    %2384 = vmatpush1.msra.mxu0 0.0
    %2385 = vmatprep.subr.mxu0 0.0
    %2386 = vmatpush1.msra.mxu0 0.0
    %2387 = vmatprep.subr.mxu0 0.0
    %2388 = vmatpush1.msra.mxu0 0.0
    %2389 = vmatprep.subr.mxu0 0.0
    %2390 = vmatpush1.msra.mxu0 0.0
    %2391 = vmatprep.subr.mxu0 0.0
    %2392 = vmatpush1.msra.mxu0 0.0
    %2393 = vmatprep.subr.mxu0 0.0
    %2394 = vmatpush1.msra.mxu0 0.0
    %2395 = vmatprep.subr.mxu0 0.0
    %2396 = vmatpush1.msra.mxu0 0.0
    %2397 = vmatprep.subr.mxu0 0.0
    %2398 = vmatpush1.msra.mxu0 0.0
    %2399 = vmatprep.subr.mxu0 0.0
    %2400 = vmatpush1.msra.mxu0 0.0
    %2401 = vmatprep.subr.mxu0 0.0
    %2402 = vmatpush1.msra.mxu0 0.0
    %2403 = vmatprep.subr.mxu0 0.0
    %2404 = vmatpush1.msra.mxu0 0.0
    %2405 = vmatprep.mubr.f32.mxu0 0.0
    %2406 = vmatmul.mubr.f32.gmra.mrb[0].mxu0 %v2339
    %v2407 = vpop.f32.mrb[0].mxu0
    %v2408 = vadd.f32 %v103, %v2407
    %v2409 = vpop.f32.mrb[0].mxu0
    %2410 = vdwg.mxu0
    %s2411 = scalar_lea.vmem [#allocation8], 4
    %2412 = vst [vmem:[%s2411] sm:$0x3] %v2408
    %2413 = vrot.lane.b32.xlu0 %v2230, 64
    %v2414 = vpop.permute.xlu0 %2413
    %v2416 = vsel %vm106, %v2408, %v2414
    %v2418 = vsel %vm108, %v2416, 0
    %2420 = vmatprep.subr.mxu0 0.0
    %2421 = vmatpush1.msra.mxu0 %v62
    %2422 = vmatprep.subr.mxu0 0.0
    %2423 = vmatpush1.msra.mxu0 %v63
    %2424 = vmatprep.subr.mxu0 0.0
    %2425 = vmatpush1.msra.mxu0 %v64
    %2426 = vmatprep.subr.mxu0 0.0
    %2427 = vmatpush1.msra.mxu0 %v65
    %2428 = vmatprep.subr.mxu0 0.0
    %2429 = vmatpush1.msra.mxu0 %v66
    %2430 = vmatprep.subr.mxu0 0.0
    %2431 = vmatpush1.msra.mxu0 %v67
    %2432 = vmatprep.subr.mxu0 0.0
    %2433 = vmatpush1.msra.mxu0 %v68
    %2434 = vmatprep.subr.mxu0 0.0
    %2435 = vmatpush1.msra.mxu0 %v69
    %2436 = vmatprep.subr.mxu0 0.0
    %2437 = vmatpush1.msra.mxu0 0.0
    %2438 = vmatprep.subr.mxu0 0.0
    %2439 = vmatpush1.msra.mxu0 0.0
    %2440 = vmatprep.subr.mxu0 0.0
    %2441 = vmatpush1.msra.mxu0 0.0
    %2442 = vmatprep.subr.mxu0 0.0
    %2443 = vmatpush1.msra.mxu0 0.0
    %2444 = vmatprep.subr.mxu0 0.0
    %2445 = vmatpush1.msra.mxu0 0.0
    %2446 = vmatprep.subr.mxu0 0.0
    %2447 = vmatpush1.msra.mxu0 0.0
    %2448 = vmatprep.subr.mxu0 0.0
    %2449 = vmatpush1.msra.mxu0 0.0
    %2450 = vmatprep.subr.mxu0 0.0
    %2451 = vmatpush1.msra.mxu0 0.0
    %2452 = vmatprep.subr.mxu0 0.0
    %2453 = vmatpush1.msra.mxu0 0.0
    %2454 = vmatprep.subr.mxu0 0.0
    %2455 = vmatpush1.msra.mxu0 0.0
    %2456 = vmatprep.subr.mxu0 0.0
    %2457 = vmatpush1.msra.mxu0 0.0
    %2458 = vmatprep.subr.mxu0 0.0
    %2459 = vmatpush1.msra.mxu0 0.0
    %2460 = vmatprep.subr.mxu0 0.0
    %2461 = vmatpush1.msra.mxu0 0.0
    %2462 = vmatprep.subr.mxu0 0.0
    %2463 = vmatpush1.msra.mxu0 0.0
    %2464 = vmatprep.subr.mxu0 0.0
    %2465 = vmatpush1.msra.mxu0 0.0
    %2466 = vmatprep.subr.mxu0 0.0
    %2467 = vmatpush1.msra.mxu0 0.0
    %2468 = vmatprep.subr.mxu0 0.0
    %2469 = vmatpush1.msra.mxu0 0.0
    %2470 = vmatprep.subr.mxu0 0.0
    %2471 = vmatpush1.msra.mxu0 0.0
    %2472 = vmatprep.subr.mxu0 0.0
    %2473 = vmatpush1.msra.mxu0 0.0
    %2474 = vmatprep.subr.mxu0 0.0
    %2475 = vmatpush1.msra.mxu0 0.0
    %2476 = vmatprep.subr.mxu0 0.0
    %2477 = vmatpush1.msra.mxu0 0.0
    %2478 = vmatprep.subr.mxu0 0.0
    %2479 = vmatpush1.msra.mxu0 0.0
    %2480 = vmatprep.subr.mxu0 0.0
    %2481 = vmatpush1.msra.mxu0 0.0
    %2482 = vmatprep.subr.mxu0 0.0
    %2483 = vmatpush1.msra.mxu0 0.0
    %2484 = vmatprep.mubr.f32.mxu0 0.0
    %2485 = vmatmul.mubr.f32.gmra.mrb[0].mxu0 %v2418
    %v2486 = vpop.f32.mrb[0].mxu0
    %v2487 = vadd.f32 %v84, %v2486
    %v2488 = vpop.f32.mrb[0].mxu0
    %2489 = vdwg.mxu0
    %v2490 = vxor.u32 %v2487, 2147483648
    %v2491 = vmul.f32 %v2490, 1.442695
    %v2492 = vpow.pop %v2491
    %v2493 = vadd.f32 %v2492, 1.0
    %v2494 = vrcp.pop %v2493
    %v2495 = vmul.f32 1.0, %v2494
    %v2496 = vtanh.pop %v2487
    %v2497 = vmul.f32 %v2495, %v2224
    %2499 = vrot.lane.b32.xlu0 %v2496, 64
    %v2500 = vpop.permute.xlu0 %2499
    %v2502 = vmul.f32 %v2495, %v2500
    %2504 = vrot.lane.b32.xlu0 %v2502, 32
    %v2505 = vpop.permute.xlu0 %2504
    %v2507 = vadd.f32 %v2497, %v2505
    %v2508 = vtanh.pop %v2507
    %2510 = vrot.lane.b32.xlu0 %v2508, 64
    %v2511 = vpop.permute.xlu0 %2510
    %v2513 = vmul.f32 %v2495, %v2511
    %2515 = vrot.lane.b32.xlu0 %v2513, 32
    %v2516 = vpop.permute.xlu0 %2515
    %2518 = vrot.lane.b32.xlu0 %v2335, 64
    %v2519 = vpop.permute.xlu0 %2518
    %v2521 = vsel %vm106, %v2516, %v2519
    %v2523 = vsel %vm108, %v2521, 0
    %2525 = vmatprep.subr.mxu0 0.0
    %2526 = vmatpush1.msra.mxu0 %v71
    %2527 = vmatprep.subr.mxu0 0.0
    %2528 = vmatpush1.msra.mxu0 %v72
    %2529 = vmatprep.subr.mxu0 0.0
    %2530 = vmatpush1.msra.mxu0 %v73
    %2531 = vmatprep.subr.mxu0 0.0
    %2532 = vmatpush1.msra.mxu0 %v74
    %2533 = vmatprep.subr.mxu0 0.0
    %2534 = vmatpush1.msra.mxu0 %v75
    %2535 = vmatprep.subr.mxu0 0.0
    %2536 = vmatpush1.msra.mxu0 %v76
    %2537 = vmatprep.subr.mxu0 0.0
    %2538 = vmatpush1.msra.mxu0 %v77
    %2539 = vmatprep.subr.mxu0 0.0
    %2540 = vmatpush1.msra.mxu0 %v78
    %2541 = vmatprep.subr.mxu0 0.0
    %2542 = vmatpush1.msra.mxu0 0.0
    %2543 = vmatprep.subr.mxu0 0.0
    %2544 = vmatpush1.msra.mxu0 0.0
    %2545 = vmatprep.subr.mxu0 0.0
    %2546 = vmatpush1.msra.mxu0 0.0
    %2547 = vmatprep.subr.mxu0 0.0
    %2548 = vmatpush1.msra.mxu0 0.0
    %2549 = vmatprep.subr.mxu0 0.0
    %2550 = vmatpush1.msra.mxu0 0.0
    %2551 = vmatprep.subr.mxu0 0.0
    %2552 = vmatpush1.msra.mxu0 0.0
    %2553 = vmatprep.subr.mxu0 0.0
    %2554 = vmatpush1.msra.mxu0 0.0
    %2555 = vmatprep.subr.mxu0 0.0
    %2556 = vmatpush1.msra.mxu0 0.0
    %2557 = vmatprep.subr.mxu0 0.0
    %2558 = vmatpush1.msra.mxu0 0.0
    %2559 = vmatprep.subr.mxu0 0.0
    %2560 = vmatpush1.msra.mxu0 0.0
    %2561 = vmatprep.subr.mxu0 0.0
    %2562 = vmatpush1.msra.mxu0 0.0
    %2563 = vmatprep.subr.mxu0 0.0
    %2564 = vmatpush1.msra.mxu0 0.0
    %2565 = vmatprep.subr.mxu0 0.0
    %2566 = vmatpush1.msra.mxu0 0.0
    %2567 = vmatprep.subr.mxu0 0.0
    %2568 = vmatpush1.msra.mxu0 0.0
    %2569 = vmatprep.subr.mxu0 0.0
    %2570 = vmatpush1.msra.mxu0 0.0
    %2571 = vmatprep.subr.mxu0 0.0
    %2572 = vmatpush1.msra.mxu0 0.0
    %2573 = vmatprep.subr.mxu0 0.0
    %2574 = vmatpush1.msra.mxu0 0.0
    %2575 = vmatprep.subr.mxu0 0.0
    %2576 = vmatpush1.msra.mxu0 0.0
    %2577 = vmatprep.subr.mxu0 0.0
    %2578 = vmatpush1.msra.mxu0 0.0
    %2579 = vmatprep.subr.mxu0 0.0
    %2580 = vmatpush1.msra.mxu0 0.0
    %2581 = vmatprep.subr.mxu0 0.0
    %2582 = vmatpush1.msra.mxu0 0.0
    %2583 = vmatprep.subr.mxu0 0.0
    %2584 = vmatpush1.msra.mxu0 0.0
    %2585 = vmatprep.subr.mxu0 0.0
    %2586 = vmatpush1.msra.mxu0 0.0
    %2587 = vmatprep.subr.mxu0 0.0
    %2588 = vmatpush1.msra.mxu0 0.0
    %2589 = vmatprep.mubr.f32.mxu0 0.0
    %2590 = vmatmul.mubr.f32.gmra.mrb[0].mxu0 %v2523
    %v2591 = vpop.f32.mrb[0].mxu0
    %v2592 = vadd.f32 %v92, %v2591
    %v2593 = vpop.f32.mrb[0].mxu0
    %2594 = vdwg.mxu0
    %v2595 = vxor.u32 %v2592, 2147483648
    %v2596 = vmul.f32 %v2595, 1.442695
    %v2597 = vpow.pop %v2596
    %v2598 = vadd.f32 %v2597, 1.0
    %v2599 = vrcp.pop %v2598
    %v2600 = vmul.f32 1.0, %v2599
    %v2601 = vtanh.pop %v2592
    %v2602 = vmul.f32 %v2600, %v2329
    %2604 = vrot.lane.b32.xlu0 %v2601, 64
    %v2605 = vpop.permute.xlu0 %2604
    %v2607 = vmul.f32 %v2600, %v2605
    %2609 = vrot.lane.b32.xlu0 %v2607, 32
    %v2610 = vpop.permute.xlu0 %2609
    %v2612 = vadd.f32 %v2602, %v2610
    %v2613 = vtanh.pop %v2612
    %2615 = vrot.lane.b32.xlu0 %v2613, 64
    %v2616 = vpop.permute.xlu0 %2615
    %v2618 = vmul.f32 %v2600, %v2616
    %2620 = vrot.lane.b32.xlu0 %v2618, 32
    %v2621 = vpop.permute.xlu0 %2620
    %v2622 = vsel %vm106, %v2621, 0
    %2624 = vmatprep.subr.mxu0 0.0
    %2625 = vmatpush1.msra.mxu0 %v94
    %2626 = vmatprep.subr.mxu0 0.0
    %2627 = vmatpush1.msra.mxu0 %v95
    %2628 = vmatprep.subr.mxu0 0.0
    %2629 = vmatpush1.msra.mxu0 %v96
    %2630 = vmatprep.subr.mxu0 0.0
    %2631 = vmatpush1.msra.mxu0 %v97
    %2632 = vmatprep.subr.mxu0 0.0
    %2633 = vmatpush1.msra.mxu0 0.0
    %2634 = vmatprep.subr.mxu0 0.0
    %2635 = vmatpush1.msra.mxu0 0.0
    %2636 = vmatprep.subr.mxu0 0.0
    %2637 = vmatpush1.msra.mxu0 0.0
    %2638 = vmatprep.subr.mxu0 0.0
    %2639 = vmatpush1.msra.mxu0 0.0
    %2640 = vmatprep.subr.mxu0 0.0
    %2641 = vmatpush1.msra.mxu0 0.0
    %2642 = vmatprep.subr.mxu0 0.0
    %2643 = vmatpush1.msra.mxu0 0.0
    %2644 = vmatprep.subr.mxu0 0.0
    %2645 = vmatpush1.msra.mxu0 0.0
    %2646 = vmatprep.subr.mxu0 0.0
    %2647 = vmatpush1.msra.mxu0 0.0
    %2648 = vmatprep.subr.mxu0 0.0
    %2649 = vmatpush1.msra.mxu0 0.0
    %2650 = vmatprep.subr.mxu0 0.0
    %2651 = vmatpush1.msra.mxu0 0.0
    %2652 = vmatprep.subr.mxu0 0.0
    %2653 = vmatpush1.msra.mxu0 0.0
    %2654 = vmatprep.subr.mxu0 0.0
    %2655 = vmatpush1.msra.mxu0 0.0
    %2656 = vmatprep.subr.mxu0 0.0
    %2657 = vmatpush1.msra.mxu0 0.0
    %2658 = vmatprep.subr.mxu0 0.0
    %2659 = vmatpush1.msra.mxu0 0.0
    %2660 = vmatprep.subr.mxu0 0.0
    %2661 = vmatpush1.msra.mxu0 0.0
    %2662 = vmatprep.subr.mxu0 0.0
    %2663 = vmatpush1.msra.mxu0 0.0
    %2664 = vmatprep.subr.mxu0 0.0
    %2665 = vmatpush1.msra.mxu0 0.0
    %2666 = vmatprep.subr.mxu0 0.0
    %2667 = vmatpush1.msra.mxu0 0.0
    %2668 = vmatprep.subr.mxu0 0.0
    %2669 = vmatpush1.msra.mxu0 0.0
    %2670 = vmatprep.subr.mxu0 0.0
    %2671 = vmatpush1.msra.mxu0 0.0
    %2672 = vmatprep.subr.mxu0 0.0
    %2673 = vmatpush1.msra.mxu0 0.0
    %2674 = vmatprep.subr.mxu0 0.0
    %2675 = vmatpush1.msra.mxu0 0.0
    %2676 = vmatprep.subr.mxu0 0.0
    %2677 = vmatpush1.msra.mxu0 0.0
    %2678 = vmatprep.subr.mxu0 0.0
    %2679 = vmatpush1.msra.mxu0 0.0
    %2680 = vmatprep.subr.mxu0 0.0
    %2681 = vmatpush1.msra.mxu0 0.0
    %2682 = vmatprep.subr.mxu0 0.0
    %2683 = vmatpush1.msra.mxu0 0.0
    %2684 = vmatprep.subr.mxu0 0.0
    %2685 = vmatpush1.msra.mxu0 0.0
    %2686 = vmatprep.subr.mxu0 0.0
    %2687 = vmatpush1.msra.mxu0 0.0
    %2688 = vmatprep.mubr.f32.mxu0 0.0
    %2689 = vmatmul.mubr.f32.gmra.mrb[0].mxu0 %v2622
    %v2690 = vpop.f32.mrb[0].mxu0
    %v2691 = vadd.f32 %v103, %v2690
    %v2692 = vpop.f32.mrb[0].mxu0
    %2693 = vdwg.mxu0
    %s2694 = scalar_lea.vmem [#allocation8], 6
    %2695 = vst [vmem:[%s2694] sm:$0x3] %v2691
    %2696 = vrot.lane.b32.xlu0 %v2513, 64
    %v2697 = vpop.permute.xlu0 %2696
    %v2699 = vsel %vm106, %v2691, %v2697
    %v2701 = vsel %vm108, %v2699, 0
    %2703 = vmatprep.subr.mxu0 0.0
    %2704 = vmatpush1.msra.mxu0 %v62
    %2705 = vmatprep.subr.mxu0 0.0
    %2706 = vmatpush1.msra.mxu0 %v63
    %2707 = vmatprep.subr.mxu0 0.0
    %2708 = vmatpush1.msra.mxu0 %v64
    %2709 = vmatprep.subr.mxu0 0.0
    %2710 = vmatpush1.msra.mxu0 %v65
    %2711 = vmatprep.subr.mxu0 0.0
    %2712 = vmatpush1.msra.mxu0 %v66
    %2713 = vmatprep.subr.mxu0 0.0
    %2714 = vmatpush1.msra.mxu0 %v67
    %2715 = vmatprep.subr.mxu0 0.0
    %2716 = vmatpush1.msra.mxu0 %v68
    %2717 = vmatprep.subr.mxu0 0.0
    %2718 = vmatpush1.msra.mxu0 %v69
    %2719 = vmatprep.subr.mxu0 0.0
    %2720 = vmatpush1.msra.mxu0 0.0
    %2721 = vmatprep.subr.mxu0 0.0
    %2722 = vmatpush1.msra.mxu0 0.0
    %2723 = vmatprep.subr.mxu0 0.0
    %2724 = vmatpush1.msra.mxu0 0.0
    %2725 = vmatprep.subr.mxu0 0.0
    %2726 = vmatpush1.msra.mxu0 0.0
    %2727 = vmatprep.subr.mxu0 0.0
    %2728 = vmatpush1.msra.mxu0 0.0
    %2729 = vmatprep.subr.mxu0 0.0
    %2730 = vmatpush1.msra.mxu0 0.0
    %2731 = vmatprep.subr.mxu0 0.0
    %2732 = vmatpush1.msra.mxu0 0.0
    %2733 = vmatprep.subr.mxu0 0.0
    %2734 = vmatpush1.msra.mxu0 0.0
    %2735 = vmatprep.subr.mxu0 0.0
    %2736 = vmatpush1.msra.mxu0 0.0
    %2737 = vmatprep.subr.mxu0 0.0
    %2738 = vmatpush1.msra.mxu0 0.0
    %2739 = vmatprep.subr.mxu0 0.0
    %2740 = vmatpush1.msra.mxu0 0.0
    %2741 = vmatprep.subr.mxu0 0.0
    %2742 = vmatpush1.msra.mxu0 0.0
    %2743 = vmatprep.subr.mxu0 0.0
    %2744 = vmatpush1.msra.mxu0 0.0
    %2745 = vmatprep.subr.mxu0 0.0
    %2746 = vmatpush1.msra.mxu0 0.0
    %2747 = vmatprep.subr.mxu0 0.0
    %2748 = vmatpush1.msra.mxu0 0.0
    %2749 = vmatprep.subr.mxu0 0.0
    %2750 = vmatpush1.msra.mxu0 0.0
    %2751 = vmatprep.subr.mxu0 0.0
    %2752 = vmatpush1.msra.mxu0 0.0
    %2753 = vmatprep.subr.mxu0 0.0
    %2754 = vmatpush1.msra.mxu0 0.0
    %2755 = vmatprep.subr.mxu0 0.0
    %2756 = vmatpush1.msra.mxu0 0.0
    %2757 = vmatprep.subr.mxu0 0.0
    %2758 = vmatpush1.msra.mxu0 0.0
    %2759 = vmatprep.subr.mxu0 0.0
    %2760 = vmatpush1.msra.mxu0 0.0
    %2761 = vmatprep.subr.mxu0 0.0
    %2762 = vmatpush1.msra.mxu0 0.0
    %2763 = vmatprep.subr.mxu0 0.0
    %2764 = vmatpush1.msra.mxu0 0.0
    %2765 = vmatprep.subr.mxu0 0.0
    %2766 = vmatpush1.msra.mxu0 0.0
    %2767 = vmatprep.mubr.f32.mxu0 0.0
    %2768 = vmatmul.mubr.f32.gmra.mrb[0].mxu0 %v2701
    %v2769 = vpop.f32.mrb[0].mxu0
    %v2770 = vadd.f32 %v84, %v2769
    %v2771 = vpop.f32.mrb[0].mxu0
    %2772 = vdwg.mxu0
    %v2773 = vxor.u32 %v2770, 2147483648
    %v2774 = vmul.f32 %v2773, 1.442695
    %v2775 = vpow.pop %v2774
    %v2776 = vadd.f32 %v2775, 1.0
    %v2777 = vrcp.pop %v2776
    %v2778 = vmul.f32 1.0, %v2777
    %v2779 = vtanh.pop %v2770
    %v2780 = vmul.f32 %v2778, %v2507
    %2782 = vrot.lane.b32.xlu0 %v2779, 64
    %v2783 = vpop.permute.xlu0 %2782
    %v2785 = vmul.f32 %v2778, %v2783
    %2787 = vrot.lane.b32.xlu0 %v2785, 32
    %v2788 = vpop.permute.xlu0 %2787
    %v2790 = vadd.f32 %v2780, %v2788
    %v2791 = vtanh.pop %v2790
    %2793 = vrot.lane.b32.xlu0 %v2791, 64
    %v2794 = vpop.permute.xlu0 %2793
    %v2796 = vmul.f32 %v2778, %v2794
    %2798 = vrot.lane.b32.xlu0 %v2796, 32
    %v2799 = vpop.permute.xlu0 %2798
    %2801 = vrot.lane.b32.xlu0 %v2618, 64
    %v2802 = vpop.permute.xlu0 %2801
    %v2804 = vsel %vm106, %v2799, %v2802
    %v2806 = vsel %vm108, %v2804, 0
    %2808 = vmatprep.subr.mxu0 0.0
    %2809 = vmatpush1.msra.mxu0 %v71
    %2810 = vmatprep.subr.mxu0 0.0
    %2811 = vmatpush1.msra.mxu0 %v72
    %2812 = vmatprep.subr.mxu0 0.0
    %2813 = vmatpush1.msra.mxu0 %v73
    %2814 = vmatprep.subr.mxu0 0.0
    %2815 = vmatpush1.msra.mxu0 %v74
    %2816 = vmatprep.subr.mxu0 0.0
    %2817 = vmatpush1.msra.mxu0 %v75
    %2818 = vmatprep.subr.mxu0 0.0
    %2819 = vmatpush1.msra.mxu0 %v76
    %2820 = vmatprep.subr.mxu0 0.0
    %2821 = vmatpush1.msra.mxu0 %v77
    %2822 = vmatprep.subr.mxu0 0.0
    %2823 = vmatpush1.msra.mxu0 %v78
    %2824 = vmatprep.subr.mxu0 0.0
    %2825 = vmatpush1.msra.mxu0 0.0
    %2826 = vmatprep.subr.mxu0 0.0
    %2827 = vmatpush1.msra.mxu0 0.0
    %2828 = vmatprep.subr.mxu0 0.0
    %2829 = vmatpush1.msra.mxu0 0.0
    %2830 = vmatprep.subr.mxu0 0.0
    %2831 = vmatpush1.msra.mxu0 0.0
    %2832 = vmatprep.subr.mxu0 0.0
    %2833 = vmatpush1.msra.mxu0 0.0
    %2834 = vmatprep.subr.mxu0 0.0
    %2835 = vmatpush1.msra.mxu0 0.0
    %2836 = vmatprep.subr.mxu0 0.0
    %2837 = vmatpush1.msra.mxu0 0.0
    %2838 = vmatprep.subr.mxu0 0.0
    %2839 = vmatpush1.msra.mxu0 0.0
    %2840 = vmatprep.subr.mxu0 0.0
    %2841 = vmatpush1.msra.mxu0 0.0
    %2842 = vmatprep.subr.mxu0 0.0
    %2843 = vmatpush1.msra.mxu0 0.0
    %2844 = vmatprep.subr.mxu0 0.0
    %2845 = vmatpush1.msra.mxu0 0.0
    %2846 = vmatprep.subr.mxu0 0.0
    %2847 = vmatpush1.msra.mxu0 0.0
    %2848 = vmatprep.subr.mxu0 0.0
    %2849 = vmatpush1.msra.mxu0 0.0
    %2850 = vmatprep.subr.mxu0 0.0
    %2851 = vmatpush1.msra.mxu0 0.0
    %2852 = vmatprep.subr.mxu0 0.0
    %2853 = vmatpush1.msra.mxu0 0.0
    %2854 = vmatprep.subr.mxu0 0.0
    %2855 = vmatpush1.msra.mxu0 0.0
    %2856 = vmatprep.subr.mxu0 0.0
    %2857 = vmatpush1.msra.mxu0 0.0
    %2858 = vmatprep.subr.mxu0 0.0
    %2859 = vmatpush1.msra.mxu0 0.0
    %2860 = vmatprep.subr.mxu0 0.0
    %2861 = vmatpush1.msra.mxu0 0.0
    %2862 = vmatprep.subr.mxu0 0.0
    %2863 = vmatpush1.msra.mxu0 0.0
    %2864 = vmatprep.subr.mxu0 0.0
    %2865 = vmatpush1.msra.mxu0 0.0
    %2866 = vmatprep.subr.mxu0 0.0
    %2867 = vmatpush1.msra.mxu0 0.0
    %2868 = vmatprep.subr.mxu0 0.0
    %2869 = vmatpush1.msra.mxu0 0.0
    %2870 = vmatprep.subr.mxu0 0.0
    %2871 = vmatpush1.msra.mxu0 0.0
    %2872 = vmatprep.mubr.f32.mxu0 0.0
    %2873 = vmatmul.mubr.f32.gmra.mrb[0].mxu0 %v2806
    %v2874 = vpop.f32.mrb[0].mxu0
    %v2875 = vadd.f32 %v92, %v2874
    %v2876 = vpop.f32.mrb[0].mxu0
    %2877 = vdwg.mxu0
    %v2878 = vxor.u32 %v2875, 2147483648
    %v2879 = vmul.f32 %v2878, 1.442695
    %v2880 = vpow.pop %v2879
    %v2881 = vadd.f32 %v2880, 1.0
    %v2882 = vrcp.pop %v2881
    %v2883 = vmul.f32 1.0, %v2882
    %v2884 = vtanh.pop %v2875
    %v2885 = vmul.f32 %v2883, %v2612
    %2887 = vrot.lane.b32.xlu0 %v2884, 64
    %v2888 = vpop.permute.xlu0 %2887
    %v2890 = vmul.f32 %v2883, %v2888
    %2892 = vrot.lane.b32.xlu0 %v2890, 32
    %v2893 = vpop.permute.xlu0 %2892
    %v2895 = vadd.f32 %v2885, %v2893
    %v2896 = vtanh.pop %v2895
    %2898 = vrot.lane.b32.xlu0 %v2896, 64
    %v2899 = vpop.permute.xlu0 %2898
    %v2901 = vmul.f32 %v2883, %v2899
    %2903 = vrot.lane.b32.xlu0 %v2901, 32
    %v2904 = vpop.permute.xlu0 %2903
    %v2905 = vsel %vm106, %v2904, 0
    %2907 = vmatprep.subr.mxu0 0.0
    %2908 = vmatpush1.msra.mxu0 %v94
    %2909 = vmatprep.subr.mxu0 0.0
    %2910 = vmatpush1.msra.mxu0 %v95
    %2911 = vmatprep.subr.mxu0 0.0
    %2912 = vmatpush1.msra.mxu0 %v96
    %2913 = vmatprep.subr.mxu0 0.0
    %2914 = vmatpush1.msra.mxu0 %v97
    %2915 = vmatprep.subr.mxu0 0.0
    %2916 = vmatpush1.msra.mxu0 0.0
    %2917 = vmatprep.subr.mxu0 0.0
    %2918 = vmatpush1.msra.mxu0 0.0
    %2919 = vmatprep.subr.mxu0 0.0
    %2920 = vmatpush1.msra.mxu0 0.0
    %2921 = vmatprep.subr.mxu0 0.0
    %2922 = vmatpush1.msra.mxu0 0.0
    %2923 = vmatprep.subr.mxu0 0.0
    %2924 = vmatpush1.msra.mxu0 0.0
    %2925 = vmatprep.subr.mxu0 0.0
    %2926 = vmatpush1.msra.mxu0 0.0
    %2927 = vmatprep.subr.mxu0 0.0
    %2928 = vmatpush1.msra.mxu0 0.0
    %2929 = vmatprep.subr.mxu0 0.0
    %2930 = vmatpush1.msra.mxu0 0.0
    %2931 = vmatprep.subr.mxu0 0.0
    %2932 = vmatpush1.msra.mxu0 0.0
    %2933 = vmatprep.subr.mxu0 0.0
    %2934 = vmatpush1.msra.mxu0 0.0
    %2935 = vmatprep.subr.mxu0 0.0
    %2936 = vmatpush1.msra.mxu0 0.0
    %2937 = vmatprep.subr.mxu0 0.0
    %2938 = vmatpush1.msra.mxu0 0.0
    %2939 = vmatprep.subr.mxu0 0.0
    %2940 = vmatpush1.msra.mxu0 0.0
    %2941 = vmatprep.subr.mxu0 0.0
    %2942 = vmatpush1.msra.mxu0 0.0
    %2943 = vmatprep.subr.mxu0 0.0
    %2944 = vmatpush1.msra.mxu0 0.0
    %2945 = vmatprep.subr.mxu0 0.0
    %2946 = vmatpush1.msra.mxu0 0.0
    %2947 = vmatprep.subr.mxu0 0.0
    %2948 = vmatpush1.msra.mxu0 0.0
    %2949 = vmatprep.subr.mxu0 0.0
    %2950 = vmatpush1.msra.mxu0 0.0
    %2951 = vmatprep.subr.mxu0 0.0
    %2952 = vmatpush1.msra.mxu0 0.0
    %2953 = vmatprep.subr.mxu0 0.0
    %2954 = vmatpush1.msra.mxu0 0.0
    %2955 = vmatprep.subr.mxu0 0.0
    %2956 = vmatpush1.msra.mxu0 0.0
    %2957 = vmatprep.subr.mxu0 0.0
    %2958 = vmatpush1.msra.mxu0 0.0
    %2959 = vmatprep.subr.mxu0 0.0
    %2960 = vmatpush1.msra.mxu0 0.0
    %2961 = vmatprep.subr.mxu0 0.0
    %2962 = vmatpush1.msra.mxu0 0.0
    %2963 = vmatprep.subr.mxu0 0.0
    %2964 = vmatpush1.msra.mxu0 0.0
    %2965 = vmatprep.subr.mxu0 0.0
    %2966 = vmatpush1.msra.mxu0 0.0
    %2967 = vmatprep.subr.mxu0 0.0
    %2968 = vmatpush1.msra.mxu0 0.0
    %2969 = vmatprep.subr.mxu0 0.0
    %2970 = vmatpush1.msra.mxu0 0.0
    %2971 = vmatprep.mubr.f32.mxu0 0.0
    %2972 = vmatmul.mubr.f32.gmra.mrb[0].mxu0 %v2905
    %v2973 = vpop.f32.mrb[0].mxu0
    %v2974 = vadd.f32 %v103, %v2973
    %v2975 = vpop.f32.mrb[0].mxu0
    %2976 = vdwg.mxu0
    %s2977 = scalar_lea.vmem [#allocation8], 8
    %2978 = vst [vmem:[%s2977] sm:$0x3] %v2974
    %2979 = vrot.lane.b32.xlu0 %v2796, 64
    %v2980 = vpop.permute.xlu0 %2979
    %v2982 = vsel %vm106, %v2974, %v2980
    %v2984 = vsel %vm108, %v2982, 0
    %2986 = vmatprep.subr.mxu0 0.0
    %2987 = vmatpush1.msra.mxu0 %v62
    %2988 = vmatprep.subr.mxu0 0.0
    %2989 = vmatpush1.msra.mxu0 %v63
    %2990 = vmatprep.subr.mxu0 0.0
    %2991 = vmatpush1.msra.mxu0 %v64
    %2992 = vmatprep.subr.mxu0 0.0
    %2993 = vmatpush1.msra.mxu0 %v65
    %2994 = vmatprep.subr.mxu0 0.0
    %2995 = vmatpush1.msra.mxu0 %v66
    %2996 = vmatprep.subr.mxu0 0.0
    %2997 = vmatpush1.msra.mxu0 %v67
    %2998 = vmatprep.subr.mxu0 0.0
    %2999 = vmatpush1.msra.mxu0 %v68
    %3000 = vmatprep.subr.mxu0 0.0
    %3001 = vmatpush1.msra.mxu0 %v69
    %3002 = vmatprep.subr.mxu0 0.0
    %3003 = vmatpush1.msra.mxu0 0.0
    %3004 = vmatprep.subr.mxu0 0.0
    %3005 = vmatpush1.msra.mxu0 0.0
    %3006 = vmatprep.subr.mxu0 0.0
    %3007 = vmatpush1.msra.mxu0 0.0
    %3008 = vmatprep.subr.mxu0 0.0
    %3009 = vmatpush1.msra.mxu0 0.0
    %3010 = vmatprep.subr.mxu0 0.0
    %3011 = vmatpush1.msra.mxu0 0.0
    %3012 = vmatprep.subr.mxu0 0.0
    %3013 = vmatpush1.msra.mxu0 0.0
    %3014 = vmatprep.subr.mxu0 0.0
    %3015 = vmatpush1.msra.mxu0 0.0
    %3016 = vmatprep.subr.mxu0 0.0
    %3017 = vmatpush1.msra.mxu0 0.0
    %3018 = vmatprep.subr.mxu0 0.0
    %3019 = vmatpush1.msra.mxu0 0.0
    %3020 = vmatprep.subr.mxu0 0.0
    %3021 = vmatpush1.msra.mxu0 0.0
    %3022 = vmatprep.subr.mxu0 0.0
    %3023 = vmatpush1.msra.mxu0 0.0
    %3024 = vmatprep.subr.mxu0 0.0
    %3025 = vmatpush1.msra.mxu0 0.0
    %3026 = vmatprep.subr.mxu0 0.0
    %3027 = vmatpush1.msra.mxu0 0.0
    %3028 = vmatprep.subr.mxu0 0.0
    %3029 = vmatpush1.msra.mxu0 0.0
    %3030 = vmatprep.subr.mxu0 0.0
    %3031 = vmatpush1.msra.mxu0 0.0
    %3032 = vmatprep.subr.mxu0 0.0
    %3033 = vmatpush1.msra.mxu0 0.0
    %3034 = vmatprep.subr.mxu0 0.0
    %3035 = vmatpush1.msra.mxu0 0.0
    %3036 = vmatprep.subr.mxu0 0.0
    %3037 = vmatpush1.msra.mxu0 0.0
    %3038 = vmatprep.subr.mxu0 0.0
    %3039 = vmatpush1.msra.mxu0 0.0
    %3040 = vmatprep.subr.mxu0 0.0
    %3041 = vmatpush1.msra.mxu0 0.0
    %3042 = vmatprep.subr.mxu0 0.0
    %3043 = vmatpush1.msra.mxu0 0.0
    %3044 = vmatprep.subr.mxu0 0.0
    %3045 = vmatpush1.msra.mxu0 0.0
    %3046 = vmatprep.subr.mxu0 0.0
    %3047 = vmatpush1.msra.mxu0 0.0
    %3048 = vmatprep.subr.mxu0 0.0
    %3049 = vmatpush1.msra.mxu0 0.0
    %3050 = vmatprep.mubr.f32.mxu0 0.0
    %3051 = vmatmul.mubr.f32.gmra.mrb[0].mxu0 %v2984
    %v3052 = vpop.f32.mrb[0].mxu0
    %v3053 = vadd.f32 %v84, %v3052
    %v3054 = vpop.f32.mrb[0].mxu0
    %3055 = vdwg.mxu0
    %v3056 = vxor.u32 %v3053, 2147483648
    %v3057 = vmul.f32 %v3056, 1.442695
    %v3058 = vpow.pop %v3057
    %v3059 = vadd.f32 %v3058, 1.0
    %v3060 = vrcp.pop %v3059
    %v3061 = vmul.f32 1.0, %v3060
    %v3062 = vtanh.pop %v3053
    %v3063 = vmul.f32 %v3061, %v2790
    %3065 = vrot.lane.b32.xlu0 %v3062, 64
    %v3066 = vpop.permute.xlu0 %3065
    %v3068 = vmul.f32 %v3061, %v3066
    %3070 = vrot.lane.b32.xlu0 %v3068, 32
    %v3071 = vpop.permute.xlu0 %3070
    %v3073 = vadd.f32 %v3063, %v3071
    %v3074 = vtanh.pop %v3073
    %3076 = vrot.lane.b32.xlu0 %v3074, 64
    %v3077 = vpop.permute.xlu0 %3076
    %v3079 = vmul.f32 %v3061, %v3077
    %3081 = vrot.lane.b32.xlu0 %v3079, 32
    %v3082 = vpop.permute.xlu0 %3081
    %3084 = vrot.lane.b32.xlu0 %v2901, 64
    %v3085 = vpop.permute.xlu0 %3084
    %v3087 = vsel %vm106, %v3082, %v3085
    %v3089 = vsel %vm108, %v3087, 0
    %3091 = vmatprep.subr.mxu0 0.0
    %3092 = vmatpush1.msra.mxu0 %v71
    %3093 = vmatprep.subr.mxu0 0.0
    %3094 = vmatpush1.msra.mxu0 %v72
    %3095 = vmatprep.subr.mxu0 0.0
    %3096 = vmatpush1.msra.mxu0 %v73
    %3097 = vmatprep.subr.mxu0 0.0
    %3098 = vmatpush1.msra.mxu0 %v74
    %3099 = vmatprep.subr.mxu0 0.0
    %3100 = vmatpush1.msra.mxu0 %v75
    %3101 = vmatprep.subr.mxu0 0.0
    %3102 = vmatpush1.msra.mxu0 %v76
    %3103 = vmatprep.subr.mxu0 0.0
    %3104 = vmatpush1.msra.mxu0 %v77
    %3105 = vmatprep.subr.mxu0 0.0
    %3106 = vmatpush1.msra.mxu0 %v78
    %3107 = vmatprep.subr.mxu0 0.0
    %3108 = vmatpush1.msra.mxu0 0.0
    %3109 = vmatprep.subr.mxu0 0.0
    %3110 = vmatpush1.msra.mxu0 0.0
    %3111 = vmatprep.subr.mxu0 0.0
    %3112 = vmatpush1.msra.mxu0 0.0
    %3113 = vmatprep.subr.mxu0 0.0
    %3114 = vmatpush1.msra.mxu0 0.0
    %3115 = vmatprep.subr.mxu0 0.0
    %3116 = vmatpush1.msra.mxu0 0.0
    %3117 = vmatprep.subr.mxu0 0.0
    %3118 = vmatpush1.msra.mxu0 0.0
    %3119 = vmatprep.subr.mxu0 0.0
    %3120 = vmatpush1.msra.mxu0 0.0
    %3121 = vmatprep.subr.mxu0 0.0
    %3122 = vmatpush1.msra.mxu0 0.0
    %3123 = vmatprep.subr.mxu0 0.0
    %3124 = vmatpush1.msra.mxu0 0.0
    %3125 = vmatprep.subr.mxu0 0.0
    %3126 = vmatpush1.msra.mxu0 0.0
    %3127 = vmatprep.subr.mxu0 0.0
    %3128 = vmatpush1.msra.mxu0 0.0
    %3129 = vmatprep.subr.mxu0 0.0
    %3130 = vmatpush1.msra.mxu0 0.0
    %3131 = vmatprep.subr.mxu0 0.0
    %3132 = vmatpush1.msra.mxu0 0.0
    %3133 = vmatprep.subr.mxu0 0.0
    %3134 = vmatpush1.msra.mxu0 0.0
    %3135 = vmatprep.subr.mxu0 0.0
    %3136 = vmatpush1.msra.mxu0 0.0
    %3137 = vmatprep.subr.mxu0 0.0
    %3138 = vmatpush1.msra.mxu0 0.0
    %3139 = vmatprep.subr.mxu0 0.0
    %3140 = vmatpush1.msra.mxu0 0.0
    %3141 = vmatprep.subr.mxu0 0.0
    %3142 = vmatpush1.msra.mxu0 0.0
    %3143 = vmatprep.subr.mxu0 0.0
    %3144 = vmatpush1.msra.mxu0 0.0
    %3145 = vmatprep.subr.mxu0 0.0
    %3146 = vmatpush1.msra.mxu0 0.0
    %3147 = vmatprep.subr.mxu0 0.0
    %3148 = vmatpush1.msra.mxu0 0.0
    %3149 = vmatprep.subr.mxu0 0.0
    %3150 = vmatpush1.msra.mxu0 0.0
    %3151 = vmatprep.subr.mxu0 0.0
    %3152 = vmatpush1.msra.mxu0 0.0
    %3153 = vmatprep.subr.mxu0 0.0
    %3154 = vmatpush1.msra.mxu0 0.0
    %3155 = vmatprep.mubr.f32.mxu0 0.0
    %3156 = vmatmul.mubr.f32.gmra.mrb[0].mxu0 %v3089
    %v3157 = vpop.f32.mrb[0].mxu0
    %v3158 = vadd.f32 %v92, %v3157
    %v3159 = vpop.f32.mrb[0].mxu0
    %3160 = vdwg.mxu0
    %v3161 = vxor.u32 %v3158, 2147483648
    %v3162 = vmul.f32 %v3161, 1.442695
    %v3163 = vpow.pop %v3162
    %v3164 = vadd.f32 %v3163, 1.0
    %v3165 = vrcp.pop %v3164
    %v3166 = vmul.f32 1.0, %v3165
    %v3167 = vtanh.pop %v3158
    %v3168 = vmul.f32 %v3166, %v2895
    %3170 = vrot.lane.b32.xlu0 %v3167, 64
    %v3171 = vpop.permute.xlu0 %3170
    %v3173 = vmul.f32 %v3166, %v3171
    %3175 = vrot.lane.b32.xlu0 %v3173, 32
    %v3176 = vpop.permute.xlu0 %3175
    %v3178 = vadd.f32 %v3168, %v3176
    %v3179 = vtanh.pop %v3178
    %3181 = vrot.lane.b32.xlu0 %v3179, 64
    %v3182 = vpop.permute.xlu0 %3181
    %v3184 = vmul.f32 %v3166, %v3182
    %3186 = vrot.lane.b32.xlu0 %v3184, 32
    %v3187 = vpop.permute.xlu0 %3186
    %v3188 = vsel %vm106, %v3187, 0
    %3190 = vmatprep.subr.mxu0 0.0
    %3191 = vmatpush1.msra.mxu0 %v94
    %3192 = vmatprep.subr.mxu0 0.0
    %3193 = vmatpush1.msra.mxu0 %v95
    %3194 = vmatprep.subr.mxu0 0.0
    %3195 = vmatpush1.msra.mxu0 %v96
    %3196 = vmatprep.subr.mxu0 0.0
    %3197 = vmatpush1.msra.mxu0 %v97
    %3198 = vmatprep.subr.mxu0 0.0
    %3199 = vmatpush1.msra.mxu0 0.0
    %3200 = vmatprep.subr.mxu0 0.0
    %3201 = vmatpush1.msra.mxu0 0.0
    %3202 = vmatprep.subr.mxu0 0.0
    %3203 = vmatpush1.msra.mxu0 0.0
    %3204 = vmatprep.subr.mxu0 0.0
    %3205 = vmatpush1.msra.mxu0 0.0
    %3206 = vmatprep.subr.mxu0 0.0
    %3207 = vmatpush1.msra.mxu0 0.0
    %3208 = vmatprep.subr.mxu0 0.0
    %3209 = vmatpush1.msra.mxu0 0.0
    %3210 = vmatprep.subr.mxu0 0.0
    %3211 = vmatpush1.msra.mxu0 0.0
    %3212 = vmatprep.subr.mxu0 0.0
    %3213 = vmatpush1.msra.mxu0 0.0
    %3214 = vmatprep.subr.mxu0 0.0
    %3215 = vmatpush1.msra.mxu0 0.0
    %3216 = vmatprep.subr.mxu0 0.0
    %3217 = vmatpush1.msra.mxu0 0.0
    %3218 = vmatprep.subr.mxu0 0.0
    %3219 = vmatpush1.msra.mxu0 0.0
    %3220 = vmatprep.subr.mxu0 0.0
    %3221 = vmatpush1.msra.mxu0 0.0
    %3222 = vmatprep.subr.mxu0 0.0
    %3223 = vmatpush1.msra.mxu0 0.0
    %3224 = vmatprep.subr.mxu0 0.0
    %3225 = vmatpush1.msra.mxu0 0.0
    %3226 = vmatprep.subr.mxu0 0.0
    %3227 = vmatpush1.msra.mxu0 0.0
    %3228 = vmatprep.subr.mxu0 0.0
    %3229 = vmatpush1.msra.mxu0 0.0
    %3230 = vmatprep.subr.mxu0 0.0
    %3231 = vmatpush1.msra.mxu0 0.0
    %3232 = vmatprep.subr.mxu0 0.0
    %3233 = vmatpush1.msra.mxu0 0.0
    %3234 = vmatprep.subr.mxu0 0.0
    %3235 = vmatpush1.msra.mxu0 0.0
    %3236 = vmatprep.subr.mxu0 0.0
    %3237 = vmatpush1.msra.mxu0 0.0
    %3238 = vmatprep.subr.mxu0 0.0
    %3239 = vmatpush1.msra.mxu0 0.0
    %3240 = vmatprep.subr.mxu0 0.0
    %3241 = vmatpush1.msra.mxu0 0.0
    %3242 = vmatprep.subr.mxu0 0.0
    %3243 = vmatpush1.msra.mxu0 0.0
    %3244 = vmatprep.subr.mxu0 0.0
    %3245 = vmatpush1.msra.mxu0 0.0
    %3246 = vmatprep.subr.mxu0 0.0
    %3247 = vmatpush1.msra.mxu0 0.0
    %3248 = vmatprep.subr.mxu0 0.0
    %3249 = vmatpush1.msra.mxu0 0.0
    %3250 = vmatprep.subr.mxu0 0.0
    %3251 = vmatpush1.msra.mxu0 0.0
    %3252 = vmatprep.subr.mxu0 0.0
    %3253 = vmatpush1.msra.mxu0 0.0
    %3254 = vmatprep.mubr.f32.mxu0 0.0
    %3255 = vmatmul.mubr.f32.gmra.mrb[0].mxu0 %v3188
    %v3256 = vpop.f32.mrb[0].mxu0
    %v3257 = vadd.f32 %v103, %v3256
    %v3258 = vpop.f32.mrb[0].mxu0
    %3259 = vdwg.mxu0
    %s3260 = scalar_lea.vmem [#allocation8], 10
    %3261 = vst [vmem:[%s3260] sm:$0x3] %v3257
    %3262 = vrot.lane.b32.xlu0 %v3079, 64
    %v3263 = vpop.permute.xlu0 %3262
    %v3265 = vsel %vm106, %v3257, %v3263
    %v3267 = vsel %vm108, %v3265, 0
    %3269 = vmatprep.subr.mxu0 0.0
    %3270 = vmatpush1.msra.mxu0 %v62
    %3271 = vmatprep.subr.mxu0 0.0
    %3272 = vmatpush1.msra.mxu0 %v63
    %3273 = vmatprep.subr.mxu0 0.0
    %3274 = vmatpush1.msra.mxu0 %v64
    %3275 = vmatprep.subr.mxu0 0.0
    %3276 = vmatpush1.msra.mxu0 %v65
    %3277 = vmatprep.subr.mxu0 0.0
    %3278 = vmatpush1.msra.mxu0 %v66
    %3279 = vmatprep.subr.mxu0 0.0
    %3280 = vmatpush1.msra.mxu0 %v67
    %3281 = vmatprep.subr.mxu0 0.0
    %3282 = vmatpush1.msra.mxu0 %v68
    %3283 = vmatprep.subr.mxu0 0.0
    %3284 = vmatpush1.msra.mxu0 %v69
    %3285 = vmatprep.subr.mxu0 0.0
    %3286 = vmatpush1.msra.mxu0 0.0
    %3287 = vmatprep.subr.mxu0 0.0
    %3288 = vmatpush1.msra.mxu0 0.0
    %3289 = vmatprep.subr.mxu0 0.0
    %3290 = vmatpush1.msra.mxu0 0.0
    %3291 = vmatprep.subr.mxu0 0.0
    %3292 = vmatpush1.msra.mxu0 0.0
    %3293 = vmatprep.subr.mxu0 0.0
    %3294 = vmatpush1.msra.mxu0 0.0
    %3295 = vmatprep.subr.mxu0 0.0
    %3296 = vmatpush1.msra.mxu0 0.0
    %3297 = vmatprep.subr.mxu0 0.0
    %3298 = vmatpush1.msra.mxu0 0.0
    %3299 = vmatprep.subr.mxu0 0.0
    %3300 = vmatpush1.msra.mxu0 0.0
    %3301 = vmatprep.subr.mxu0 0.0
    %3302 = vmatpush1.msra.mxu0 0.0
    %3303 = vmatprep.subr.mxu0 0.0
    %3304 = vmatpush1.msra.mxu0 0.0
    %3305 = vmatprep.subr.mxu0 0.0
    %3306 = vmatpush1.msra.mxu0 0.0
    %3307 = vmatprep.subr.mxu0 0.0
    %3308 = vmatpush1.msra.mxu0 0.0
    %3309 = vmatprep.subr.mxu0 0.0
    %3310 = vmatpush1.msra.mxu0 0.0
    %3311 = vmatprep.subr.mxu0 0.0
    %3312 = vmatpush1.msra.mxu0 0.0
    %3313 = vmatprep.subr.mxu0 0.0
    %3314 = vmatpush1.msra.mxu0 0.0
    %3315 = vmatprep.subr.mxu0 0.0
    %3316 = vmatpush1.msra.mxu0 0.0
    %3317 = vmatprep.subr.mxu0 0.0
    %3318 = vmatpush1.msra.mxu0 0.0
    %3319 = vmatprep.subr.mxu0 0.0
    %3320 = vmatpush1.msra.mxu0 0.0
    %3321 = vmatprep.subr.mxu0 0.0
    %3322 = vmatpush1.msra.mxu0 0.0
    %3323 = vmatprep.subr.mxu0 0.0
    %3324 = vmatpush1.msra.mxu0 0.0
    %3325 = vmatprep.subr.mxu0 0.0
    %3326 = vmatpush1.msra.mxu0 0.0
    %3327 = vmatprep.subr.mxu0 0.0
    %3328 = vmatpush1.msra.mxu0 0.0
    %3329 = vmatprep.subr.mxu0 0.0
    %3330 = vmatpush1.msra.mxu0 0.0
    %3331 = vmatprep.subr.mxu0 0.0
    %3332 = vmatpush1.msra.mxu0 0.0
    %3333 = vmatprep.mubr.f32.mxu0 0.0
    %3334 = vmatmul.mubr.f32.gmra.mrb[0].mxu0 %v3267
    %v3335 = vpop.f32.mrb[0].mxu0
    %v3336 = vadd.f32 %v84, %v3335
    %v3337 = vpop.f32.mrb[0].mxu0
    %3338 = vdwg.mxu0
    %v3339 = vxor.u32 %v3336, 2147483648
    %v3340 = vmul.f32 %v3339, 1.442695
    %v3341 = vpow.pop %v3340
    %v3342 = vadd.f32 %v3341, 1.0
    %v3343 = vrcp.pop %v3342
    %v3344 = vmul.f32 1.0, %v3343
    %v3345 = vtanh.pop %v3336
    %v3346 = vmul.f32 %v3344, %v3073
    %3348 = vrot.lane.b32.xlu0 %v3345, 64
    %v3349 = vpop.permute.xlu0 %3348
    %v3351 = vmul.f32 %v3344, %v3349
    %3353 = vrot.lane.b32.xlu0 %v3351, 32
    %v3354 = vpop.permute.xlu0 %3353
    %v3356 = vadd.f32 %v3346, %v3354
    %v3357 = vtanh.pop %v3356
    %3359 = vrot.lane.b32.xlu0 %v3357, 64
    %v3360 = vpop.permute.xlu0 %3359
    %v3362 = vmul.f32 %v3344, %v3360
    %3364 = vrot.lane.b32.xlu0 %v3362, 32
    %v3365 = vpop.permute.xlu0 %3364
    %3367 = vrot.lane.b32.xlu0 %v3184, 64
    %v3368 = vpop.permute.xlu0 %3367
    %v3370 = vsel %vm106, %v3365, %v3368
    %v3372 = vsel %vm108, %v3370, 0
    %3374 = vmatprep.subr.mxu0 0.0
    %3375 = vmatpush1.msra.mxu0 %v71
    %3376 = vmatprep.subr.mxu0 0.0
    %3377 = vmatpush1.msra.mxu0 %v72
    %3378 = vmatprep.subr.mxu0 0.0
    %3379 = vmatpush1.msra.mxu0 %v73
    %3380 = vmatprep.subr.mxu0 0.0
    %3381 = vmatpush1.msra.mxu0 %v74
    %3382 = vmatprep.subr.mxu0 0.0
    %3383 = vmatpush1.msra.mxu0 %v75
    %3384 = vmatprep.subr.mxu0 0.0
    %3385 = vmatpush1.msra.mxu0 %v76
    %3386 = vmatprep.subr.mxu0 0.0
    %3387 = vmatpush1.msra.mxu0 %v77
    %3388 = vmatprep.subr.mxu0 0.0
    %3389 = vmatpush1.msra.mxu0 %v78
    %3390 = vmatprep.subr.mxu0 0.0
    %3391 = vmatpush1.msra.mxu0 0.0
    %3392 = vmatprep.subr.mxu0 0.0
    %3393 = vmatpush1.msra.mxu0 0.0
    %3394 = vmatprep.subr.mxu0 0.0
    %3395 = vmatpush1.msra.mxu0 0.0
    %3396 = vmatprep.subr.mxu0 0.0
    %3397 = vmatpush1.msra.mxu0 0.0
    %3398 = vmatprep.subr.mxu0 0.0
    %3399 = vmatpush1.msra.mxu0 0.0
    %3400 = vmatprep.subr.mxu0 0.0
    %3401 = vmatpush1.msra.mxu0 0.0
    %3402 = vmatprep.subr.mxu0 0.0
    %3403 = vmatpush1.msra.mxu0 0.0
    %3404 = vmatprep.subr.mxu0 0.0
    %3405 = vmatpush1.msra.mxu0 0.0
    %3406 = vmatprep.subr.mxu0 0.0
    %3407 = vmatpush1.msra.mxu0 0.0
    %3408 = vmatprep.subr.mxu0 0.0
    %3409 = vmatpush1.msra.mxu0 0.0
    %3410 = vmatprep.subr.mxu0 0.0
    %3411 = vmatpush1.msra.mxu0 0.0
    %3412 = vmatprep.subr.mxu0 0.0
    %3413 = vmatpush1.msra.mxu0 0.0
    %3414 = vmatprep.subr.mxu0 0.0
    %3415 = vmatpush1.msra.mxu0 0.0
    %3416 = vmatprep.subr.mxu0 0.0
    %3417 = vmatpush1.msra.mxu0 0.0
    %3418 = vmatprep.subr.mxu0 0.0
    %3419 = vmatpush1.msra.mxu0 0.0
    %3420 = vmatprep.subr.mxu0 0.0
    %3421 = vmatpush1.msra.mxu0 0.0
    %3422 = vmatprep.subr.mxu0 0.0
    %3423 = vmatpush1.msra.mxu0 0.0
    %3424 = vmatprep.subr.mxu0 0.0
    %3425 = vmatpush1.msra.mxu0 0.0
    %3426 = vmatprep.subr.mxu0 0.0
    %3427 = vmatpush1.msra.mxu0 0.0
    %3428 = vmatprep.subr.mxu0 0.0
    %3429 = vmatpush1.msra.mxu0 0.0
    %3430 = vmatprep.subr.mxu0 0.0
    %3431 = vmatpush1.msra.mxu0 0.0
    %3432 = vmatprep.subr.mxu0 0.0
    %3433 = vmatpush1.msra.mxu0 0.0
    %3434 = vmatprep.subr.mxu0 0.0
    %3435 = vmatpush1.msra.mxu0 0.0
    %3436 = vmatprep.subr.mxu0 0.0
    %3437 = vmatpush1.msra.mxu0 0.0
    %3438 = vmatprep.mubr.f32.mxu0 0.0
    %3439 = vmatmul.mubr.f32.gmra.mrb[0].mxu0 %v3372
    %v3440 = vpop.f32.mrb[0].mxu0
    %v3441 = vadd.f32 %v92, %v3440
    %v3442 = vpop.f32.mrb[0].mxu0
    %3443 = vdwg.mxu0
    %v3444 = vxor.u32 %v3441, 2147483648
    %v3445 = vmul.f32 %v3444, 1.442695
    %v3446 = vpow.pop %v3445
    %v3447 = vadd.f32 %v3446, 1.0
    %v3448 = vrcp.pop %v3447
    %v3449 = vmul.f32 1.0, %v3448
    %v3450 = vtanh.pop %v3441
    %v3451 = vmul.f32 %v3449, %v3178
    %3453 = vrot.lane.b32.xlu0 %v3450, 64
    %v3454 = vpop.permute.xlu0 %3453
    %v3456 = vmul.f32 %v3449, %v3454
    %3458 = vrot.lane.b32.xlu0 %v3456, 32
    %v3459 = vpop.permute.xlu0 %3458
    %v3461 = vadd.f32 %v3451, %v3459
    %v3462 = vtanh.pop %v3461
    %3464 = vrot.lane.b32.xlu0 %v3462, 64
    %v3465 = vpop.permute.xlu0 %3464
    %v3467 = vmul.f32 %v3449, %v3465
    %3469 = vrot.lane.b32.xlu0 %v3467, 32
    %v3470 = vpop.permute.xlu0 %3469
    %v3471 = vsel %vm106, %v3470, 0
    %3473 = vmatprep.subr.mxu0 0.0
    %3474 = vmatpush1.msra.mxu0 %v94
    %3475 = vmatprep.subr.mxu0 0.0
    %3476 = vmatpush1.msra.mxu0 %v95
    %3477 = vmatprep.subr.mxu0 0.0
    %3478 = vmatpush1.msra.mxu0 %v96
    %3479 = vmatprep.subr.mxu0 0.0
    %3480 = vmatpush1.msra.mxu0 %v97
    %3481 = vmatprep.subr.mxu0 0.0
    %3482 = vmatpush1.msra.mxu0 0.0
    %3483 = vmatprep.subr.mxu0 0.0
    %3484 = vmatpush1.msra.mxu0 0.0
    %3485 = vmatprep.subr.mxu0 0.0
    %3486 = vmatpush1.msra.mxu0 0.0
    %3487 = vmatprep.subr.mxu0 0.0
    %3488 = vmatpush1.msra.mxu0 0.0
    %3489 = vmatprep.subr.mxu0 0.0
    %3490 = vmatpush1.msra.mxu0 0.0
    %3491 = vmatprep.subr.mxu0 0.0
    %3492 = vmatpush1.msra.mxu0 0.0
    %3493 = vmatprep.subr.mxu0 0.0
    %3494 = vmatpush1.msra.mxu0 0.0
    %3495 = vmatprep.subr.mxu0 0.0
    %3496 = vmatpush1.msra.mxu0 0.0
    %3497 = vmatprep.subr.mxu0 0.0
    %3498 = vmatpush1.msra.mxu0 0.0
    %3499 = vmatprep.subr.mxu0 0.0
    %3500 = vmatpush1.msra.mxu0 0.0
    %3501 = vmatprep.subr.mxu0 0.0
    %3502 = vmatpush1.msra.mxu0 0.0
    %3503 = vmatprep.subr.mxu0 0.0
    %3504 = vmatpush1.msra.mxu0 0.0
    %3505 = vmatprep.subr.mxu0 0.0
    %3506 = vmatpush1.msra.mxu0 0.0
    %3507 = vmatprep.subr.mxu0 0.0
    %3508 = vmatpush1.msra.mxu0 0.0
    %3509 = vmatprep.subr.mxu0 0.0
    %3510 = vmatpush1.msra.mxu0 0.0
    %3511 = vmatprep.subr.mxu0 0.0
    %3512 = vmatpush1.msra.mxu0 0.0
    %3513 = vmatprep.subr.mxu0 0.0
    %3514 = vmatpush1.msra.mxu0 0.0
    %3515 = vmatprep.subr.mxu0 0.0
    %3516 = vmatpush1.msra.mxu0 0.0
    %3517 = vmatprep.subr.mxu0 0.0
    %3518 = vmatpush1.msra.mxu0 0.0
    %3519 = vmatprep.subr.mxu0 0.0
    %3520 = vmatpush1.msra.mxu0 0.0
    %3521 = vmatprep.subr.mxu0 0.0
    %3522 = vmatpush1.msra.mxu0 0.0
    %3523 = vmatprep.subr.mxu0 0.0
    %3524 = vmatpush1.msra.mxu0 0.0
    %3525 = vmatprep.subr.mxu0 0.0
    %3526 = vmatpush1.msra.mxu0 0.0
    %3527 = vmatprep.subr.mxu0 0.0
    %3528 = vmatpush1.msra.mxu0 0.0
    %3529 = vmatprep.subr.mxu0 0.0
    %3530 = vmatpush1.msra.mxu0 0.0
    %3531 = vmatprep.subr.mxu0 0.0
    %3532 = vmatpush1.msra.mxu0 0.0
    %3533 = vmatprep.subr.mxu0 0.0
    %3534 = vmatpush1.msra.mxu0 0.0
    %3535 = vmatprep.subr.mxu0 0.0
    %3536 = vmatpush1.msra.mxu0 0.0
    %3537 = vmatprep.mubr.f32.mxu0 0.0
    %3538 = vmatmul.mubr.f32.gmra.mrb[0].mxu0 %v3471
    %v3539 = vpop.f32.mrb[0].mxu0
    %v3540 = vadd.f32 %v103, %v3539
    %v3541 = vpop.f32.mrb[0].mxu0
    %3542 = vdwg.mxu0
    %s3543 = scalar_lea.vmem [#allocation8], 12
    %3544 = vst [vmem:[%s3543] sm:$0x3] %v3540
    %3545 = vrot.lane.b32.xlu0 %v3362, 64
    %v3546 = vpop.permute.xlu0 %3545
    %v3548 = vsel %vm106, %v3540, %v3546
    %v3550 = vsel %vm108, %v3548, 0
    %3552 = vmatprep.subr.mxu0 0.0
    %3553 = vmatpush1.msra.mxu0 %v62
    %3554 = vmatprep.subr.mxu0 0.0
    %3555 = vmatpush1.msra.mxu0 %v63
    %3556 = vmatprep.subr.mxu0 0.0
    %3557 = vmatpush1.msra.mxu0 %v64
    %3558 = vmatprep.subr.mxu0 0.0
    %3559 = vmatpush1.msra.mxu0 %v65
    %3560 = vmatprep.subr.mxu0 0.0
    %3561 = vmatpush1.msra.mxu0 %v66
    %3562 = vmatprep.subr.mxu0 0.0
    %3563 = vmatpush1.msra.mxu0 %v67
    %3564 = vmatprep.subr.mxu0 0.0
    %3565 = vmatpush1.msra.mxu0 %v68
    %3566 = vmatprep.subr.mxu0 0.0
    %3567 = vmatpush1.msra.mxu0 %v69
    %3568 = vmatprep.subr.mxu0 0.0
    %3569 = vmatpush1.msra.mxu0 0.0
    %3570 = vmatprep.subr.mxu0 0.0
    %3571 = vmatpush1.msra.mxu0 0.0
    %3572 = vmatprep.subr.mxu0 0.0
    %3573 = vmatpush1.msra.mxu0 0.0
    %3574 = vmatprep.subr.mxu0 0.0
    %3575 = vmatpush1.msra.mxu0 0.0
    %3576 = vmatprep.subr.mxu0 0.0
    %3577 = vmatpush1.msra.mxu0 0.0
    %3578 = vmatprep.subr.mxu0 0.0
    %3579 = vmatpush1.msra.mxu0 0.0
    %3580 = vmatprep.subr.mxu0 0.0
    %3581 = vmatpush1.msra.mxu0 0.0
    %3582 = vmatprep.subr.mxu0 0.0
    %3583 = vmatpush1.msra.mxu0 0.0
    %3584 = vmatprep.subr.mxu0 0.0
    %3585 = vmatpush1.msra.mxu0 0.0
    %3586 = vmatprep.subr.mxu0 0.0
    %3587 = vmatpush1.msra.mxu0 0.0
    %3588 = vmatprep.subr.mxu0 0.0
    %3589 = vmatpush1.msra.mxu0 0.0
    %3590 = vmatprep.subr.mxu0 0.0
    %3591 = vmatpush1.msra.mxu0 0.0
    %3592 = vmatprep.subr.mxu0 0.0
    %3593 = vmatpush1.msra.mxu0 0.0
    %3594 = vmatprep.subr.mxu0 0.0
    %3595 = vmatpush1.msra.mxu0 0.0
    %3596 = vmatprep.subr.mxu0 0.0
    %3597 = vmatpush1.msra.mxu0 0.0
    %3598 = vmatprep.subr.mxu0 0.0
    %3599 = vmatpush1.msra.mxu0 0.0
    %3600 = vmatprep.subr.mxu0 0.0
    %3601 = vmatpush1.msra.mxu0 0.0
    %3602 = vmatprep.subr.mxu0 0.0
    %3603 = vmatpush1.msra.mxu0 0.0
    %3604 = vmatprep.subr.mxu0 0.0
    %3605 = vmatpush1.msra.mxu0 0.0
    %3606 = vmatprep.subr.mxu0 0.0
    %3607 = vmatpush1.msra.mxu0 0.0
    %3608 = vmatprep.subr.mxu0 0.0
    %3609 = vmatpush1.msra.mxu0 0.0
    %3610 = vmatprep.subr.mxu0 0.0
    %3611 = vmatpush1.msra.mxu0 0.0
    %3612 = vmatprep.subr.mxu0 0.0
    %3613 = vmatpush1.msra.mxu0 0.0
    %3614 = vmatprep.subr.mxu0 0.0
    %3615 = vmatpush1.msra.mxu0 0.0
    %3616 = vmatprep.mubr.f32.mxu0 0.0
    %3617 = vmatmul.mubr.f32.gmra.mrb[0].mxu0 %v3550
    %v3618 = vpop.f32.mrb[0].mxu0
    %v3619 = vadd.f32 %v84, %v3618
    %v3620 = vpop.f32.mrb[0].mxu0
    %3621 = vdwg.mxu0
    %v3622 = vxor.u32 %v3619, 2147483648
    %v3623 = vmul.f32 %v3622, 1.442695
    %v3624 = vpow.pop %v3623
    %v3625 = vadd.f32 %v3624, 1.0
    %v3626 = vrcp.pop %v3625
    %v3627 = vmul.f32 1.0, %v3626
    %v3628 = vtanh.pop %v3619
    %v3629 = vmul.f32 %v3627, %v3356
    %3631 = vrot.lane.b32.xlu0 %v3628, 64
    %v3632 = vpop.permute.xlu0 %3631
    %v3634 = vmul.f32 %v3627, %v3632
    %3636 = vrot.lane.b32.xlu0 %v3634, 32
    %v3637 = vpop.permute.xlu0 %3636
    %v3639 = vadd.f32 %v3629, %v3637
    %v3640 = vtanh.pop %v3639
    %3642 = vrot.lane.b32.xlu0 %v3640, 64
    %v3643 = vpop.permute.xlu0 %3642
    %v3645 = vmul.f32 %v3627, %v3643
    %3647 = vrot.lane.b32.xlu0 %v3645, 32
    %v3648 = vpop.permute.xlu0 %3647
    %3650 = vrot.lane.b32.xlu0 %v3467, 64
    %v3651 = vpop.permute.xlu0 %3650
    %v3653 = vsel %vm106, %v3648, %v3651
    %v3655 = vsel %vm108, %v3653, 0
    %3657 = vmatprep.subr.mxu0 0.0
    %3658 = vmatpush1.msra.mxu0 %v71
    %3659 = vmatprep.subr.mxu0 0.0
    %3660 = vmatpush1.msra.mxu0 %v72
    %3661 = vmatprep.subr.mxu0 0.0
    %3662 = vmatpush1.msra.mxu0 %v73
    %3663 = vmatprep.subr.mxu0 0.0
    %3664 = vmatpush1.msra.mxu0 %v74
    %3665 = vmatprep.subr.mxu0 0.0
    %3666 = vmatpush1.msra.mxu0 %v75
    %3667 = vmatprep.subr.mxu0 0.0
    %3668 = vmatpush1.msra.mxu0 %v76
    %3669 = vmatprep.subr.mxu0 0.0
    %3670 = vmatpush1.msra.mxu0 %v77
    %3671 = vmatprep.subr.mxu0 0.0
    %3672 = vmatpush1.msra.mxu0 %v78
    %3673 = vmatprep.subr.mxu0 0.0
    %3674 = vmatpush1.msra.mxu0 0.0
    %3675 = vmatprep.subr.mxu0 0.0
    %3676 = vmatpush1.msra.mxu0 0.0
    %3677 = vmatprep.subr.mxu0 0.0
    %3678 = vmatpush1.msra.mxu0 0.0
    %3679 = vmatprep.subr.mxu0 0.0
    %3680 = vmatpush1.msra.mxu0 0.0
    %3681 = vmatprep.subr.mxu0 0.0
    %3682 = vmatpush1.msra.mxu0 0.0
    %3683 = vmatprep.subr.mxu0 0.0
    %3684 = vmatpush1.msra.mxu0 0.0
    %3685 = vmatprep.subr.mxu0 0.0
    %3686 = vmatpush1.msra.mxu0 0.0
    %3687 = vmatprep.subr.mxu0 0.0
    %3688 = vmatpush1.msra.mxu0 0.0
    %3689 = vmatprep.subr.mxu0 0.0
    %3690 = vmatpush1.msra.mxu0 0.0
    %3691 = vmatprep.subr.mxu0 0.0
    %3692 = vmatpush1.msra.mxu0 0.0
    %3693 = vmatprep.subr.mxu0 0.0
    %3694 = vmatpush1.msra.mxu0 0.0
    %3695 = vmatprep.subr.mxu0 0.0
    %3696 = vmatpush1.msra.mxu0 0.0
    %3697 = vmatprep.subr.mxu0 0.0
    %3698 = vmatpush1.msra.mxu0 0.0
    %3699 = vmatprep.subr.mxu0 0.0
    %3700 = vmatpush1.msra.mxu0 0.0
    %3701 = vmatprep.subr.mxu0 0.0
    %3702 = vmatpush1.msra.mxu0 0.0
    %3703 = vmatprep.subr.mxu0 0.0
    %3704 = vmatpush1.msra.mxu0 0.0
    %3705 = vmatprep.subr.mxu0 0.0
    %3706 = vmatpush1.msra.mxu0 0.0
    %3707 = vmatprep.subr.mxu0 0.0
    %3708 = vmatpush1.msra.mxu0 0.0
    %3709 = vmatprep.subr.mxu0 0.0
    %3710 = vmatpush1.msra.mxu0 0.0
    %3711 = vmatprep.subr.mxu0 0.0
    %3712 = vmatpush1.msra.mxu0 0.0
    %3713 = vmatprep.subr.mxu0 0.0
    %3714 = vmatpush1.msra.mxu0 0.0
    %3715 = vmatprep.subr.mxu0 0.0
    %3716 = vmatpush1.msra.mxu0 0.0
    %3717 = vmatprep.subr.mxu0 0.0
    %3718 = vmatpush1.msra.mxu0 0.0
    %3719 = vmatprep.subr.mxu0 0.0
    %3720 = vmatpush1.msra.mxu0 0.0
    %3721 = vmatprep.mubr.f32.mxu0 0.0
    %3722 = vmatmul.mubr.f32.gmra.mrb[0].mxu0 %v3655
    %v3723 = vpop.f32.mrb[0].mxu0
    %v3724 = vadd.f32 %v92, %v3723
    %v3725 = vpop.f32.mrb[0].mxu0
    %3726 = vdwg.mxu0
    %v3727 = vxor.u32 %v3724, 2147483648
    %v3728 = vmul.f32 %v3727, 1.442695
    %v3729 = vpow.pop %v3728
    %v3730 = vadd.f32 %v3729, 1.0
    %v3731 = vrcp.pop %v3730
    %v3732 = vmul.f32 1.0, %v3731
    %v3733 = vtanh.pop %v3724
    %v3734 = vmul.f32 %v3732, %v3461
    %3736 = vrot.lane.b32.xlu0 %v3733, 64
    %v3737 = vpop.permute.xlu0 %3736
    %v3739 = vmul.f32 %v3732, %v3737
    %3741 = vrot.lane.b32.xlu0 %v3739, 32
    %v3742 = vpop.permute.xlu0 %3741
    %v3744 = vadd.f32 %v3734, %v3742
    %v3745 = vtanh.pop %v3744
    %3747 = vrot.lane.b32.xlu0 %v3745, 64
    %v3748 = vpop.permute.xlu0 %3747
    %v3750 = vmul.f32 %v3732, %v3748
    %3752 = vrot.lane.b32.xlu0 %v3750, 32
    %v3753 = vpop.permute.xlu0 %3752
    %v3754 = vsel %vm106, %v3753, 0
    %3756 = vmatprep.subr.mxu0 0.0
    %3757 = vmatpush1.msra.mxu0 %v94
    %3758 = vmatprep.subr.mxu0 0.0
    %3759 = vmatpush1.msra.mxu0 %v95
    %3760 = vmatprep.subr.mxu0 0.0
    %3761 = vmatpush1.msra.mxu0 %v96
    %3762 = vmatprep.subr.mxu0 0.0
    %3763 = vmatpush1.msra.mxu0 %v97
    %3764 = vmatprep.subr.mxu0 0.0
    %3765 = vmatpush1.msra.mxu0 0.0
    %3766 = vmatprep.subr.mxu0 0.0
    %3767 = vmatpush1.msra.mxu0 0.0
    %3768 = vmatprep.subr.mxu0 0.0
    %3769 = vmatpush1.msra.mxu0 0.0
    %3770 = vmatprep.subr.mxu0 0.0
    %3771 = vmatpush1.msra.mxu0 0.0
    %3772 = vmatprep.subr.mxu0 0.0
    %3773 = vmatpush1.msra.mxu0 0.0
    %3774 = vmatprep.subr.mxu0 0.0
    %3775 = vmatpush1.msra.mxu0 0.0
    %3776 = vmatprep.subr.mxu0 0.0
    %3777 = vmatpush1.msra.mxu0 0.0
    %3778 = vmatprep.subr.mxu0 0.0
    %3779 = vmatpush1.msra.mxu0 0.0
    %3780 = vmatprep.subr.mxu0 0.0
    %3781 = vmatpush1.msra.mxu0 0.0
    %3782 = vmatprep.subr.mxu0 0.0
    %3783 = vmatpush1.msra.mxu0 0.0
    %3784 = vmatprep.subr.mxu0 0.0
    %3785 = vmatpush1.msra.mxu0 0.0
    %3786 = vmatprep.subr.mxu0 0.0
    %3787 = vmatpush1.msra.mxu0 0.0
    %3788 = vmatprep.subr.mxu0 0.0
    %3789 = vmatpush1.msra.mxu0 0.0
    %3790 = vmatprep.subr.mxu0 0.0
    %3791 = vmatpush1.msra.mxu0 0.0
    %3792 = vmatprep.subr.mxu0 0.0
    %3793 = vmatpush1.msra.mxu0 0.0
    %3794 = vmatprep.subr.mxu0 0.0
    %3795 = vmatpush1.msra.mxu0 0.0
    %3796 = vmatprep.subr.mxu0 0.0
    %3797 = vmatpush1.msra.mxu0 0.0
    %3798 = vmatprep.subr.mxu0 0.0
    %3799 = vmatpush1.msra.mxu0 0.0
    %3800 = vmatprep.subr.mxu0 0.0
    %3801 = vmatpush1.msra.mxu0 0.0
    %3802 = vmatprep.subr.mxu0 0.0
    %3803 = vmatpush1.msra.mxu0 0.0
    %3804 = vmatprep.subr.mxu0 0.0
    %3805 = vmatpush1.msra.mxu0 0.0
    %3806 = vmatprep.subr.mxu0 0.0
    %3807 = vmatpush1.msra.mxu0 0.0
    %3808 = vmatprep.subr.mxu0 0.0
    %3809 = vmatpush1.msra.mxu0 0.0
    %3810 = vmatprep.subr.mxu0 0.0
    %3811 = vmatpush1.msra.mxu0 0.0
    %3812 = vmatprep.subr.mxu0 0.0
    %3813 = vmatpush1.msra.mxu0 0.0
    %3814 = vmatprep.subr.mxu0 0.0
    %3815 = vmatpush1.msra.mxu0 0.0
    %3816 = vmatprep.subr.mxu0 0.0
    %3817 = vmatpush1.msra.mxu0 0.0
    %3818 = vmatprep.subr.mxu0 0.0
    %3819 = vmatpush1.msra.mxu0 0.0
    %3820 = vmatprep.mubr.f32.mxu0 0.0
    %3821 = vmatmul.mubr.f32.gmra.mrb[0].mxu0 %v3754
    %v3822 = vpop.f32.mrb[0].mxu0
    %v3823 = vadd.f32 %v103, %v3822
    %v3824 = vpop.f32.mrb[0].mxu0
    %3825 = vdwg.mxu0
    %s3826 = scalar_lea.vmem [#allocation8], 14
    %3827 = vst [vmem:[%s3826] sm:$0x3] %v3823
    %3828 = vrot.lane.b32.xlu0 %v3645, 64
    %v3829 = vpop.permute.xlu0 %3828
    %v3831 = vsel %vm106, %v3823, %v3829
    %v3833 = vsel %vm108, %v3831, 0
    %3835 = vmatprep.subr.mxu0 0.0
    %3836 = vmatpush1.msra.mxu0 %v62
    %3837 = vmatprep.subr.mxu0 0.0
    %3838 = vmatpush1.msra.mxu0 %v63
    %3839 = vmatprep.subr.mxu0 0.0
    %3840 = vmatpush1.msra.mxu0 %v64
    %3841 = vmatprep.subr.mxu0 0.0
    %3842 = vmatpush1.msra.mxu0 %v65
    %3843 = vmatprep.subr.mxu0 0.0
    %3844 = vmatpush1.msra.mxu0 %v66
    %3845 = vmatprep.subr.mxu0 0.0
    %3846 = vmatpush1.msra.mxu0 %v67
    %3847 = vmatprep.subr.mxu0 0.0
    %3848 = vmatpush1.msra.mxu0 %v68
    %3849 = vmatprep.subr.mxu0 0.0
    %3850 = vmatpush1.msra.mxu0 %v69
    %3851 = vmatprep.subr.mxu0 0.0
    %3852 = vmatpush1.msra.mxu0 0.0
    %3853 = vmatprep.subr.mxu0 0.0
    %3854 = vmatpush1.msra.mxu0 0.0
    %3855 = vmatprep.subr.mxu0 0.0
    %3856 = vmatpush1.msra.mxu0 0.0
    %3857 = vmatprep.subr.mxu0 0.0
    %3858 = vmatpush1.msra.mxu0 0.0
    %3859 = vmatprep.subr.mxu0 0.0
    %3860 = vmatpush1.msra.mxu0 0.0
    %3861 = vmatprep.subr.mxu0 0.0
    %3862 = vmatpush1.msra.mxu0 0.0
    %3863 = vmatprep.subr.mxu0 0.0
    %3864 = vmatpush1.msra.mxu0 0.0
    %3865 = vmatprep.subr.mxu0 0.0
    %3866 = vmatpush1.msra.mxu0 0.0
    %3867 = vmatprep.subr.mxu0 0.0
    %3868 = vmatpush1.msra.mxu0 0.0
    %3869 = vmatprep.subr.mxu0 0.0
    %3870 = vmatpush1.msra.mxu0 0.0
    %3871 = vmatprep.subr.mxu0 0.0
    %3872 = vmatpush1.msra.mxu0 0.0
    %3873 = vmatprep.subr.mxu0 0.0
    %3874 = vmatpush1.msra.mxu0 0.0
    %3875 = vmatprep.subr.mxu0 0.0
    %3876 = vmatpush1.msra.mxu0 0.0
    %3877 = vmatprep.subr.mxu0 0.0
    %3878 = vmatpush1.msra.mxu0 0.0
    %3879 = vmatprep.subr.mxu0 0.0
    %3880 = vmatpush1.msra.mxu0 0.0
    %3881 = vmatprep.subr.mxu0 0.0
    %3882 = vmatpush1.msra.mxu0 0.0
    %3883 = vmatprep.subr.mxu0 0.0
    %3884 = vmatpush1.msra.mxu0 0.0
    %3885 = vmatprep.subr.mxu0 0.0
    %3886 = vmatpush1.msra.mxu0 0.0
    %3887 = vmatprep.subr.mxu0 0.0
    %3888 = vmatpush1.msra.mxu0 0.0
    %3889 = vmatprep.subr.mxu0 0.0
    %3890 = vmatpush1.msra.mxu0 0.0
    %3891 = vmatprep.subr.mxu0 0.0
    %3892 = vmatpush1.msra.mxu0 0.0
    %3893 = vmatprep.subr.mxu0 0.0
    %3894 = vmatpush1.msra.mxu0 0.0
    %3895 = vmatprep.subr.mxu0 0.0
    %3896 = vmatpush1.msra.mxu0 0.0
    %3897 = vmatprep.subr.mxu0 0.0
    %3898 = vmatpush1.msra.mxu0 0.0
    %3899 = vmatprep.mubr.f32.mxu0 0.0
    %3900 = vmatmul.mubr.f32.gmra.mrb[0].mxu0 %v3833
    %v3901 = vpop.f32.mrb[0].mxu0
    %v3902 = vadd.f32 %v84, %v3901
    %v3903 = vpop.f32.mrb[0].mxu0
    %3904 = vdwg.mxu0
    %v3905 = vxor.u32 %v3902, 2147483648
    %v3906 = vmul.f32 %v3905, 1.442695
    %v3907 = vpow.pop %v3906
    %v3908 = vadd.f32 %v3907, 1.0
    %v3909 = vrcp.pop %v3908
    %v3910 = vmul.f32 1.0, %v3909
    %v3911 = vtanh.pop %v3902
    %v3912 = vmul.f32 %v3910, %v3639
    %3914 = vrot.lane.b32.xlu0 %v3911, 64
    %v3915 = vpop.permute.xlu0 %3914
    %v3917 = vmul.f32 %v3910, %v3915
    %3919 = vrot.lane.b32.xlu0 %v3917, 32
    %v3920 = vpop.permute.xlu0 %3919
    %v3922 = vadd.f32 %v3912, %v3920
    %v3923 = vtanh.pop %v3922
    %3925 = vrot.lane.b32.xlu0 %v3923, 64
    %v3926 = vpop.permute.xlu0 %3925
    %v3928 = vmul.f32 %v3910, %v3926
    %3930 = vrot.lane.b32.xlu0 %v3928, 32
    %v3931 = vpop.permute.xlu0 %3930
    %3933 = vrot.lane.b32.xlu0 %v3750, 64
    %v3934 = vpop.permute.xlu0 %3933
    %v3936 = vsel %vm106, %v3931, %v3934
    %v3938 = vsel %vm108, %v3936, 0
    %3940 = vmatprep.subr.mxu0 0.0
    %3941 = vmatpush1.msra.mxu0 %v71
    %3942 = vmatprep.subr.mxu0 0.0
    %3943 = vmatpush1.msra.mxu0 %v72
    %3944 = vmatprep.subr.mxu0 0.0
    %3945 = vmatpush1.msra.mxu0 %v73
    %3946 = vmatprep.subr.mxu0 0.0
    %3947 = vmatpush1.msra.mxu0 %v74
    %3948 = vmatprep.subr.mxu0 0.0
    %3949 = vmatpush1.msra.mxu0 %v75
    %3950 = vmatprep.subr.mxu0 0.0
    %3951 = vmatpush1.msra.mxu0 %v76
    %3952 = vmatprep.subr.mxu0 0.0
    %3953 = vmatpush1.msra.mxu0 %v77
    %3954 = vmatprep.subr.mxu0 0.0
    %3955 = vmatpush1.msra.mxu0 %v78
    %3956 = vmatprep.subr.mxu0 0.0
    %3957 = vmatpush1.msra.mxu0 0.0
    %3958 = vmatprep.subr.mxu0 0.0
    %3959 = vmatpush1.msra.mxu0 0.0
    %3960 = vmatprep.subr.mxu0 0.0
    %3961 = vmatpush1.msra.mxu0 0.0
    %3962 = vmatprep.subr.mxu0 0.0
    %3963 = vmatpush1.msra.mxu0 0.0
    %3964 = vmatprep.subr.mxu0 0.0
    %3965 = vmatpush1.msra.mxu0 0.0
    %3966 = vmatprep.subr.mxu0 0.0
    %3967 = vmatpush1.msra.mxu0 0.0
    %3968 = vmatprep.subr.mxu0 0.0
    %3969 = vmatpush1.msra.mxu0 0.0
    %3970 = vmatprep.subr.mxu0 0.0
    %3971 = vmatpush1.msra.mxu0 0.0
    %3972 = vmatprep.subr.mxu0 0.0
    %3973 = vmatpush1.msra.mxu0 0.0
    %3974 = vmatprep.subr.mxu0 0.0
    %3975 = vmatpush1.msra.mxu0 0.0
    %3976 = vmatprep.subr.mxu0 0.0
    %3977 = vmatpush1.msra.mxu0 0.0
    %3978 = vmatprep.subr.mxu0 0.0
    %3979 = vmatpush1.msra.mxu0 0.0
    %3980 = vmatprep.subr.mxu0 0.0
    %3981 = vmatpush1.msra.mxu0 0.0
    %3982 = vmatprep.subr.mxu0 0.0
    %3983 = vmatpush1.msra.mxu0 0.0
    %3984 = vmatprep.subr.mxu0 0.0
    %3985 = vmatpush1.msra.mxu0 0.0
    %3986 = vmatprep.subr.mxu0 0.0
    %3987 = vmatpush1.msra.mxu0 0.0
    %3988 = vmatprep.subr.mxu0 0.0
    %3989 = vmatpush1.msra.mxu0 0.0
    %3990 = vmatprep.subr.mxu0 0.0
    %3991 = vmatpush1.msra.mxu0 0.0
    %3992 = vmatprep.subr.mxu0 0.0
    %3993 = vmatpush1.msra.mxu0 0.0
    %3994 = vmatprep.subr.mxu0 0.0
    %3995 = vmatpush1.msra.mxu0 0.0
    %3996 = vmatprep.subr.mxu0 0.0
    %3997 = vmatpush1.msra.mxu0 0.0
    %3998 = vmatprep.subr.mxu0 0.0
    %3999 = vmatpush1.msra.mxu0 0.0
    %4000 = vmatprep.subr.mxu0 0.0
    %4001 = vmatpush1.msra.mxu0 0.0
    %4002 = vmatprep.subr.mxu0 0.0
    %4003 = vmatpush1.msra.mxu0 0.0
    %4004 = vmatprep.mubr.f32.mxu0 0.0
    %4005 = vmatmul.mubr.f32.gmra.mrb[0].mxu0 %v3938
    %v4006 = vpop.f32.mrb[0].mxu0
    %v4007 = vadd.f32 %v92, %v4006
    %v4008 = vpop.f32.mrb[0].mxu0
    %4009 = vdwg.mxu0
    %v4010 = vxor.u32 %v4007, 2147483648
    %v4011 = vmul.f32 %v4010, 1.442695
    %v4012 = vpow.pop %v4011
    %v4013 = vadd.f32 %v4012, 1.0
    %v4014 = vrcp.pop %v4013
    %v4015 = vmul.f32 1.0, %v4014
    %v4016 = vtanh.pop %v4007
    %v4017 = vmul.f32 %v4015, %v3744
    %4019 = vrot.lane.b32.xlu0 %v4016, 64
    %v4020 = vpop.permute.xlu0 %4019
    %v4022 = vmul.f32 %v4015, %v4020
    %4024 = vrot.lane.b32.xlu0 %v4022, 32
    %v4025 = vpop.permute.xlu0 %4024
    %v4027 = vadd.f32 %v4017, %v4025
    %v4028 = vtanh.pop %v4027
    %4030 = vrot.lane.b32.xlu0 %v4028, 64
    %v4031 = vpop.permute.xlu0 %4030
    %v4033 = vmul.f32 %v4015, %v4031
    %4035 = vrot.lane.b32.xlu0 %v4033, 32
    %v4036 = vpop.permute.xlu0 %4035
    %v4037 = vsel %vm106, %v4036, 0
    %4039 = vmatprep.subr.mxu0 0.0
    %4040 = vmatpush1.msra.mxu0 %v94
    %4041 = vmatprep.subr.mxu0 0.0
    %4042 = vmatpush1.msra.mxu0 %v95
    %4043 = vmatprep.subr.mxu0 0.0
    %4044 = vmatpush1.msra.mxu0 %v96
    %4045 = vmatprep.subr.mxu0 0.0
    %4046 = vmatpush1.msra.mxu0 %v97
    %4047 = vmatprep.subr.mxu0 0.0
    %4048 = vmatpush1.msra.mxu0 0.0
    %4049 = vmatprep.subr.mxu0 0.0
    %4050 = vmatpush1.msra.mxu0 0.0
    %4051 = vmatprep.subr.mxu0 0.0
    %4052 = vmatpush1.msra.mxu0 0.0
    %4053 = vmatprep.subr.mxu0 0.0
    %4054 = vmatpush1.msra.mxu0 0.0
    %4055 = vmatprep.subr.mxu0 0.0
    %4056 = vmatpush1.msra.mxu0 0.0
    %4057 = vmatprep.subr.mxu0 0.0
    %4058 = vmatpush1.msra.mxu0 0.0
    %4059 = vmatprep.subr.mxu0 0.0
    %4060 = vmatpush1.msra.mxu0 0.0
    %4061 = vmatprep.subr.mxu0 0.0
    %4062 = vmatpush1.msra.mxu0 0.0
    %4063 = vmatprep.subr.mxu0 0.0
    %4064 = vmatpush1.msra.mxu0 0.0
    %4065 = vmatprep.subr.mxu0 0.0
    %4066 = vmatpush1.msra.mxu0 0.0
    %4067 = vmatprep.subr.mxu0 0.0
    %4068 = vmatpush1.msra.mxu0 0.0
    %4069 = vmatprep.subr.mxu0 0.0
    %4070 = vmatpush1.msra.mxu0 0.0
    %4071 = vmatprep.subr.mxu0 0.0
    %4072 = vmatpush1.msra.mxu0 0.0
    %4073 = vmatprep.subr.mxu0 0.0
    %4074 = vmatpush1.msra.mxu0 0.0
    %4075 = vmatprep.subr.mxu0 0.0
    %4076 = vmatpush1.msra.mxu0 0.0
    %4077 = vmatprep.subr.mxu0 0.0
    %4078 = vmatpush1.msra.mxu0 0.0
    %4079 = vmatprep.subr.mxu0 0.0
    %4080 = vmatpush1.msra.mxu0 0.0
    %4081 = vmatprep.subr.mxu0 0.0
    %4082 = vmatpush1.msra.mxu0 0.0
    %4083 = vmatprep.subr.mxu0 0.0
    %4084 = vmatpush1.msra.mxu0 0.0
    %4085 = vmatprep.subr.mxu0 0.0
    %4086 = vmatpush1.msra.mxu0 0.0
    %4087 = vmatprep.subr.mxu0 0.0
    %4088 = vmatpush1.msra.mxu0 0.0
    %4089 = vmatprep.subr.mxu0 0.0
    %4090 = vmatpush1.msra.mxu0 0.0
    %4091 = vmatprep.subr.mxu0 0.0
    %4092 = vmatpush1.msra.mxu0 0.0
    %4093 = vmatprep.subr.mxu0 0.0
    %4094 = vmatpush1.msra.mxu0 0.0
    %4095 = vmatprep.subr.mxu0 0.0
    %4096 = vmatpush1.msra.mxu0 0.0
    %4097 = vmatprep.subr.mxu0 0.0
    %4098 = vmatpush1.msra.mxu0 0.0
    %4099 = vmatprep.subr.mxu0 0.0
    %4100 = vmatpush1.msra.mxu0 0.0
    %4101 = vmatprep.subr.mxu0 0.0
    %4102 = vmatpush1.msra.mxu0 0.0
    %4103 = vmatprep.mubr.f32.mxu0 0.0
    %4104 = vmatmul.mubr.f32.gmra.mrb[0].mxu0 %v4037
    %v4105 = vpop.f32.mrb[0].mxu0
    %v4106 = vadd.f32 %v103, %v4105
    %v4107 = vpop.f32.mrb[0].mxu0
    %4108 = vdwg.mxu0
    %s4109 = scalar_lea.vmem [#allocation8], 16
    %4110 = vst [vmem:[%s4109] sm:$0x3] %v4106
    %4111 = vrot.lane.b32.xlu0 %v3928, 64
    %v4112 = vpop.permute.xlu0 %4111
    %v4114 = vsel %vm106, %v4106, %v4112
    %v4116 = vsel %vm108, %v4114, 0
    %4118 = vmatprep.subr.mxu0 0.0
    %4119 = vmatpush1.msra.mxu0 %v62
    %4120 = vmatprep.subr.mxu0 0.0
    %4121 = vmatpush1.msra.mxu0 %v63
    %4122 = vmatprep.subr.mxu0 0.0
    %4123 = vmatpush1.msra.mxu0 %v64
    %4124 = vmatprep.subr.mxu0 0.0
    %4125 = vmatpush1.msra.mxu0 %v65
    %4126 = vmatprep.subr.mxu0 0.0
    %4127 = vmatpush1.msra.mxu0 %v66
    %4128 = vmatprep.subr.mxu0 0.0
    %4129 = vmatpush1.msra.mxu0 %v67
    %4130 = vmatprep.subr.mxu0 0.0
    %4131 = vmatpush1.msra.mxu0 %v68
    %4132 = vmatprep.subr.mxu0 0.0
    %4133 = vmatpush1.msra.mxu0 %v69
    %4134 = vmatprep.subr.mxu0 0.0
    %4135 = vmatpush1.msra.mxu0 0.0
    %4136 = vmatprep.subr.mxu0 0.0
    %4137 = vmatpush1.msra.mxu0 0.0
    %4138 = vmatprep.subr.mxu0 0.0
    %4139 = vmatpush1.msra.mxu0 0.0
    %4140 = vmatprep.subr.mxu0 0.0
    %4141 = vmatpush1.msra.mxu0 0.0
    %4142 = vmatprep.subr.mxu0 0.0
    %4143 = vmatpush1.msra.mxu0 0.0
    %4144 = vmatprep.subr.mxu0 0.0
    %4145 = vmatpush1.msra.mxu0 0.0
    %4146 = vmatprep.subr.mxu0 0.0
    %4147 = vmatpush1.msra.mxu0 0.0
    %4148 = vmatprep.subr.mxu0 0.0
    %4149 = vmatpush1.msra.mxu0 0.0
    %4150 = vmatprep.subr.mxu0 0.0
    %4151 = vmatpush1.msra.mxu0 0.0
    %4152 = vmatprep.subr.mxu0 0.0
    %4153 = vmatpush1.msra.mxu0 0.0
    %4154 = vmatprep.subr.mxu0 0.0
    %4155 = vmatpush1.msra.mxu0 0.0
    %4156 = vmatprep.subr.mxu0 0.0
    %4157 = vmatpush1.msra.mxu0 0.0
    %4158 = vmatprep.subr.mxu0 0.0
    %4159 = vmatpush1.msra.mxu0 0.0
    %4160 = vmatprep.subr.mxu0 0.0
    %4161 = vmatpush1.msra.mxu0 0.0
    %4162 = vmatprep.subr.mxu0 0.0
    %4163 = vmatpush1.msra.mxu0 0.0
    %4164 = vmatprep.subr.mxu0 0.0
    %4165 = vmatpush1.msra.mxu0 0.0
    %4166 = vmatprep.subr.mxu0 0.0
    %4167 = vmatpush1.msra.mxu0 0.0
    %4168 = vmatprep.subr.mxu0 0.0
    %4169 = vmatpush1.msra.mxu0 0.0
    %4170 = vmatprep.subr.mxu0 0.0
    %4171 = vmatpush1.msra.mxu0 0.0
    %4172 = vmatprep.subr.mxu0 0.0
    %4173 = vmatpush1.msra.mxu0 0.0
    %4174 = vmatprep.subr.mxu0 0.0
    %4175 = vmatpush1.msra.mxu0 0.0
    %4176 = vmatprep.subr.mxu0 0.0
    %4177 = vmatpush1.msra.mxu0 0.0
    %4178 = vmatprep.subr.mxu0 0.0
    %4179 = vmatpush1.msra.mxu0 0.0
    %4180 = vmatprep.subr.mxu0 0.0
    %4181 = vmatpush1.msra.mxu0 0.0
    %4182 = vmatprep.mubr.f32.mxu0 0.0
    %4183 = vmatmul.mubr.f32.gmra.mrb[0].mxu0 %v4116
    %v4184 = vpop.f32.mrb[0].mxu0
    %v4185 = vadd.f32 %v84, %v4184
    %v4186 = vpop.f32.mrb[0].mxu0
    %4187 = vdwg.mxu0
    %v4188 = vxor.u32 %v4185, 2147483648
    %v4189 = vmul.f32 %v4188, 1.442695
    %v4190 = vpow.pop %v4189
    %v4191 = vadd.f32 %v4190, 1.0
    %v4192 = vrcp.pop %v4191
    %v4193 = vmul.f32 1.0, %v4192
    %v4194 = vtanh.pop %v4185
    %v4195 = vmul.f32 %v4193, %v3922
    %4197 = vrot.lane.b32.xlu0 %v4194, 64
    %v4198 = vpop.permute.xlu0 %4197
    %v4200 = vmul.f32 %v4193, %v4198
    %4202 = vrot.lane.b32.xlu0 %v4200, 32
    %v4203 = vpop.permute.xlu0 %4202
    %v4205 = vadd.f32 %v4195, %v4203
    %v4206 = vtanh.pop %v4205
    %4208 = vrot.lane.b32.xlu0 %v4206, 64
    %v4209 = vpop.permute.xlu0 %4208
    %v4211 = vmul.f32 %v4193, %v4209
    %4213 = vrot.lane.b32.xlu0 %v4211, 32
    %v4214 = vpop.permute.xlu0 %4213
    %4216 = vrot.lane.b32.xlu0 %v4033, 64
    %v4217 = vpop.permute.xlu0 %4216
    %v4219 = vsel %vm106, %v4214, %v4217
    %v4221 = vsel %vm108, %v4219, 0
    %4223 = vmatprep.subr.mxu0 0.0
    %4224 = vmatpush1.msra.mxu0 %v71
    %4225 = vmatprep.subr.mxu0 0.0
    %4226 = vmatpush1.msra.mxu0 %v72
    %4227 = vmatprep.subr.mxu0 0.0
    %4228 = vmatpush1.msra.mxu0 %v73
    %4229 = vmatprep.subr.mxu0 0.0
    %4230 = vmatpush1.msra.mxu0 %v74
    %4231 = vmatprep.subr.mxu0 0.0
    %4232 = vmatpush1.msra.mxu0 %v75
    %4233 = vmatprep.subr.mxu0 0.0
    %4234 = vmatpush1.msra.mxu0 %v76
    %4235 = vmatprep.subr.mxu0 0.0
    %4236 = vmatpush1.msra.mxu0 %v77
    %4237 = vmatprep.subr.mxu0 0.0
    %4238 = vmatpush1.msra.mxu0 %v78
    %4239 = vmatprep.subr.mxu0 0.0
    %4240 = vmatpush1.msra.mxu0 0.0
    %4241 = vmatprep.subr.mxu0 0.0
    %4242 = vmatpush1.msra.mxu0 0.0
    %4243 = vmatprep.subr.mxu0 0.0
    %4244 = vmatpush1.msra.mxu0 0.0
    %4245 = vmatprep.subr.mxu0 0.0
    %4246 = vmatpush1.msra.mxu0 0.0
    %4247 = vmatprep.subr.mxu0 0.0
    %4248 = vmatpush1.msra.mxu0 0.0
    %4249 = vmatprep.subr.mxu0 0.0
    %4250 = vmatpush1.msra.mxu0 0.0
    %4251 = vmatprep.subr.mxu0 0.0
    %4252 = vmatpush1.msra.mxu0 0.0
    %4253 = vmatprep.subr.mxu0 0.0
    %4254 = vmatpush1.msra.mxu0 0.0
    %4255 = vmatprep.subr.mxu0 0.0
    %4256 = vmatpush1.msra.mxu0 0.0
    %4257 = vmatprep.subr.mxu0 0.0
    %4258 = vmatpush1.msra.mxu0 0.0
    %4259 = vmatprep.subr.mxu0 0.0
    %4260 = vmatpush1.msra.mxu0 0.0
    %4261 = vmatprep.subr.mxu0 0.0
    %4262 = vmatpush1.msra.mxu0 0.0
    %4263 = vmatprep.subr.mxu0 0.0
    %4264 = vmatpush1.msra.mxu0 0.0
    %4265 = vmatprep.subr.mxu0 0.0
    %4266 = vmatpush1.msra.mxu0 0.0
    %4267 = vmatprep.subr.mxu0 0.0
    %4268 = vmatpush1.msra.mxu0 0.0
    %4269 = vmatprep.subr.mxu0 0.0
    %4270 = vmatpush1.msra.mxu0 0.0
    %4271 = vmatprep.subr.mxu0 0.0
    %4272 = vmatpush1.msra.mxu0 0.0
    %4273 = vmatprep.subr.mxu0 0.0
    %4274 = vmatpush1.msra.mxu0 0.0
    %4275 = vmatprep.subr.mxu0 0.0
    %4276 = vmatpush1.msra.mxu0 0.0
    %4277 = vmatprep.subr.mxu0 0.0
    %4278 = vmatpush1.msra.mxu0 0.0
    %4279 = vmatprep.subr.mxu0 0.0
    %4280 = vmatpush1.msra.mxu0 0.0
    %4281 = vmatprep.subr.mxu0 0.0
    %4282 = vmatpush1.msra.mxu0 0.0
    %4283 = vmatprep.subr.mxu0 0.0
    %4284 = vmatpush1.msra.mxu0 0.0
    %4285 = vmatprep.subr.mxu0 0.0
    %4286 = vmatpush1.msra.mxu0 0.0
    %4287 = vmatprep.mubr.f32.mxu0 0.0
    %4288 = vmatmul.mubr.f32.gmra.mrb[0].mxu0 %v4221
    %v4289 = vpop.f32.mrb[0].mxu0
    %v4290 = vadd.f32 %v92, %v4289
    %v4291 = vpop.f32.mrb[0].mxu0
    %4292 = vdwg.mxu0
    %v4293 = vxor.u32 %v4290, 2147483648
    %v4294 = vmul.f32 %v4293, 1.442695
    %v4295 = vpow.pop %v4294
    %v4296 = vadd.f32 %v4295, 1.0
    %v4297 = vrcp.pop %v4296
    %v4298 = vmul.f32 1.0, %v4297
    %v4299 = vtanh.pop %v4290
    %v4300 = vmul.f32 %v4298, %v4027
    %4302 = vrot.lane.b32.xlu0 %v4299, 64
    %v4303 = vpop.permute.xlu0 %4302
    %v4305 = vmul.f32 %v4298, %v4303
    %4307 = vrot.lane.b32.xlu0 %v4305, 32
    %v4308 = vpop.permute.xlu0 %4307
    %v4310 = vadd.f32 %v4300, %v4308
    %v4311 = vtanh.pop %v4310
    %4313 = vrot.lane.b32.xlu0 %v4311, 64
    %v4314 = vpop.permute.xlu0 %4313
    %v4316 = vmul.f32 %v4298, %v4314
    %4318 = vrot.lane.b32.xlu0 %v4316, 32
    %v4319 = vpop.permute.xlu0 %4318
    %v4320 = vsel %vm106, %v4319, 0
    %4322 = vmatprep.subr.mxu0 0.0
    %4323 = vmatpush1.msra.mxu0 %v94
    %4324 = vmatprep.subr.mxu0 0.0
    %4325 = vmatpush1.msra.mxu0 %v95
    %4326 = vmatprep.subr.mxu0 0.0
    %4327 = vmatpush1.msra.mxu0 %v96
    %4328 = vmatprep.subr.mxu0 0.0
    %4329 = vmatpush1.msra.mxu0 %v97
    %4330 = vmatprep.subr.mxu0 0.0
    %4331 = vmatpush1.msra.mxu0 0.0
    %4332 = vmatprep.subr.mxu0 0.0
    %4333 = vmatpush1.msra.mxu0 0.0
    %4334 = vmatprep.subr.mxu0 0.0
    %4335 = vmatpush1.msra.mxu0 0.0
    %4336 = vmatprep.subr.mxu0 0.0
    %4337 = vmatpush1.msra.mxu0 0.0
    %4338 = vmatprep.subr.mxu0 0.0
    %4339 = vmatpush1.msra.mxu0 0.0
    %4340 = vmatprep.subr.mxu0 0.0
    %4341 = vmatpush1.msra.mxu0 0.0
    %4342 = vmatprep.subr.mxu0 0.0
    %4343 = vmatpush1.msra.mxu0 0.0
    %4344 = vmatprep.subr.mxu0 0.0
    %4345 = vmatpush1.msra.mxu0 0.0
    %4346 = vmatprep.subr.mxu0 0.0
    %4347 = vmatpush1.msra.mxu0 0.0
    %4348 = vmatprep.subr.mxu0 0.0
    %4349 = vmatpush1.msra.mxu0 0.0
    %4350 = vmatprep.subr.mxu0 0.0
    %4351 = vmatpush1.msra.mxu0 0.0
    %4352 = vmatprep.subr.mxu0 0.0
    %4353 = vmatpush1.msra.mxu0 0.0
    %4354 = vmatprep.subr.mxu0 0.0
    %4355 = vmatpush1.msra.mxu0 0.0
    %4356 = vmatprep.subr.mxu0 0.0
    %4357 = vmatpush1.msra.mxu0 0.0
    %4358 = vmatprep.subr.mxu0 0.0
    %4359 = vmatpush1.msra.mxu0 0.0
    %4360 = vmatprep.subr.mxu0 0.0
    %4361 = vmatpush1.msra.mxu0 0.0
    %4362 = vmatprep.subr.mxu0 0.0
    %4363 = vmatpush1.msra.mxu0 0.0
    %4364 = vmatprep.subr.mxu0 0.0
    %4365 = vmatpush1.msra.mxu0 0.0
    %4366 = vmatprep.subr.mxu0 0.0
    %4367 = vmatpush1.msra.mxu0 0.0
    %4368 = vmatprep.subr.mxu0 0.0
    %4369 = vmatpush1.msra.mxu0 0.0
    %4370 = vmatprep.subr.mxu0 0.0
    %4371 = vmatpush1.msra.mxu0 0.0
    %4372 = vmatprep.subr.mxu0 0.0
    %4373 = vmatpush1.msra.mxu0 0.0
    %4374 = vmatprep.subr.mxu0 0.0
    %4375 = vmatpush1.msra.mxu0 0.0
    %4376 = vmatprep.subr.mxu0 0.0
    %4377 = vmatpush1.msra.mxu0 0.0
    %4378 = vmatprep.subr.mxu0 0.0
    %4379 = vmatpush1.msra.mxu0 0.0
    %4380 = vmatprep.subr.mxu0 0.0
    %4381 = vmatpush1.msra.mxu0 0.0
    %4382 = vmatprep.subr.mxu0 0.0
    %4383 = vmatpush1.msra.mxu0 0.0
    %4384 = vmatprep.subr.mxu0 0.0
    %4385 = vmatpush1.msra.mxu0 0.0
    %4386 = vmatprep.mubr.f32.mxu0 0.0
    %4387 = vmatmul.mubr.f32.gmra.mrb[0].mxu0 %v4320
    %v4388 = vpop.f32.mrb[0].mxu0
    %v4389 = vadd.f32 %v103, %v4388
    %v4390 = vpop.f32.mrb[0].mxu0
    %4391 = vdwg.mxu0
    %s4392 = scalar_lea.vmem [#allocation8], 18
    %4393 = vst [vmem:[%s4392] sm:$0x3] %v4389
    // Predicated region
    $region34: #{tpu_custom_call.1} parent=1 // pred_check
      _
    $region35: #{tpu_custom_call.1} parent=1 // pred_check_branch
      %4395 = sbr.rel (0) target = $region37
    $region36: #{tpu_custom_call.1} parent=1 // pred_region
      %s4397 = ssub.s32 320, 320
      %4398 = vsyncadd [#allocation4], %s4397
      %s4399 = sshll.u32 [#allocation8], 4
      %s4400 = int_to_ptr.vmem [resolvable:$true] %s4399
      %4405 = dma.vmem_to_hbm [thread:$0]  %s4400, 320, %s5, [#allocation4], 32, 32, 2
    $region37: #{tpu_custom_call.1} parent=1 // pred_fallthru
      _
    // Predicated region
    $region38: #{tpu_custom_call.1} parent=1 // pred_check
      _
    $region39: #{tpu_custom_call.1} parent=1 // pred_check_branch
      %4407 = sbr.rel (0) target = $region41
    $region40: #{tpu_custom_call.1} parent=1 // pred_region
      %4408 = dma.done [#allocation4], 320
    $region41: #{tpu_custom_call.1} parent=1 // pred_fallthru
      _
    %4409 = vsyncpa [#allocation3], 1
    %4410 = vsyncpa [#allocation6], 1
    %4411 = vsyncpa [#allocation4], 1

</llo_original>
